<compile_context>
chip_gen: v7x
topology: tpu7x:2x2x1
jax: 0.10.0
libtpu: 0.0.40
codegen_flags: <defaults>
</compile_context>

<pallas_src>
import math

import jax
import jax.numpy as jnp
from jax.experimental import pallas as pl
from jax.experimental.pallas import tpu as pltpu

# ---------------- small config consistent with the Encoder ----------------
BATCH = 2
SEQ = 8
HIDDEN = 32
NUM_HEADS = 4
HEAD_DIM = HIDDEN // NUM_HEADS
MLP_DIM = 64
NUM_LAYERS = 2
LN_EPS = 1e-6

# packed small-parameter slab layout: 8 rows per layer + 2 rows for encoder_norm
ROWS_PER_LAYER = 8        # [bqkv, bo, g1, be1, g2, be2, bf1, bf2]
ENC_GAMMA_ROW = ROWS_PER_LAYER * NUM_LAYERS
ENC_BETA_ROW = ENC_GAMMA_ROW + 1
SLAB_ROWS = 24            # padded to a multiple of 8 sublanes
SLAB_LANES = 128


def _gelu_exact(x):
    # torch.nn.functional.gelu default = exact erf gelu
    return 0.5 * x * (1.0 + jax.lax.erf(x * (1.0 / math.sqrt(2.0))))


def _layer_norm(z, gamma, beta):
    mean = jnp.mean(z, axis=-1, keepdims=True)
    var = jnp.mean((z - mean) ** 2, axis=-1, keepdims=True)
    return (z - mean) * jax.lax.rsqrt(var + LN_EPS) * gamma + beta


def encoder_kernel(x_ref, wqkv_ref, wo_ref, w1_ref, w2_ref, slab_ref, o_ref):
    x = x_ref[...]  # (B*S, H), all batches at once
    scale = 1.0 / math.sqrt(HEAD_DIM)

    for l in range(NUM_LAYERS):  # static, fully unrolled (NUM_LAYERS = 2)
        base = ROWS_PER_LAYER * l
        # --- hoisted small-parameter reads (one packed slab, sliced at lane offset 0) ---
        bqkv = slab_ref[base + 0:base + 1, 0:3 * HIDDEN]   # (1, 96)
        bo   = slab_ref[base + 1:base + 2, 0:HIDDEN]       # (1, 32)
        g1   = slab_ref[base + 2:base + 3, 0:HIDDEN]
        be1  = slab_ref[base + 3:base + 4, 0:HIDDEN]
        g2   = slab_ref[base + 4:base + 5, 0:HIDDEN]
        be2  = slab_ref[base + 5:base + 6, 0:HIDDEN]
        bf1  = slab_ref[base + 6:base + 7, 0:MLP_DIM]      # (1, 64)
        bf2  = slab_ref[base + 7:base + 8, 0:HIDDEN]

        # ---------------- attention_norm ----------------
        xn = _layer_norm(x, g1, be1)

        # ---------------- fused QKV projection: one MXU op ----------------
        qkv = jnp.dot(xn, wqkv_ref[l], preferred_element_type=jnp.float32) + bqkv  # (B*S, 3H)

        wo = wo_ref[l]  # (H, H)

        # ---------------- multi-head self-attention (per-batch, per-head, unrolled) ----------------
        batch_outs = []
        for b in range(BATCH):
            rows = slice(b * SEQ, (b + 1) * SEQ)
            out_b = jnp.zeros((SEQ, HIDDEN), jnp.float32)
            for h in range(NUM_HEADS):
                q_sl = slice(h * HEAD_DIM, (h + 1) * HEAD_DIM)
                k_sl = slice(HIDDEN + h * HEAD_DIM, HIDDEN + (h + 1) * HEAD_DIM)
                v_sl = slice(2 * HIDDEN + h * HEAD_DIM, 2 * HIDDEN + (h + 1) * HEAD_DIM)
                qh = qkv[rows, q_sl]                       # (S, hd)
                kh = qkv[rows, k_sl]
                vh = qkv[rows, v_sl]

                scores = jnp.dot(qh, kh.T, preferred_element_type=jnp.float32) * scale  # (S, S)
                scores = scores - jnp.max(scores, axis=-1, keepdims=True)
                e = jnp.exp(scores)
                probs = e * pl.reciprocal(jnp.sum(e, axis=-1, keepdims=True), approx=True)
                ctx = jnp.dot(probs, vh, preferred_element_type=jnp.float32)            # (S, hd)

                # fold this head's slice of W_o: accumulate instead of lane-concat of heads
                out_b = out_b + jnp.dot(
                    ctx, wo[h * HEAD_DIM:(h + 1) * HEAD_DIM, :],
                    preferred_element_type=jnp.float32)
            batch_outs.append(out_b)

        attn_out = jnp.concatenate(batch_outs, axis=0) + bo   # sublane concat (cheap)

        # residual 1
        x = x + attn_out

        # ---------------- ffn_norm + MLP ----------------
        x1n = _layer_norm(x, g2, be2)
        hdn = jnp.dot(x1n, w1_ref[l], preferred_element_type=jnp.float32) + bf1
        hdn = _gelu_exact(hdn)
        mlp_out = jnp.dot(hdn, w2_ref[l], preferred_element_type=jnp.float32) + bf2

        # residual 2
        x = x + mlp_out

    # ---------------- final encoder_norm ----------------
    g_enc = slab_ref[ENC_GAMMA_ROW:ENC_GAMMA_ROW + 1, 0:HIDDEN]
    b_enc = slab_ref[ENC_BETA_ROW:ENC_BETA_ROW + 1, 0:HIDDEN]
    o_ref[...] = _layer_norm(x, g_enc, b_enc)


def encoder_forward(x, params):
    """x: (B, S, H) float32 -> (B, S, H) float32."""
    B, S, H = x.shape
    x2d = x.reshape(B * S, H)  # wrapper-side reshape: 16 sublanes, single kernel step

    out2d = pl.pallas_call(
        encoder_kernel,
        out_shape=jax.ShapeDtypeStruct((B * S, H), jnp.float32),
    )(x2d, params["wqkv"], params["wo"], params["w1"], params["w2"], params["slab"])

    return out2d.reshape(B, S, H)


def init_params(key):
    keys = jax.random.split(key, NUM_LAYERS)
    wqkv_l, wo_l, w1_l, w2_l = [], [], [], []
    slab = jnp.zeros((SLAB_ROWS, SLAB_LANES), jnp.float32)
    s = 0.02
    xavier = math.sqrt(2.0 / (HIDDEN + MLP_DIM))

    for l in range(NUM_LAYERS):
        ks = jax.random.split(keys[l], 8)
        wq = jax.random.normal(ks[0], (HIDDEN, HIDDEN), jnp.float32) * s
        wk = jax.random.normal(ks[1], (HIDDEN, HIDDEN), jnp.float32) * s
        wv = jax.random.normal(ks[2], (HIDDEN, HIDDEN), jnp.float32) * s
        wqkv_l.append(jnp.concatenate([wq, wk, wv], axis=1))            # (H, 3H)
        wo_l.append(jax.random.normal(ks[3], (HIDDEN, HIDDEN), jnp.float32) * s)
        w1_l.append(jax.random.normal(ks[4], (HIDDEN, MLP_DIM), jnp.float32) * xavier)
        w2_l.append(jax.random.normal(ks[5], (MLP_DIM, HIDDEN), jnp.float32) * xavier)
        bf1 = jax.random.normal(ks[6], (MLP_DIM,), jnp.float32) * 1e-6
        bf2 = jax.random.normal(ks[7], (HIDDEN,), jnp.float32) * 1e-6

        base = ROWS_PER_LAYER * l
        # row base+0: bqkv (zeros), row base+1: bo (zeros)
        slab = slab.at[base + 2, 0:HIDDEN].set(1.0)        # attention_norm gamma
        # row base+3: attention_norm beta = 0
        slab = slab.at[base + 4, 0:HIDDEN].set(1.0)        # ffn_norm gamma
        # row base+5: ffn_norm beta = 0
        slab = slab.at[base + 6, 0:MLP_DIM].set(bf1)       # fc1 bias (std=1e-6)
        slab = slab.at[base + 7, 0:HIDDEN].set(bf2)        # fc2 bias (std=1e-6)

    slab = slab.at[ENC_GAMMA_ROW, 0:HIDDEN].set(1.0)       # encoder_norm gamma
    # ENC_BETA_ROW stays zero

    return {
        "wqkv": jnp.stack(wqkv_l),   # (L, H, 3H)
        "wo": jnp.stack(wo_l),       # (L, H, H)
        "w1": jnp.stack(w1_l),       # (L, H, MLP)
        "w2": jnp.stack(w2_l),       # (L, MLP, H)
        "slab": slab,                # (24, 128) packed small params
    }


def encoder_reference(x, params):
    """Pure-JAX reference of the Encoder forward (eval mode)."""
    slab = params["slab"]
    for l in range(NUM_LAYERS):
        base = ROWS_PER_LAYER * l
        bqkv = slab[base + 0, 0:3 * HIDDEN]
        bo = slab[base + 1, 0:HIDDEN]
        g1, be1 = slab[base + 2, 0:HIDDEN], slab[base + 3, 0:HIDDEN]
        g2, be2 = slab[base + 4, 0:HIDDEN], slab[base + 5, 0:HIDDEN]
        bf1, bf2 = slab[base + 6, 0:MLP_DIM], slab[base + 7, 0:HIDDEN]

        h0 = x
        xn = _layer_norm(x, g1, be1)
        qkv = xn @ params["wqkv"][l] + bqkv
        q, k, v = jnp.split(qkv, 3, axis=-1)

        def heads(t):
            return t.reshape(BATCH, SEQ, NUM_HEADS, HEAD_DIM).transpose(0, 2, 1, 3)

        qh, kh, vh = heads(q), heads(k), heads(v)
        sc = jnp.einsum("bhqd,bhkd->bhqk", qh, kh) / math.sqrt(HEAD_DIM)
        pr = jax.nn.softmax(sc, axis=-1)
        ctx = jnp.einsum("bhqk,bhkd->bhqd", pr, vh).transpose(0, 2, 1, 3)
        ctx = ctx.reshape(BATCH, SEQ, HIDDEN)
        x = h0 + (ctx @ params["wo"][l] + bo)

        h1 = x
        xn2 = _layer_norm(x, g2, be2)
        hid = _gelu_exact(xn2 @ params["w1"][l] + bf1)
        x = h1 + (hid @ params["w2"][l] + bf2)

    return _layer_norm(x, slab[ENC_GAMMA_ROW, 0:HIDDEN], slab[ENC_BETA_ROW, 0:HIDDEN])


if __name__ == "__main__":
    key = jax.random.PRNGKey(0)
    k_x, k_p = jax.random.split(key)
    x = jax.random.normal(k_x, (BATCH, SEQ, HIDDEN), jnp.float32)
    params = init_params(k_p)

    out = encoder_forward(x, params)
    out = jax.block_until_ready(out)

    assert out.shape == (BATCH, SEQ, HIDDEN)
    assert bool(jnp.all(jnp.isfinite(out)))

    # correctness vs pure-JAX reference (tolerance covers approx reciprocal in softmax)
    ref = encoder_reference(x, params)
    assert bool(jnp.allclose(out, ref, atol=1e-2, rtol=1e-2))

    print("KERNEL_OK")
</pallas_src>

<mosaic_0001>
module attributes {stable_mosaic.version = 11 : i64} {
  func.func @encoder_kernel(%arg0: memref<16x32xf32, #tpu.memory_space<vmem>>, %arg1: memref<2x32x96xf32, #tpu.memory_space<vmem>>, %arg2: memref<2x32x32xf32, #tpu.memory_space<vmem>>, %arg3: memref<2x32x64xf32, #tpu.memory_space<vmem>>, %arg4: memref<2x64x32xf32, #tpu.memory_space<vmem>>, %arg5: memref<24x128xf32, #tpu.memory_space<vmem>>, %arg6: memref<16x32xf32, #tpu.memory_space<vmem>>) attributes {dimension_semantics = [], scalar_prefetch = 0 : i64, scratch_operands = 0 : i64, tpu.core_type = #tpu.core_type<tc>} {
    %c0 = arith.constant 0 : index
    %c0_0 = arith.constant 0 : index
    %0 = vector.load %arg0[%c0, %c0_0] : memref<16x32xf32, #tpu.memory_space<vmem>>, vector<16x32xf32>
    %c0_1 = arith.constant 0 : index
    %c0_2 = arith.constant 0 : index
    %1 = vector.load %arg5[%c0_1, %c0_2] : memref<24x128xf32, #tpu.memory_space<vmem>>, vector<1x96xf32>
    %c1 = arith.constant 1 : index
    %c0_3 = arith.constant 0 : index
    %2 = vector.load %arg5[%c1, %c0_3] : memref<24x128xf32, #tpu.memory_space<vmem>>, vector<1x32xf32>
    %c2 = arith.constant 2 : index
    %c0_4 = arith.constant 0 : index
    %3 = vector.load %arg5[%c2, %c0_4] : memref<24x128xf32, #tpu.memory_space<vmem>>, vector<1x32xf32>
    %c3 = arith.constant 3 : index
    %c0_5 = arith.constant 0 : index
    %4 = vector.load %arg5[%c3, %c0_5] : memref<24x128xf32, #tpu.memory_space<vmem>>, vector<1x32xf32>
    %c4 = arith.constant 4 : index
    %c0_6 = arith.constant 0 : index
    %5 = vector.load %arg5[%c4, %c0_6] : memref<24x128xf32, #tpu.memory_space<vmem>>, vector<1x32xf32>
    %c5 = arith.constant 5 : index
    %c0_7 = arith.constant 0 : index
    %6 = vector.load %arg5[%c5, %c0_7] : memref<24x128xf32, #tpu.memory_space<vmem>>, vector<1x32xf32>
    %c6 = arith.constant 6 : index
    %c0_8 = arith.constant 0 : index
    %7 = vector.load %arg5[%c6, %c0_8] : memref<24x128xf32, #tpu.memory_space<vmem>>, vector<1x64xf32>
    %c7 = arith.constant 7 : index
    %c0_9 = arith.constant 0 : index
    %8 = vector.load %arg5[%c7, %c0_9] : memref<24x128xf32, #tpu.memory_space<vmem>>, vector<1x32xf32>
    %cst = arith.constant dense<0.000000e+00> : vector<16xf32>
    %9 = vector.multi_reduction <add>, %0, %cst [1] : vector<16x32xf32> to vector<16xf32>
    %10 = vector.shape_cast %9 : vector<16xf32> to vector<16x1xf32>
    %cst_10 = arith.constant 3.200000e+01 : f32
    %11 = vector.broadcast %cst_10 : f32 to vector<16x1xf32>
    %12 = arith.divf %10, %11 : vector<16x1xf32>
    %13 = vector.broadcast %12 : vector<16x1xf32> to vector<16x32xf32>
    %14 = arith.subf %0, %13 : vector<16x32xf32>
    %15 = arith.mulf %14, %14 : vector<16x32xf32>
    %cst_11 = arith.constant dense<0.000000e+00> : vector<16xf32>
    %16 = vector.multi_reduction <add>, %15, %cst_11 [1] : vector<16x32xf32> to vector<16xf32>
    %17 = vector.shape_cast %16 : vector<16xf32> to vector<16x1xf32>
    %cst_12 = arith.constant 3.200000e+01 : f32
    %18 = vector.broadcast %cst_12 : f32 to vector<16x1xf32>
    %19 = arith.divf %17, %18 : vector<16x1xf32>
    %20 = vector.broadcast %12 : vector<16x1xf32> to vector<16x32xf32>
    %21 = arith.subf %0, %20 : vector<16x32xf32>
    %cst_13 = arith.constant 9.99999997E-7 : f32
    %22 = vector.broadcast %cst_13 : f32 to vector<16x1xf32>
    %23 = arith.addf %19, %22 : vector<16x1xf32>
    %24 = math.rsqrt %23 : vector<16x1xf32>
    %25 = vector.broadcast %24 : vector<16x1xf32> to vector<16x32xf32>
    %26 = arith.mulf %21, %25 : vector<16x32xf32>
    %27 = vector.broadcast %3 : vector<1x32xf32> to vector<16x32xf32>
    %28 = arith.mulf %26, %27 : vector<16x32xf32>
    %29 = vector.broadcast %4 : vector<1x32xf32> to vector<16x32xf32>
    %30 = arith.addf %28, %29 : vector<16x32xf32>
    %c0_14 = arith.constant 0 : index
    %c0_15 = arith.constant 0 : index
    %c0_16 = arith.constant 0 : index
    %31 = vector.load %arg1[%c0_14, %c0_15, %c0_16] : memref<2x32x96xf32, #tpu.memory_space<vmem>>, vector<1x32x96xf32>
    %32 = vector.shape_cast %31 : vector<1x32x96xf32> to vector<32x96xf32>
    %cst_17 = arith.constant dense<0.000000e+00> : vector<16x96xf32>
    %33 = tpu.matmul %30, %32, %cst_17 {dimension_numbers = #tpu.dot_dimension_numbers<[1], [0], [0], [1], [0, 0, 1, 1], [], []>} : vector<16x32xf32>, vector<32x96xf32>, vector<16x96xf32> -> vector<16x96xf32>
    %34 = vector.broadcast %1 : vector<1x96xf32> to vector<16x96xf32>
    %35 = arith.addf %33, %34 : vector<16x96xf32>
    %c0_18 = arith.constant 0 : index
    %c0_19 = arith.constant 0 : index
    %c0_20 = arith.constant 0 : index
    %36 = vector.load %arg2[%c0_18, %c0_19, %c0_20] : memref<2x32x32xf32, #tpu.memory_space<vmem>>, vector<1x32x32xf32>
    %37 = vector.shape_cast %36 : vector<1x32x32xf32> to vector<32x32xf32>
    %cst_21 = arith.constant 0.000000e+00 : f32
    %38 = vector.broadcast %cst_21 : f32 to vector<8x32xf32>
    %39 = vector.extract_strided_slice %35 {offsets = [0, 0], sizes = [8, 8], strides = [1, 1]} : vector<16x96xf32> to vector<8x8xf32>
    %40 = vector.extract_strided_slice %35 {offsets = [0, 32], sizes = [8, 8], strides = [1, 1]} : vector<16x96xf32> to vector<8x8xf32>
    %41 = vector.extract_strided_slice %35 {offsets = [0, 64], sizes = [8, 8], strides = [1, 1]} : vector<16x96xf32> to vector<8x8xf32>
    %42 = tpu.transpose %40, [1, 0] : vector<8x8xf32> -> vector<8x8xf32>
    %cst_22 = arith.constant dense<0.000000e+00> : vector<8x8xf32>
    %43 = tpu.matmul %39, %42, %cst_22 {dimension_numbers = #tpu.dot_dimension_numbers<[1], [0], [0], [1], [0, 0, 1, 1], [], []>} : vector<8x8xf32>, vector<8x8xf32>, vector<8x8xf32> -> vector<8x8xf32>
    %cst_23 = arith.constant 0.353553385 : f32
    %44 = vector.broadcast %cst_23 : f32 to vector<8x8xf32>
    %45 = arith.mulf %43, %44 : vector<8x8xf32>
    %cst_24 = arith.constant dense<0xFF800000> : vector<8xf32>
    %46 = vector.multi_reduction <maximumf>, %45, %cst_24 [1] : vector<8x8xf32> to vector<8xf32>
    %47 = vector.shape_cast %46 : vector<8xf32> to vector<8x1xf32>
    %48 = vector.broadcast %47 : vector<8x1xf32> to vector<8x8xf32>
    %49 = arith.subf %45, %48 : vector<8x8xf32>
    %50 = math.exp %49 : vector<8x8xf32>
    %cst_25 = arith.constant dense<0.000000e+00> : vector<8xf32>
    %51 = vector.multi_reduction <add>, %50, %cst_25 [1] : vector<8x8xf32> to vector<8xf32>
    %52 = vector.shape_cast %51 : vector<8xf32> to vector<8x1xf32>
    %53 = tpu.reciprocal %52 {approx = true} : vector<8x1xf32> -> vector<8x1xf32>
    %54 = vector.broadcast %53 : vector<8x1xf32> to vector<8x8xf32>
    %55 = arith.mulf %50, %54 : vector<8x8xf32>
    %cst_26 = arith.constant dense<0.000000e+00> : vector<8x8xf32>
    %56 = tpu.matmul %55, %41, %cst_26 {dimension_numbers = #tpu.dot_dimension_numbers<[1], [0], [0], [1], [0, 0, 1, 1], [], []>} : vector<8x8xf32>, vector<8x8xf32>, vector<8x8xf32> -> vector<8x8xf32>
    %57 = vector.extract_strided_slice %37 {offsets = [0, 0], sizes = [8, 32], strides = [1, 1]} : vector<32x32xf32> to vector<8x32xf32>
    %cst_27 = arith.constant dense<0.000000e+00> : vector<8x32xf32>
    %58 = tpu.matmul %56, %57, %cst_27 {dimension_numbers = #tpu.dot_dimension_numbers<[1], [0], [0], [1], [0, 0, 1, 1], [], []>} : vector<8x8xf32>, vector<8x32xf32>, vector<8x32xf32> -> vector<8x32xf32>
    %59 = arith.addf %38, %58 : vector<8x32xf32>
    %60 = vector.extract_strided_slice %35 {offsets = [0, 8], sizes = [8, 8], strides = [1, 1]} : vector<16x96xf32> to vector<8x8xf32>
    %61 = vector.extract_strided_slice %35 {offsets = [0, 40], sizes = [8, 8], strides = [1, 1]} : vector<16x96xf32> to vector<8x8xf32>
    %62 = vector.extract_strided_slice %35 {offsets = [0, 72], sizes = [8, 8], strides = [1, 1]} : vector<16x96xf32> to vector<8x8xf32>
    %63 = tpu.transpose %61, [1, 0] : vector<8x8xf32> -> vector<8x8xf32>
    %cst_28 = arith.constant dense<0.000000e+00> : vector<8x8xf32>
    %64 = tpu.matmul %60, %63, %cst_28 {dimension_numbers = #tpu.dot_dimension_numbers<[1], [0], [0], [1], [0, 0, 1, 1], [], []>} : vector<8x8xf32>, vector<8x8xf32>, vector<8x8xf32> -> vector<8x8xf32>
    %cst_29 = arith.constant 0.353553385 : f32
    %65 = vector.broadcast %cst_29 : f32 to vector<8x8xf32>
    %66 = arith.mulf %64, %65 : vector<8x8xf32>
    %cst_30 = arith.constant dense<0xFF800000> : vector<8xf32>
    %67 = vector.multi_reduction <maximumf>, %66, %cst_30 [1] : vector<8x8xf32> to vector<8xf32>
    %68 = vector.shape_cast %67 : vector<8xf32> to vector<8x1xf32>
    %69 = vector.broadcast %68 : vector<8x1xf32> to vector<8x8xf32>
    %70 = arith.subf %66, %69 : vector<8x8xf32>
    %71 = math.exp %70 : vector<8x8xf32>
    %cst_31 = arith.constant dense<0.000000e+00> : vector<8xf32>
    %72 = vector.multi_reduction <add>, %71, %cst_31 [1] : vector<8x8xf32> to vector<8xf32>
    %73 = vector.shape_cast %72 : vector<8xf32> to vector<8x1xf32>
    %74 = tpu.reciprocal %73 {approx = true} : vector<8x1xf32> -> vector<8x1xf32>
    %75 = vector.broadcast %74 : vector<8x1xf32> to vector<8x8xf32>
    %76 = arith.mulf %71, %75 : vector<8x8xf32>
    %cst_32 = arith.constant dense<0.000000e+00> : vector<8x8xf32>
    %77 = tpu.matmul %76, %62, %cst_32 {dimension_numbers = #tpu.dot_dimension_numbers<[1], [0], [0], [1], [0, 0, 1, 1], [], []>} : vector<8x8xf32>, vector<8x8xf32>, vector<8x8xf32> -> vector<8x8xf32>
    %78 = vector.extract_strided_slice %37 {offsets = [8, 0], sizes = [8, 32], strides = [1, 1]} : vector<32x32xf32> to vector<8x32xf32>
    %cst_33 = arith.constant dense<0.000000e+00> : vector<8x32xf32>
    %79 = tpu.matmul %77, %78, %cst_33 {dimension_numbers = #tpu.dot_dimension_numbers<[1], [0], [0], [1], [0, 0, 1, 1], [], []>} : vector<8x8xf32>, vector<8x32xf32>, vector<8x32xf32> -> vector<8x32xf32>
    %80 = arith.addf %59, %79 : vector<8x32xf32>
    %81 = vector.extract_strided_slice %35 {offsets = [0, 16], sizes = [8, 8], strides = [1, 1]} : vector<16x96xf32> to vector<8x8xf32>
    %82 = vector.extract_strided_slice %35 {offsets = [0, 48], sizes = [8, 8], strides = [1, 1]} : vector<16x96xf32> to vector<8x8xf32>
    %83 = vector.extract_strided_slice %35 {offsets = [0, 80], sizes = [8, 8], strides = [1, 1]} : vector<16x96xf32> to vector<8x8xf32>
    %84 = tpu.transpose %82, [1, 0] : vector<8x8xf32> -> vector<8x8xf32>
    %cst_34 = arith.constant dense<0.000000e+00> : vector<8x8xf32>
    %85 = tpu.matmul %81, %84, %cst_34 {dimension_numbers = #tpu.dot_dimension_numbers<[1], [0], [0], [1], [0, 0, 1, 1], [], []>} : vector<8x8xf32>, vector<8x8xf32>, vector<8x8xf32> -> vector<8x8xf32>
    %cst_35 = arith.constant 0.353553385 : f32
    %86 = vector.broadcast %cst_35 : f32 to vector<8x8xf32>
    %87 = arith.mulf %85, %86 : vector<8x8xf32>
    %cst_36 = arith.constant dense<0xFF800000> : vector<8xf32>
    %88 = vector.multi_reduction <maximumf>, %87, %cst_36 [1] : vector<8x8xf32> to vector<8xf32>
    %89 = vector.shape_cast %88 : vector<8xf32> to vector<8x1xf32>
    %90 = vector.broadcast %89 : vector<8x1xf32> to vector<8x8xf32>
    %91 = arith.subf %87, %90 : vector<8x8xf32>
    %92 = math.exp %91 : vector<8x8xf32>
    %cst_37 = arith.constant dense<0.000000e+00> : vector<8xf32>
    %93 = vector.multi_reduction <add>, %92, %cst_37 [1] : vector<8x8xf32> to vector<8xf32>
    %94 = vector.shape_cast %93 : vector<8xf32> to vector<8x1xf32>
    %95 = tpu.reciprocal %94 {approx = true} : vector<8x1xf32> -> vector<8x1xf32>
    %96 = vector.broadcast %95 : vector<8x1xf32> to vector<8x8xf32>
    %97 = arith.mulf %92, %96 : vector<8x8xf32>
    %cst_38 = arith.constant dense<0.000000e+00> : vector<8x8xf32>
    %98 = tpu.matmul %97, %83, %cst_38 {dimension_numbers = #tpu.dot_dimension_numbers<[1], [0], [0], [1], [0, 0, 1, 1], [], []>} : vector<8x8xf32>, vector<8x8xf32>, vector<8x8xf32> -> vector<8x8xf32>
    %99 = vector.extract_strided_slice %37 {offsets = [16, 0], sizes = [8, 32], strides = [1, 1]} : vector<32x32xf32> to vector<8x32xf32>
    %cst_39 = arith.constant dense<0.000000e+00> : vector<8x32xf32>
    %100 = tpu.matmul %98, %99, %cst_39 {dimension_numbers = #tpu.dot_dimension_numbers<[1], [0], [0], [1], [0, 0, 1, 1], [], []>} : vector<8x8xf32>, vector<8x32xf32>, vector<8x32xf32> -> vector<8x32xf32>
    %101 = arith.addf %80, %100 : vector<8x32xf32>
    %102 = vector.extract_strided_slice %35 {offsets = [0, 24], sizes = [8, 8], strides = [1, 1]} : vector<16x96xf32> to vector<8x8xf32>
    %103 = vector.extract_strided_slice %35 {offsets = [0, 56], sizes = [8, 8], strides = [1, 1]} : vector<16x96xf32> to vector<8x8xf32>
    %104 = vector.extract_strided_slice %35 {offsets = [0, 88], sizes = [8, 8], strides = [1, 1]} : vector<16x96xf32> to vector<8x8xf32>
    %105 = tpu.transpose %103, [1, 0] : vector<8x8xf32> -> vector<8x8xf32>
    %cst_40 = arith.constant dense<0.000000e+00> : vector<8x8xf32>
    %106 = tpu.matmul %102, %105, %cst_40 {dimension_numbers = #tpu.dot_dimension_numbers<[1], [0], [0], [1], [0, 0, 1, 1], [], []>} : vector<8x8xf32>, vector<8x8xf32>, vector<8x8xf32> -> vector<8x8xf32>
    %cst_41 = arith.constant 0.353553385 : f32
    %107 = vector.broadcast %cst_41 : f32 to vector<8x8xf32>
    %108 = arith.mulf %106, %107 : vector<8x8xf32>
    %cst_42 = arith.constant dense<0xFF800000> : vector<8xf32>
    %109 = vector.multi_reduction <maximumf>, %108, %cst_42 [1] : vector<8x8xf32> to vector<8xf32>
    %110 = vector.shape_cast %109 : vector<8xf32> to vector<8x1xf32>
    %111 = vector.broadcast %110 : vector<8x1xf32> to vector<8x8xf32>
    %112 = arith.subf %108, %111 : vector<8x8xf32>
    %113 = math.exp %112 : vector<8x8xf32>
    %cst_43 = arith.constant dense<0.000000e+00> : vector<8xf32>
    %114 = vector.multi_reduction <add>, %113, %cst_43 [1] : vector<8x8xf32> to vector<8xf32>
    %115 = vector.shape_cast %114 : vector<8xf32> to vector<8x1xf32>
    %116 = tpu.reciprocal %115 {approx = true} : vector<8x1xf32> -> vector<8x1xf32>
    %117 = vector.broadcast %116 : vector<8x1xf32> to vector<8x8xf32>
    %118 = arith.mulf %113, %117 : vector<8x8xf32>
    %cst_44 = arith.constant dense<0.000000e+00> : vector<8x8xf32>
    %119 = tpu.matmul %118, %104, %cst_44 {dimension_numbers = #tpu.dot_dimension_numbers<[1], [0], [0], [1], [0, 0, 1, 1], [], []>} : vector<8x8xf32>, vector<8x8xf32>, vector<8x8xf32> -> vector<8x8xf32>
    %120 = vector.extract_strided_slice %37 {offsets = [24, 0], sizes = [8, 32], strides = [1, 1]} : vector<32x32xf32> to vector<8x32xf32>
    %cst_45 = arith.constant dense<0.000000e+00> : vector<8x32xf32>
    %121 = tpu.matmul %119, %120, %cst_45 {dimension_numbers = #tpu.dot_dimension_numbers<[1], [0], [0], [1], [0, 0, 1, 1], [], []>} : vector<8x8xf32>, vector<8x32xf32>, vector<8x32xf32> -> vector<8x32xf32>
    %122 = arith.addf %101, %121 : vector<8x32xf32>
    %cst_46 = arith.constant 0.000000e+00 : f32
    %123 = vector.broadcast %cst_46 : f32 to vector<8x32xf32>
    %124 = vector.extract_strided_slice %35 {offsets = [8, 0], sizes = [8, 8], strides = [1, 1]} : vector<16x96xf32> to vector<8x8xf32>
    %125 = vector.extract_strided_slice %35 {offsets = [8, 32], sizes = [8, 8], strides = [1, 1]} : vector<16x96xf32> to vector<8x8xf32>
    %126 = vector.extract_strided_slice %35 {offsets = [8, 64], sizes = [8, 8], strides = [1, 1]} : vector<16x96xf32> to vector<8x8xf32>
    %127 = tpu.transpose %125, [1, 0] : vector<8x8xf32> -> vector<8x8xf32>
    %cst_47 = arith.constant dense<0.000000e+00> : vector<8x8xf32>
    %128 = tpu.matmul %124, %127, %cst_47 {dimension_numbers = #tpu.dot_dimension_numbers<[1], [0], [0], [1], [0, 0, 1, 1], [], []>} : vector<8x8xf32>, vector<8x8xf32>, vector<8x8xf32> -> vector<8x8xf32>
    %cst_48 = arith.constant 0.353553385 : f32
    %129 = vector.broadcast %cst_48 : f32 to vector<8x8xf32>
    %130 = arith.mulf %128, %129 : vector<8x8xf32>
    %cst_49 = arith.constant dense<0xFF800000> : vector<8xf32>
    %131 = vector.multi_reduction <maximumf>, %130, %cst_49 [1] : vector<8x8xf32> to vector<8xf32>
    %132 = vector.shape_cast %131 : vector<8xf32> to vector<8x1xf32>
    %133 = vector.broadcast %132 : vector<8x1xf32> to vector<8x8xf32>
    %134 = arith.subf %130, %133 : vector<8x8xf32>
    %135 = math.exp %134 : vector<8x8xf32>
    %cst_50 = arith.constant dense<0.000000e+00> : vector<8xf32>
    %136 = vector.multi_reduction <add>, %135, %cst_50 [1] : vector<8x8xf32> to vector<8xf32>
    %137 = vector.shape_cast %136 : vector<8xf32> to vector<8x1xf32>
    %138 = tpu.reciprocal %137 {approx = true} : vector<8x1xf32> -> vector<8x1xf32>
    %139 = vector.broadcast %138 : vector<8x1xf32> to vector<8x8xf32>
    %140 = arith.mulf %135, %139 : vector<8x8xf32>
    %cst_51 = arith.constant dense<0.000000e+00> : vector<8x8xf32>
    %141 = tpu.matmul %140, %126, %cst_51 {dimension_numbers = #tpu.dot_dimension_numbers<[1], [0], [0], [1], [0, 0, 1, 1], [], []>} : vector<8x8xf32>, vector<8x8xf32>, vector<8x8xf32> -> vector<8x8xf32>
    %142 = vector.extract_strided_slice %37 {offsets = [0, 0], sizes = [8, 32], strides = [1, 1]} : vector<32x32xf32> to vector<8x32xf32>
    %cst_52 = arith.constant dense<0.000000e+00> : vector<8x32xf32>
    %143 = tpu.matmul %141, %142, %cst_52 {dimension_numbers = #tpu.dot_dimension_numbers<[1], [0], [0], [1], [0, 0, 1, 1], [], []>} : vector<8x8xf32>, vector<8x32xf32>, vector<8x32xf32> -> vector<8x32xf32>
    %144 = arith.addf %123, %143 : vector<8x32xf32>
    %145 = vector.extract_strided_slice %35 {offsets = [8, 8], sizes = [8, 8], strides = [1, 1]} : vector<16x96xf32> to vector<8x8xf32>
    %146 = vector.extract_strided_slice %35 {offsets = [8, 40], sizes = [8, 8], strides = [1, 1]} : vector<16x96xf32> to vector<8x8xf32>
    %147 = vector.extract_strided_slice %35 {offsets = [8, 72], sizes = [8, 8], strides = [1, 1]} : vector<16x96xf32> to vector<8x8xf32>
    %148 = tpu.transpose %146, [1, 0] : vector<8x8xf32> -> vector<8x8xf32>
    %cst_53 = arith.constant dense<0.000000e+00> : vector<8x8xf32>
    %149 = tpu.matmul %145, %148, %cst_53 {dimension_numbers = #tpu.dot_dimension_numbers<[1], [0], [0], [1], [0, 0, 1, 1], [], []>} : vector<8x8xf32>, vector<8x8xf32>, vector<8x8xf32> -> vector<8x8xf32>
    %cst_54 = arith.constant 0.353553385 : f32
    %150 = vector.broadcast %cst_54 : f32 to vector<8x8xf32>
    %151 = arith.mulf %149, %150 : vector<8x8xf32>
    %cst_55 = arith.constant dense<0xFF800000> : vector<8xf32>
    %152 = vector.multi_reduction <maximumf>, %151, %cst_55 [1] : vector<8x8xf32> to vector<8xf32>
    %153 = vector.shape_cast %152 : vector<8xf32> to vector<8x1xf32>
    %154 = vector.broadcast %153 : vector<8x1xf32> to vector<8x8xf32>
    %155 = arith.subf %151, %154 : vector<8x8xf32>
    %156 = math.exp %155 : vector<8x8xf32>
    %cst_56 = arith.constant dense<0.000000e+00> : vector<8xf32>
    %157 = vector.multi_reduction <add>, %156, %cst_56 [1] : vector<8x8xf32> to vector<8xf32>
    %158 = vector.shape_cast %157 : vector<8xf32> to vector<8x1xf32>
    %159 = tpu.reciprocal %158 {approx = true} : vector<8x1xf32> -> vector<8x1xf32>
    %160 = vector.broadcast %159 : vector<8x1xf32> to vector<8x8xf32>
    %161 = arith.mulf %156, %160 : vector<8x8xf32>
    %cst_57 = arith.constant dense<0.000000e+00> : vector<8x8xf32>
    %162 = tpu.matmul %161, %147, %cst_57 {dimension_numbers = #tpu.dot_dimension_numbers<[1], [0], [0], [1], [0, 0, 1, 1], [], []>} : vector<8x8xf32>, vector<8x8xf32>, vector<8x8xf32> -> vector<8x8xf32>
    %163 = vector.extract_strided_slice %37 {offsets = [8, 0], sizes = [8, 32], strides = [1, 1]} : vector<32x32xf32> to vector<8x32xf32>
    %cst_58 = arith.constant dense<0.000000e+00> : vector<8x32xf32>
    %164 = tpu.matmul %162, %163, %cst_58 {dimension_numbers = #tpu.dot_dimension_numbers<[1], [0], [0], [1], [0, 0, 1, 1], [], []>} : vector<8x8xf32>, vector<8x32xf32>, vector<8x32xf32> -> vector<8x32xf32>
    %165 = arith.addf %144, %164 : vector<8x32xf32>
    %166 = vector.extract_strided_slice %35 {offsets = [8, 16], sizes = [8, 8], strides = [1, 1]} : vector<16x96xf32> to vector<8x8xf32>
    %167 = vector.extract_strided_slice %35 {offsets = [8, 48], sizes = [8, 8], strides = [1, 1]} : vector<16x96xf32> to vector<8x8xf32>
    %168 = vector.extract_strided_slice %35 {offsets = [8, 80], sizes = [8, 8], strides = [1, 1]} : vector<16x96xf32> to vector<8x8xf32>
    %169 = tpu.transpose %167, [1, 0] : vector<8x8xf32> -> vector<8x8xf32>
    %cst_59 = arith.constant dense<0.000000e+00> : vector<8x8xf32>
    %170 = tpu.matmul %166, %169, %cst_59 {dimension_numbers = #tpu.dot_dimension_numbers<[1], [0], [0], [1], [0, 0, 1, 1], [], []>} : vector<8x8xf32>, vector<8x8xf32>, vector<8x8xf32> -> vector<8x8xf32>
    %cst_60 = arith.constant 0.353553385 : f32
    %171 = vector.broadcast %cst_60 : f32 to vector<8x8xf32>
    %172 = arith.mulf %170, %171 : vector<8x8xf32>
    %cst_61 = arith.constant dense<0xFF800000> : vector<8xf32>
    %173 = vector.multi_reduction <maximumf>, %172, %cst_61 [1] : vector<8x8xf32> to vector<8xf32>
    %174 = vector.shape_cast %173 : vector<8xf32> to vector<8x1xf32>
    %175 = vector.broadcast %174 : vector<8x1xf32> to vector<8x8xf32>
    %176 = arith.subf %172, %175 : vector<8x8xf32>
    %177 = math.exp %176 : vector<8x8xf32>
    %cst_62 = arith.constant dense<0.000000e+00> : vector<8xf32>
    %178 = vector.multi_reduction <add>, %177, %cst_62 [1] : vector<8x8xf32> to vector<8xf32>
    %179 = vector.shape_cast %178 : vector<8xf32> to vector<8x1xf32>
    %180 = tpu.reciprocal %179 {approx = true} : vector<8x1xf32> -> vector<8x1xf32>
    %181 = vector.broadcast %180 : vector<8x1xf32> to vector<8x8xf32>
    %182 = arith.mulf %177, %181 : vector<8x8xf32>
    %cst_63 = arith.constant dense<0.000000e+00> : vector<8x8xf32>
    %183 = tpu.matmul %182, %168, %cst_63 {dimension_numbers = #tpu.dot_dimension_numbers<[1], [0], [0], [1], [0, 0, 1, 1], [], []>} : vector<8x8xf32>, vector<8x8xf32>, vector<8x8xf32> -> vector<8x8xf32>
    %184 = vector.extract_strided_slice %37 {offsets = [16, 0], sizes = [8, 32], strides = [1, 1]} : vector<32x32xf32> to vector<8x32xf32>
    %cst_64 = arith.constant dense<0.000000e+00> : vector<8x32xf32>
    %185 = tpu.matmul %183, %184, %cst_64 {dimension_numbers = #tpu.dot_dimension_numbers<[1], [0], [0], [1], [0, 0, 1, 1], [], []>} : vector<8x8xf32>, vector<8x32xf32>, vector<8x32xf32> -> vector<8x32xf32>
    %186 = arith.addf %165, %185 : vector<8x32xf32>
    %187 = vector.extract_strided_slice %35 {offsets = [8, 24], sizes = [8, 8], strides = [1, 1]} : vector<16x96xf32> to vector<8x8xf32>
    %188 = vector.extract_strided_slice %35 {offsets = [8, 56], sizes = [8, 8], strides = [1, 1]} : vector<16x96xf32> to vector<8x8xf32>
    %189 = vector.extract_strided_slice %35 {offsets = [8, 88], sizes = [8, 8], strides = [1, 1]} : vector<16x96xf32> to vector<8x8xf32>
    %190 = tpu.transpose %188, [1, 0] : vector<8x8xf32> -> vector<8x8xf32>
    %cst_65 = arith.constant dense<0.000000e+00> : vector<8x8xf32>
    %191 = tpu.matmul %187, %190, %cst_65 {dimension_numbers = #tpu.dot_dimension_numbers<[1], [0], [0], [1], [0, 0, 1, 1], [], []>} : vector<8x8xf32>, vector<8x8xf32>, vector<8x8xf32> -> vector<8x8xf32>
    %cst_66 = arith.constant 0.353553385 : f32
    %192 = vector.broadcast %cst_66 : f32 to vector<8x8xf32>
    %193 = arith.mulf %191, %192 : vector<8x8xf32>
    %cst_67 = arith.constant dense<0xFF800000> : vector<8xf32>
    %194 = vector.multi_reduction <maximumf>, %193, %cst_67 [1] : vector<8x8xf32> to vector<8xf32>
    %195 = vector.shape_cast %194 : vector<8xf32> to vector<8x1xf32>
    %196 = vector.broadcast %195 : vector<8x1xf32> to vector<8x8xf32>
    %197 = arith.subf %193, %196 : vector<8x8xf32>
    %198 = math.exp %197 : vector<8x8xf32>
    %cst_68 = arith.constant dense<0.000000e+00> : vector<8xf32>
    %199 = vector.multi_reduction <add>, %198, %cst_68 [1] : vector<8x8xf32> to vector<8xf32>
    %200 = vector.shape_cast %199 : vector<8xf32> to vector<8x1xf32>
    %201 = tpu.reciprocal %200 {approx = true} : vector<8x1xf32> -> vector<8x1xf32>
    %202 = vector.broadcast %201 : vector<8x1xf32> to vector<8x8xf32>
    %203 = arith.mulf %198, %202 : vector<8x8xf32>
    %cst_69 = arith.constant dense<0.000000e+00> : vector<8x8xf32>
    %204 = tpu.matmul %203, %189, %cst_69 {dimension_numbers = #tpu.dot_dimension_numbers<[1], [0], [0], [1], [0, 0, 1, 1], [], []>} : vector<8x8xf32>, vector<8x8xf32>, vector<8x8xf32> -> vector<8x8xf32>
    %205 = vector.extract_strided_slice %37 {offsets = [24, 0], sizes = [8, 32], strides = [1, 1]} : vector<32x32xf32> to vector<8x32xf32>
    %cst_70 = arith.constant dense<0.000000e+00> : vector<8x32xf32>
    %206 = tpu.matmul %204, %205, %cst_70 {dimension_numbers = #tpu.dot_dimension_numbers<[1], [0], [0], [1], [0, 0, 1, 1], [], []>} : vector<8x8xf32>, vector<8x32xf32>, vector<8x32xf32> -> vector<8x32xf32>
    %207 = arith.addf %186, %206 : vector<8x32xf32>
    %208 = tpu.concatenate %122, %207 in 0 : vector<8x32xf32>, vector<8x32xf32> -> vector<16x32xf32>
    %209 = vector.broadcast %2 : vector<1x32xf32> to vector<16x32xf32>
    %210 = arith.addf %208, %209 : vector<16x32xf32>
    %211 = arith.addf %0, %210 : vector<16x32xf32>
    %cst_71 = arith.constant dense<0.000000e+00> : vector<16xf32>
    %212 = vector.multi_reduction <add>, %211, %cst_71 [1] : vector<16x32xf32> to vector<16xf32>
    %213 = vector.shape_cast %212 : vector<16xf32> to vector<16x1xf32>
    %cst_72 = arith.constant 3.200000e+01 : f32
    %214 = vector.broadcast %cst_72 : f32 to vector<16x1xf32>
    %215 = arith.divf %213, %214 : vector<16x1xf32>
    %216 = vector.broadcast %215 : vector<16x1xf32> to vector<16x32xf32>
    %217 = arith.subf %211, %216 : vector<16x32xf32>
    %218 = arith.mulf %217, %217 : vector<16x32xf32>
    %cst_73 = arith.constant dense<0.000000e+00> : vector<16xf32>
    %219 = vector.multi_reduction <add>, %218, %cst_73 [1] : vector<16x32xf32> to vector<16xf32>
    %220 = vector.shape_cast %219 : vector<16xf32> to vector<16x1xf32>
    %cst_74 = arith.constant 3.200000e+01 : f32
    %221 = vector.broadcast %cst_74 : f32 to vector<16x1xf32>
    %222 = arith.divf %220, %221 : vector<16x1xf32>
    %223 = vector.broadcast %215 : vector<16x1xf32> to vector<16x32xf32>
    %224 = arith.subf %211, %223 : vector<16x32xf32>
    %cst_75 = arith.constant 9.99999997E-7 : f32
    %225 = vector.broadcast %cst_75 : f32 to vector<16x1xf32>
    %226 = arith.addf %222, %225 : vector<16x1xf32>
    %227 = math.rsqrt %226 : vector<16x1xf32>
    %228 = vector.broadcast %227 : vector<16x1xf32> to vector<16x32xf32>
    %229 = arith.mulf %224, %228 : vector<16x32xf32>
    %230 = vector.broadcast %5 : vector<1x32xf32> to vector<16x32xf32>
    %231 = arith.mulf %229, %230 : vector<16x32xf32>
    %232 = vector.broadcast %6 : vector<1x32xf32> to vector<16x32xf32>
    %233 = arith.addf %231, %232 : vector<16x32xf32>
    %c0_76 = arith.constant 0 : index
    %c0_77 = arith.constant 0 : index
    %c0_78 = arith.constant 0 : index
    %234 = vector.load %arg3[%c0_76, %c0_77, %c0_78] : memref<2x32x64xf32, #tpu.memory_space<vmem>>, vector<1x32x64xf32>
    %235 = vector.shape_cast %234 : vector<1x32x64xf32> to vector<32x64xf32>
    %cst_79 = arith.constant dense<0.000000e+00> : vector<16x64xf32>
    %236 = tpu.matmul %233, %235, %cst_79 {dimension_numbers = #tpu.dot_dimension_numbers<[1], [0], [0], [1], [0, 0, 1, 1], [], []>} : vector<16x32xf32>, vector<32x64xf32>, vector<16x64xf32> -> vector<16x64xf32>
    %237 = vector.broadcast %7 : vector<1x64xf32> to vector<16x64xf32>
    %238 = arith.addf %236, %237 : vector<16x64xf32>
    %cst_80 = arith.constant 5.000000e-01 : f32
    %239 = vector.broadcast %cst_80 : f32 to vector<16x64xf32>
    %240 = arith.mulf %239, %238 : vector<16x64xf32>
    %cst_81 = arith.constant 0.707106769 : f32
    %241 = vector.broadcast %cst_81 : f32 to vector<16x64xf32>
    %242 = arith.mulf %238, %241 : vector<16x64xf32>
    %243 = math.erf %242 : vector<16x64xf32>
    %cst_82 = arith.constant 1.000000e+00 : f32
    %244 = vector.broadcast %cst_82 : f32 to vector<16x64xf32>
    %245 = arith.addf %244, %243 : vector<16x64xf32>
    %246 = arith.mulf %240, %245 : vector<16x64xf32>
    %c0_83 = arith.constant 0 : index
    %c0_84 = arith.constant 0 : index
    %c0_85 = arith.constant 0 : index
    %247 = vector.load %arg4[%c0_83, %c0_84, %c0_85] : memref<2x64x32xf32, #tpu.memory_space<vmem>>, vector<1x64x32xf32>
    %248 = vector.shape_cast %247 : vector<1x64x32xf32> to vector<64x32xf32>
    %cst_86 = arith.constant dense<0.000000e+00> : vector<16x32xf32>
    %249 = tpu.matmul %246, %248, %cst_86 {dimension_numbers = #tpu.dot_dimension_numbers<[1], [0], [0], [1], [0, 0, 1, 1], [], []>} : vector<16x64xf32>, vector<64x32xf32>, vector<16x32xf32> -> vector<16x32xf32>
    %250 = vector.broadcast %8 : vector<1x32xf32> to vector<16x32xf32>
    %251 = arith.addf %249, %250 : vector<16x32xf32>
    %252 = arith.addf %211, %251 : vector<16x32xf32>
    %c8 = arith.constant 8 : index
    %c0_87 = arith.constant 0 : index
    %253 = vector.load %arg5[%c8, %c0_87] : memref<24x128xf32, #tpu.memory_space<vmem>>, vector<1x96xf32>
    %c9 = arith.constant 9 : index
    %c0_88 = arith.constant 0 : index
    %254 = vector.load %arg5[%c9, %c0_88] : memref<24x128xf32, #tpu.memory_space<vmem>>, vector<1x32xf32>
    %c10 = arith.constant 10 : index
    %c0_89 = arith.constant 0 : index
    %255 = vector.load %arg5[%c10, %c0_89] : memref<24x128xf32, #tpu.memory_space<vmem>>, vector<1x32xf32>
    %c11 = arith.constant 11 : index
    %c0_90 = arith.constant 0 : index
    %256 = vector.load %arg5[%c11, %c0_90] : memref<24x128xf32, #tpu.memory_space<vmem>>, vector<1x32xf32>
    %c12 = arith.constant 12 : index
    %c0_91 = arith.constant 0 : index
    %257 = vector.load %arg5[%c12, %c0_91] : memref<24x128xf32, #tpu.memory_space<vmem>>, vector<1x32xf32>
    %c13 = arith.constant 13 : index
    %c0_92 = arith.constant 0 : index
    %258 = vector.load %arg5[%c13, %c0_92] : memref<24x128xf32, #tpu.memory_space<vmem>>, vector<1x32xf32>
    %c14 = arith.constant 14 : index
    %c0_93 = arith.constant 0 : index
    %259 = vector.load %arg5[%c14, %c0_93] : memref<24x128xf32, #tpu.memory_space<vmem>>, vector<1x64xf32>
    %c15 = arith.constant 15 : index
    %c0_94 = arith.constant 0 : index
    %260 = vector.load %arg5[%c15, %c0_94] : memref<24x128xf32, #tpu.memory_space<vmem>>, vector<1x32xf32>
    %cst_95 = arith.constant dense<0.000000e+00> : vector<16xf32>
    %261 = vector.multi_reduction <add>, %252, %cst_95 [1] : vector<16x32xf32> to vector<16xf32>
    %262 = vector.shape_cast %261 : vector<16xf32> to vector<16x1xf32>
    %cst_96 = arith.constant 3.200000e+01 : f32
    %263 = vector.broadcast %cst_96 : f32 to vector<16x1xf32>
    %264 = arith.divf %262, %263 : vector<16x1xf32>
    %265 = vector.broadcast %264 : vector<16x1xf32> to vector<16x32xf32>
    %266 = arith.subf %252, %265 : vector<16x32xf32>
    %267 = arith.mulf %266, %266 : vector<16x32xf32>
    %cst_97 = arith.constant dense<0.000000e+00> : vector<16xf32>
    %268 = vector.multi_reduction <add>, %267, %cst_97 [1] : vector<16x32xf32> to vector<16xf32>
    %269 = vector.shape_cast %268 : vector<16xf32> to vector<16x1xf32>
    %cst_98 = arith.constant 3.200000e+01 : f32
    %270 = vector.broadcast %cst_98 : f32 to vector<16x1xf32>
    %271 = arith.divf %269, %270 : vector<16x1xf32>
    %272 = vector.broadcast %264 : vector<16x1xf32> to vector<16x32xf32>
    %273 = arith.subf %252, %272 : vector<16x32xf32>
    %cst_99 = arith.constant 9.99999997E-7 : f32
    %274 = vector.broadcast %cst_99 : f32 to vector<16x1xf32>
    %275 = arith.addf %271, %274 : vector<16x1xf32>
    %276 = math.rsqrt %275 : vector<16x1xf32>
    %277 = vector.broadcast %276 : vector<16x1xf32> to vector<16x32xf32>
    %278 = arith.mulf %273, %277 : vector<16x32xf32>
    %279 = vector.broadcast %255 : vector<1x32xf32> to vector<16x32xf32>
    %280 = arith.mulf %278, %279 : vector<16x32xf32>
    %281 = vector.broadcast %256 : vector<1x32xf32> to vector<16x32xf32>
    %282 = arith.addf %280, %281 : vector<16x32xf32>
    %c1_100 = arith.constant 1 : index
    %c0_101 = arith.constant 0 : index
    %c0_102 = arith.constant 0 : index
    %283 = vector.load %arg1[%c1_100, %c0_101, %c0_102] : memref<2x32x96xf32, #tpu.memory_space<vmem>>, vector<1x32x96xf32>
    %284 = vector.shape_cast %283 : vector<1x32x96xf32> to vector<32x96xf32>
    %cst_103 = arith.constant dense<0.000000e+00> : vector<16x96xf32>
    %285 = tpu.matmul %282, %284, %cst_103 {dimension_numbers = #tpu.dot_dimension_numbers<[1], [0], [0], [1], [0, 0, 1, 1], [], []>} : vector<16x32xf32>, vector<32x96xf32>, vector<16x96xf32> -> vector<16x96xf32>
    %286 = vector.broadcast %253 : vector<1x96xf32> to vector<16x96xf32>
    %287 = arith.addf %285, %286 : vector<16x96xf32>
    %c1_104 = arith.constant 1 : index
    %c0_105 = arith.constant 0 : index
    %c0_106 = arith.constant 0 : index
    %288 = vector.load %arg2[%c1_104, %c0_105, %c0_106] : memref<2x32x32xf32, #tpu.memory_space<vmem>>, vector<1x32x32xf32>
    %289 = vector.shape_cast %288 : vector<1x32x32xf32> to vector<32x32xf32>
    %cst_107 = arith.constant 0.000000e+00 : f32
    %290 = vector.broadcast %cst_107 : f32 to vector<8x32xf32>
    %291 = vector.extract_strided_slice %287 {offsets = [0, 0], sizes = [8, 8], strides = [1, 1]} : vector<16x96xf32> to vector<8x8xf32>
    %292 = vector.extract_strided_slice %287 {offsets = [0, 32], sizes = [8, 8], strides = [1, 1]} : vector<16x96xf32> to vector<8x8xf32>
    %293 = vector.extract_strided_slice %287 {offsets = [0, 64], sizes = [8, 8], strides = [1, 1]} : vector<16x96xf32> to vector<8x8xf32>
    %294 = tpu.transpose %292, [1, 0] : vector<8x8xf32> -> vector<8x8xf32>
    %cst_108 = arith.constant dense<0.000000e+00> : vector<8x8xf32>
    %295 = tpu.matmul %291, %294, %cst_108 {dimension_numbers = #tpu.dot_dimension_numbers<[1], [0], [0], [1], [0, 0, 1, 1], [], []>} : vector<8x8xf32>, vector<8x8xf32>, vector<8x8xf32> -> vector<8x8xf32>
    %cst_109 = arith.constant 0.353553385 : f32
    %296 = vector.broadcast %cst_109 : f32 to vector<8x8xf32>
    %297 = arith.mulf %295, %296 : vector<8x8xf32>
    %cst_110 = arith.constant dense<0xFF800000> : vector<8xf32>
    %298 = vector.multi_reduction <maximumf>, %297, %cst_110 [1] : vector<8x8xf32> to vector<8xf32>
    %299 = vector.shape_cast %298 : vector<8xf32> to vector<8x1xf32>
    %300 = vector.broadcast %299 : vector<8x1xf32> to vector<8x8xf32>
    %301 = arith.subf %297, %300 : vector<8x8xf32>
    %302 = math.exp %301 : vector<8x8xf32>
    %cst_111 = arith.constant dense<0.000000e+00> : vector<8xf32>
    %303 = vector.multi_reduction <add>, %302, %cst_111 [1] : vector<8x8xf32> to vector<8xf32>
    %304 = vector.shape_cast %303 : vector<8xf32> to vector<8x1xf32>
    %305 = tpu.reciprocal %304 {approx = true} : vector<8x1xf32> -> vector<8x1xf32>
    %306 = vector.broadcast %305 : vector<8x1xf32> to vector<8x8xf32>
    %307 = arith.mulf %302, %306 : vector<8x8xf32>
    %cst_112 = arith.constant dense<0.000000e+00> : vector<8x8xf32>
    %308 = tpu.matmul %307, %293, %cst_112 {dimension_numbers = #tpu.dot_dimension_numbers<[1], [0], [0], [1], [0, 0, 1, 1], [], []>} : vector<8x8xf32>, vector<8x8xf32>, vector<8x8xf32> -> vector<8x8xf32>
    %309 = vector.extract_strided_slice %289 {offsets = [0, 0], sizes = [8, 32], strides = [1, 1]} : vector<32x32xf32> to vector<8x32xf32>
    %cst_113 = arith.constant dense<0.000000e+00> : vector<8x32xf32>
    %310 = tpu.matmul %308, %309, %cst_113 {dimension_numbers = #tpu.dot_dimension_numbers<[1], [0], [0], [1], [0, 0, 1, 1], [], []>} : vector<8x8xf32>, vector<8x32xf32>, vector<8x32xf32> -> vector<8x32xf32>
    %311 = arith.addf %290, %310 : vector<8x32xf32>
    %312 = vector.extract_strided_slice %287 {offsets = [0, 8], sizes = [8, 8], strides = [1, 1]} : vector<16x96xf32> to vector<8x8xf32>
    %313 = vector.extract_strided_slice %287 {offsets = [0, 40], sizes = [8, 8], strides = [1, 1]} : vector<16x96xf32> to vector<8x8xf32>
    %314 = vector.extract_strided_slice %287 {offsets = [0, 72], sizes = [8, 8], strides = [1, 1]} : vector<16x96xf32> to vector<8x8xf32>
    %315 = tpu.transpose %313, [1, 0] : vector<8x8xf32> -> vector<8x8xf32>
    %cst_114 = arith.constant dense<0.000000e+00> : vector<8x8xf32>
    %316 = tpu.matmul %312, %315, %cst_114 {dimension_numbers = #tpu.dot_dimension_numbers<[1], [0], [0], [1], [0, 0, 1, 1], [], []>} : vector<8x8xf32>, vector<8x8xf32>, vector<8x8xf32> -> vector<8x8xf32>
    %cst_115 = arith.constant 0.353553385 : f32
    %317 = vector.broadcast %cst_115 : f32 to vector<8x8xf32>
    %318 = arith.mulf %316, %317 : vector<8x8xf32>
    %cst_116 = arith.constant dense<0xFF800000> : vector<8xf32>
    %319 = vector.multi_reduction <maximumf>, %318, %cst_116 [1] : vector<8x8xf32> to vector<8xf32>
    %320 = vector.shape_cast %319 : vector<8xf32> to vector<8x1xf32>
    %321 = vector.broadcast %320 : vector<8x1xf32> to vector<8x8xf32>
    %322 = arith.subf %318, %321 : vector<8x8xf32>
    %323 = math.exp %322 : vector<8x8xf32>
    %cst_117 = arith.constant dense<0.000000e+00> : vector<8xf32>
    %324 = vector.multi_reduction <add>, %323, %cst_117 [1] : vector<8x8xf32> to vector<8xf32>
    %325 = vector.shape_cast %324 : vector<8xf32> to vector<8x1xf32>
    %326 = tpu.reciprocal %325 {approx = true} : vector<8x1xf32> -> vector<8x1xf32>
    %327 = vector.broadcast %326 : vector<8x1xf32> to vector<8x8xf32>
    %328 = arith.mulf %323, %327 : vector<8x8xf32>
    %cst_118 = arith.constant dense<0.000000e+00> : vector<8x8xf32>
    %329 = tpu.matmul %328, %314, %cst_118 {dimension_numbers = #tpu.dot_dimension_numbers<[1], [0], [0], [1], [0, 0, 1, 1], [], []>} : vector<8x8xf32>, vector<8x8xf32>, vector<8x8xf32> -> vector<8x8xf32>
    %330 = vector.extract_strided_slice %289 {offsets = [8, 0], sizes = [8, 32], strides = [1, 1]} : vector<32x32xf32> to vector<8x32xf32>
    %cst_119 = arith.constant dense<0.000000e+00> : vector<8x32xf32>
    %331 = tpu.matmul %329, %330, %cst_119 {dimension_numbers = #tpu.dot_dimension_numbers<[1], [0], [0], [1], [0, 0, 1, 1], [], []>} : vector<8x8xf32>, vector<8x32xf32>, vector<8x32xf32> -> vector<8x32xf32>
    %332 = arith.addf %311, %331 : vector<8x32xf32>
    %333 = vector.extract_strided_slice %287 {offsets = [0, 16], sizes = [8, 8], strides = [1, 1]} : vector<16x96xf32> to vector<8x8xf32>
    %334 = vector.extract_strided_slice %287 {offsets = [0, 48], sizes = [8, 8], strides = [1, 1]} : vector<16x96xf32> to vector<8x8xf32>
    %335 = vector.extract_strided_slice %287 {offsets = [0, 80], sizes = [8, 8], strides = [1, 1]} : vector<16x96xf32> to vector<8x8xf32>
    %336 = tpu.transpose %334, [1, 0] : vector<8x8xf32> -> vector<8x8xf32>
    %cst_120 = arith.constant dense<0.000000e+00> : vector<8x8xf32>
    %337 = tpu.matmul %333, %336, %cst_120 {dimension_numbers = #tpu.dot_dimension_numbers<[1], [0], [0], [1], [0, 0, 1, 1], [], []>} : vector<8x8xf32>, vector<8x8xf32>, vector<8x8xf32> -> vector<8x8xf32>
    %cst_121 = arith.constant 0.353553385 : f32
    %338 = vector.broadcast %cst_121 : f32 to vector<8x8xf32>
    %339 = arith.mulf %337, %338 : vector<8x8xf32>
    %cst_122 = arith.constant dense<0xFF800000> : vector<8xf32>
    %340 = vector.multi_reduction <maximumf>, %339, %cst_122 [1] : vector<8x8xf32> to vector<8xf32>
    %341 = vector.shape_cast %340 : vector<8xf32> to vector<8x1xf32>
    %342 = vector.broadcast %341 : vector<8x1xf32> to vector<8x8xf32>
    %343 = arith.subf %339, %342 : vector<8x8xf32>
    %344 = math.exp %343 : vector<8x8xf32>
    %cst_123 = arith.constant dense<0.000000e+00> : vector<8xf32>
    %345 = vector.multi_reduction <add>, %344, %cst_123 [1] : vector<8x8xf32> to vector<8xf32>
    %346 = vector.shape_cast %345 : vector<8xf32> to vector<8x1xf32>
    %347 = tpu.reciprocal %346 {approx = true} : vector<8x1xf32> -> vector<8x1xf32>
    %348 = vector.broadcast %347 : vector<8x1xf32> to vector<8x8xf32>
    %349 = arith.mulf %344, %348 : vector<8x8xf32>
    %cst_124 = arith.constant dense<0.000000e+00> : vector<8x8xf32>
    %350 = tpu.matmul %349, %335, %cst_124 {dimension_numbers = #tpu.dot_dimension_numbers<[1], [0], [0], [1], [0, 0, 1, 1], [], []>} : vector<8x8xf32>, vector<8x8xf32>, vector<8x8xf32> -> vector<8x8xf32>
    %351 = vector.extract_strided_slice %289 {offsets = [16, 0], sizes = [8, 32], strides = [1, 1]} : vector<32x32xf32> to vector<8x32xf32>
    %cst_125 = arith.constant dense<0.000000e+00> : vector<8x32xf32>
    %352 = tpu.matmul %350, %351, %cst_125 {dimension_numbers = #tpu.dot_dimension_numbers<[1], [0], [0], [1], [0, 0, 1, 1], [], []>} : vector<8x8xf32>, vector<8x32xf32>, vector<8x32xf32> -> vector<8x32xf32>
    %353 = arith.addf %332, %352 : vector<8x32xf32>
    %354 = vector.extract_strided_slice %287 {offsets = [0, 24], sizes = [8, 8], strides = [1, 1]} : vector<16x96xf32> to vector<8x8xf32>
    %355 = vector.extract_strided_slice %287 {offsets = [0, 56], sizes = [8, 8], strides = [1, 1]} : vector<16x96xf32> to vector<8x8xf32>
    %356 = vector.extract_strided_slice %287 {offsets = [0, 88], sizes = [8, 8], strides = [1, 1]} : vector<16x96xf32> to vector<8x8xf32>
    %357 = tpu.transpose %355, [1, 0] : vector<8x8xf32> -> vector<8x8xf32>
    %cst_126 = arith.constant dense<0.000000e+00> : vector<8x8xf32>
    %358 = tpu.matmul %354, %357, %cst_126 {dimension_numbers = #tpu.dot_dimension_numbers<[1], [0], [0], [1], [0, 0, 1, 1], [], []>} : vector<8x8xf32>, vector<8x8xf32>, vector<8x8xf32> -> vector<8x8xf32>
    %cst_127 = arith.constant 0.353553385 : f32
    %359 = vector.broadcast %cst_127 : f32 to vector<8x8xf32>
    %360 = arith.mulf %358, %359 : vector<8x8xf32>
    %cst_128 = arith.constant dense<0xFF800000> : vector<8xf32>
    %361 = vector.multi_reduction <maximumf>, %360, %cst_128 [1] : vector<8x8xf32> to vector<8xf32>
    %362 = vector.shape_cast %361 : vector<8xf32> to vector<8x1xf32>
    %363 = vector.broadcast %362 : vector<8x1xf32> to vector<8x8xf32>
    %364 = arith.subf %360, %363 : vector<8x8xf32>
    %365 = math.exp %364 : vector<8x8xf32>
    %cst_129 = arith.constant dense<0.000000e+00> : vector<8xf32>
    %366 = vector.multi_reduction <add>, %365, %cst_129 [1] : vector<8x8xf32> to vector<8xf32>
    %367 = vector.shape_cast %366 : vector<8xf32> to vector<8x1xf32>
    %368 = tpu.reciprocal %367 {approx = true} : vector<8x1xf32> -> vector<8x1xf32>
    %369 = vector.broadcast %368 : vector<8x1xf32> to vector<8x8xf32>
    %370 = arith.mulf %365, %369 : vector<8x8xf32>
    %cst_130 = arith.constant dense<0.000000e+00> : vector<8x8xf32>
    %371 = tpu.matmul %370, %356, %cst_130 {dimension_numbers = #tpu.dot_dimension_numbers<[1], [0], [0], [1], [0, 0, 1, 1], [], []>} : vector<8x8xf32>, vector<8x8xf32>, vector<8x8xf32> -> vector<8x8xf32>
    %372 = vector.extract_strided_slice %289 {offsets = [24, 0], sizes = [8, 32], strides = [1, 1]} : vector<32x32xf32> to vector<8x32xf32>
    %cst_131 = arith.constant dense<0.000000e+00> : vector<8x32xf32>
    %373 = tpu.matmul %371, %372, %cst_131 {dimension_numbers = #tpu.dot_dimension_numbers<[1], [0], [0], [1], [0, 0, 1, 1], [], []>} : vector<8x8xf32>, vector<8x32xf32>, vector<8x32xf32> -> vector<8x32xf32>
    %374 = arith.addf %353, %373 : vector<8x32xf32>
    %cst_132 = arith.constant 0.000000e+00 : f32
    %375 = vector.broadcast %cst_132 : f32 to vector<8x32xf32>
    %376 = vector.extract_strided_slice %287 {offsets = [8, 0], sizes = [8, 8], strides = [1, 1]} : vector<16x96xf32> to vector<8x8xf32>
    %377 = vector.extract_strided_slice %287 {offsets = [8, 32], sizes = [8, 8], strides = [1, 1]} : vector<16x96xf32> to vector<8x8xf32>
    %378 = vector.extract_strided_slice %287 {offsets = [8, 64], sizes = [8, 8], strides = [1, 1]} : vector<16x96xf32> to vector<8x8xf32>
    %379 = tpu.transpose %377, [1, 0] : vector<8x8xf32> -> vector<8x8xf32>
    %cst_133 = arith.constant dense<0.000000e+00> : vector<8x8xf32>
    %380 = tpu.matmul %376, %379, %cst_133 {dimension_numbers = #tpu.dot_dimension_numbers<[1], [0], [0], [1], [0, 0, 1, 1], [], []>} : vector<8x8xf32>, vector<8x8xf32>, vector<8x8xf32> -> vector<8x8xf32>
    %cst_134 = arith.constant 0.353553385 : f32
    %381 = vector.broadcast %cst_134 : f32 to vector<8x8xf32>
    %382 = arith.mulf %380, %381 : vector<8x8xf32>
    %cst_135 = arith.constant dense<0xFF800000> : vector<8xf32>
    %383 = vector.multi_reduction <maximumf>, %382, %cst_135 [1] : vector<8x8xf32> to vector<8xf32>
    %384 = vector.shape_cast %383 : vector<8xf32> to vector<8x1xf32>
    %385 = vector.broadcast %384 : vector<8x1xf32> to vector<8x8xf32>
    %386 = arith.subf %382, %385 : vector<8x8xf32>
    %387 = math.exp %386 : vector<8x8xf32>
    %cst_136 = arith.constant dense<0.000000e+00> : vector<8xf32>
    %388 = vector.multi_reduction <add>, %387, %cst_136 [1] : vector<8x8xf32> to vector<8xf32>
    %389 = vector.shape_cast %388 : vector<8xf32> to vector<8x1xf32>
    %390 = tpu.reciprocal %389 {approx = true} : vector<8x1xf32> -> vector<8x1xf32>
    %391 = vector.broadcast %390 : vector<8x1xf32> to vector<8x8xf32>
    %392 = arith.mulf %387, %391 : vector<8x8xf32>
    %cst_137 = arith.constant dense<0.000000e+00> : vector<8x8xf32>
    %393 = tpu.matmul %392, %378, %cst_137 {dimension_numbers = #tpu.dot_dimension_numbers<[1], [0], [0], [1], [0, 0, 1, 1], [], []>} : vector<8x8xf32>, vector<8x8xf32>, vector<8x8xf32> -> vector<8x8xf32>
    %394 = vector.extract_strided_slice %289 {offsets = [0, 0], sizes = [8, 32], strides = [1, 1]} : vector<32x32xf32> to vector<8x32xf32>
    %cst_138 = arith.constant dense<0.000000e+00> : vector<8x32xf32>
    %395 = tpu.matmul %393, %394, %cst_138 {dimension_numbers = #tpu.dot_dimension_numbers<[1], [0], [0], [1], [0, 0, 1, 1], [], []>} : vector<8x8xf32>, vector<8x32xf32>, vector<8x32xf32> -> vector<8x32xf32>
    %396 = arith.addf %375, %395 : vector<8x32xf32>
    %397 = vector.extract_strided_slice %287 {offsets = [8, 8], sizes = [8, 8], strides = [1, 1]} : vector<16x96xf32> to vector<8x8xf32>
    %398 = vector.extract_strided_slice %287 {offsets = [8, 40], sizes = [8, 8], strides = [1, 1]} : vector<16x96xf32> to vector<8x8xf32>
    %399 = vector.extract_strided_slice %287 {offsets = [8, 72], sizes = [8, 8], strides = [1, 1]} : vector<16x96xf32> to vector<8x8xf32>
    %400 = tpu.transpose %398, [1, 0] : vector<8x8xf32> -> vector<8x8xf32>
    %cst_139 = arith.constant dense<0.000000e+00> : vector<8x8xf32>
    %401 = tpu.matmul %397, %400, %cst_139 {dimension_numbers = #tpu.dot_dimension_numbers<[1], [0], [0], [1], [0, 0, 1, 1], [], []>} : vector<8x8xf32>, vector<8x8xf32>, vector<8x8xf32> -> vector<8x8xf32>
    %cst_140 = arith.constant 0.353553385 : f32
    %402 = vector.broadcast %cst_140 : f32 to vector<8x8xf32>
    %403 = arith.mulf %401, %402 : vector<8x8xf32>
    %cst_141 = arith.constant dense<0xFF800000> : vector<8xf32>
    %404 = vector.multi_reduction <maximumf>, %403, %cst_141 [1] : vector<8x8xf32> to vector<8xf32>
    %405 = vector.shape_cast %404 : vector<8xf32> to vector<8x1xf32>
    %406 = vector.broadcast %405 : vector<8x1xf32> to vector<8x8xf32>
    %407 = arith.subf %403, %406 : vector<8x8xf32>
    %408 = math.exp %407 : vector<8x8xf32>
    %cst_142 = arith.constant dense<0.000000e+00> : vector<8xf32>
    %409 = vector.multi_reduction <add>, %408, %cst_142 [1] : vector<8x8xf32> to vector<8xf32>
    %410 = vector.shape_cast %409 : vector<8xf32> to vector<8x1xf32>
    %411 = tpu.reciprocal %410 {approx = true} : vector<8x1xf32> -> vector<8x1xf32>
    %412 = vector.broadcast %411 : vector<8x1xf32> to vector<8x8xf32>
    %413 = arith.mulf %408, %412 : vector<8x8xf32>
    %cst_143 = arith.constant dense<0.000000e+00> : vector<8x8xf32>
    %414 = tpu.matmul %413, %399, %cst_143 {dimension_numbers = #tpu.dot_dimension_numbers<[1], [0], [0], [1], [0, 0, 1, 1], [], []>} : vector<8x8xf32>, vector<8x8xf32>, vector<8x8xf32> -> vector<8x8xf32>
    %415 = vector.extract_strided_slice %289 {offsets = [8, 0], sizes = [8, 32], strides = [1, 1]} : vector<32x32xf32> to vector<8x32xf32>
    %cst_144 = arith.constant dense<0.000000e+00> : vector<8x32xf32>
    %416 = tpu.matmul %414, %415, %cst_144 {dimension_numbers = #tpu.dot_dimension_numbers<[1], [0], [0], [1], [0, 0, 1, 1], [], []>} : vector<8x8xf32>, vector<8x32xf32>, vector<8x32xf32> -> vector<8x32xf32>
    %417 = arith.addf %396, %416 : vector<8x32xf32>
    %418 = vector.extract_strided_slice %287 {offsets = [8, 16], sizes = [8, 8], strides = [1, 1]} : vector<16x96xf32> to vector<8x8xf32>
    %419 = vector.extract_strided_slice %287 {offsets = [8, 48], sizes = [8, 8], strides = [1, 1]} : vector<16x96xf32> to vector<8x8xf32>
    %420 = vector.extract_strided_slice %287 {offsets = [8, 80], sizes = [8, 8], strides = [1, 1]} : vector<16x96xf32> to vector<8x8xf32>
    %421 = tpu.transpose %419, [1, 0] : vector<8x8xf32> -> vector<8x8xf32>
    %cst_145 = arith.constant dense<0.000000e+00> : vector<8x8xf32>
    %422 = tpu.matmul %418, %421, %cst_145 {dimension_numbers = #tpu.dot_dimension_numbers<[1], [0], [0], [1], [0, 0, 1, 1], [], []>} : vector<8x8xf32>, vector<8x8xf32>, vector<8x8xf32> -> vector<8x8xf32>
    %cst_146 = arith.constant 0.353553385 : f32
    %423 = vector.broadcast %cst_146 : f32 to vector<8x8xf32>
    %424 = arith.mulf %422, %423 : vector<8x8xf32>
    %cst_147 = arith.constant dense<0xFF800000> : vector<8xf32>
    %425 = vector.multi_reduction <maximumf>, %424, %cst_147 [1] : vector<8x8xf32> to vector<8xf32>
    %426 = vector.shape_cast %425 : vector<8xf32> to vector<8x1xf32>
    %427 = vector.broadcast %426 : vector<8x1xf32> to vector<8x8xf32>
    %428 = arith.subf %424, %427 : vector<8x8xf32>
    %429 = math.exp %428 : vector<8x8xf32>
    %cst_148 = arith.constant dense<0.000000e+00> : vector<8xf32>
    %430 = vector.multi_reduction <add>, %429, %cst_148 [1] : vector<8x8xf32> to vector<8xf32>
    %431 = vector.shape_cast %430 : vector<8xf32> to vector<8x1xf32>
    %432 = tpu.reciprocal %431 {approx = true} : vector<8x1xf32> -> vector<8x1xf32>
    %433 = vector.broadcast %432 : vector<8x1xf32> to vector<8x8xf32>
    %434 = arith.mulf %429, %433 : vector<8x8xf32>
    %cst_149 = arith.constant dense<0.000000e+00> : vector<8x8xf32>
    %435 = tpu.matmul %434, %420, %cst_149 {dimension_numbers = #tpu.dot_dimension_numbers<[1], [0], [0], [1], [0, 0, 1, 1], [], []>} : vector<8x8xf32>, vector<8x8xf32>, vector<8x8xf32> -> vector<8x8xf32>
    %436 = vector.extract_strided_slice %289 {offsets = [16, 0], sizes = [8, 32], strides = [1, 1]} : vector<32x32xf32> to vector<8x32xf32>
    %cst_150 = arith.constant dense<0.000000e+00> : vector<8x32xf32>
    %437 = tpu.matmul %435, %436, %cst_150 {dimension_numbers = #tpu.dot_dimension_numbers<[1], [0], [0], [1], [0, 0, 1, 1], [], []>} : vector<8x8xf32>, vector<8x32xf32>, vector<8x32xf32> -> vector<8x32xf32>
    %438 = arith.addf %417, %437 : vector<8x32xf32>
    %439 = vector.extract_strided_slice %287 {offsets = [8, 24], sizes = [8, 8], strides = [1, 1]} : vector<16x96xf32> to vector<8x8xf32>
    %440 = vector.extract_strided_slice %287 {offsets = [8, 56], sizes = [8, 8], strides = [1, 1]} : vector<16x96xf32> to vector<8x8xf32>
    %441 = vector.extract_strided_slice %287 {offsets = [8, 88], sizes = [8, 8], strides = [1, 1]} : vector<16x96xf32> to vector<8x8xf32>
    %442 = tpu.transpose %440, [1, 0] : vector<8x8xf32> -> vector<8x8xf32>
    %cst_151 = arith.constant dense<0.000000e+00> : vector<8x8xf32>
    %443 = tpu.matmul %439, %442, %cst_151 {dimension_numbers = #tpu.dot_dimension_numbers<[1], [0], [0], [1], [0, 0, 1, 1], [], []>} : vector<8x8xf32>, vector<8x8xf32>, vector<8x8xf32> -> vector<8x8xf32>
    %cst_152 = arith.constant 0.353553385 : f32
    %444 = vector.broadcast %cst_152 : f32 to vector<8x8xf32>
    %445 = arith.mulf %443, %444 : vector<8x8xf32>
    %cst_153 = arith.constant dense<0xFF800000> : vector<8xf32>
    %446 = vector.multi_reduction <maximumf>, %445, %cst_153 [1] : vector<8x8xf32> to vector<8xf32>
    %447 = vector.shape_cast %446 : vector<8xf32> to vector<8x1xf32>
    %448 = vector.broadcast %447 : vector<8x1xf32> to vector<8x8xf32>
    %449 = arith.subf %445, %448 : vector<8x8xf32>
    %450 = math.exp %449 : vector<8x8xf32>
    %cst_154 = arith.constant dense<0.000000e+00> : vector<8xf32>
    %451 = vector.multi_reduction <add>, %450, %cst_154 [1] : vector<8x8xf32> to vector<8xf32>
    %452 = vector.shape_cast %451 : vector<8xf32> to vector<8x1xf32>
    %453 = tpu.reciprocal %452 {approx = true} : vector<8x1xf32> -> vector<8x1xf32>
    %454 = vector.broadcast %453 : vector<8x1xf32> to vector<8x8xf32>
    %455 = arith.mulf %450, %454 : vector<8x8xf32>
    %cst_155 = arith.constant dense<0.000000e+00> : vector<8x8xf32>
    %456 = tpu.matmul %455, %441, %cst_155 {dimension_numbers = #tpu.dot_dimension_numbers<[1], [0], [0], [1], [0, 0, 1, 1], [], []>} : vector<8x8xf32>, vector<8x8xf32>, vector<8x8xf32> -> vector<8x8xf32>
    %457 = vector.extract_strided_slice %289 {offsets = [24, 0], sizes = [8, 32], strides = [1, 1]} : vector<32x32xf32> to vector<8x32xf32>
    %cst_156 = arith.constant dense<0.000000e+00> : vector<8x32xf32>
    %458 = tpu.matmul %456, %457, %cst_156 {dimension_numbers = #tpu.dot_dimension_numbers<[1], [0], [0], [1], [0, 0, 1, 1], [], []>} : vector<8x8xf32>, vector<8x32xf32>, vector<8x32xf32> -> vector<8x32xf32>
    %459 = arith.addf %438, %458 : vector<8x32xf32>
    %460 = tpu.concatenate %374, %459 in 0 : vector<8x32xf32>, vector<8x32xf32> -> vector<16x32xf32>
    %461 = vector.broadcast %254 : vector<1x32xf32> to vector<16x32xf32>
    %462 = arith.addf %460, %461 : vector<16x32xf32>
    %463 = arith.addf %252, %462 : vector<16x32xf32>
    %cst_157 = arith.constant dense<0.000000e+00> : vector<16xf32>
    %464 = vector.multi_reduction <add>, %463, %cst_157 [1] : vector<16x32xf32> to vector<16xf32>
    %465 = vector.shape_cast %464 : vector<16xf32> to vector<16x1xf32>
    %cst_158 = arith.constant 3.200000e+01 : f32
    %466 = vector.broadcast %cst_158 : f32 to vector<16x1xf32>
    %467 = arith.divf %465, %466 : vector<16x1xf32>
    %468 = vector.broadcast %467 : vector<16x1xf32> to vector<16x32xf32>
    %469 = arith.subf %463, %468 : vector<16x32xf32>
    %470 = arith.mulf %469, %469 : vector<16x32xf32>
    %cst_159 = arith.constant dense<0.000000e+00> : vector<16xf32>
    %471 = vector.multi_reduction <add>, %470, %cst_159 [1] : vector<16x32xf32> to vector<16xf32>
    %472 = vector.shape_cast %471 : vector<16xf32> to vector<16x1xf32>
    %cst_160 = arith.constant 3.200000e+01 : f32
    %473 = vector.broadcast %cst_160 : f32 to vector<16x1xf32>
    %474 = arith.divf %472, %473 : vector<16x1xf32>
    %475 = vector.broadcast %467 : vector<16x1xf32> to vector<16x32xf32>
    %476 = arith.subf %463, %475 : vector<16x32xf32>
    %cst_161 = arith.constant 9.99999997E-7 : f32
    %477 = vector.broadcast %cst_161 : f32 to vector<16x1xf32>
    %478 = arith.addf %474, %477 : vector<16x1xf32>
    %479 = math.rsqrt %478 : vector<16x1xf32>
    %480 = vector.broadcast %479 : vector<16x1xf32> to vector<16x32xf32>
    %481 = arith.mulf %476, %480 : vector<16x32xf32>
    %482 = vector.broadcast %257 : vector<1x32xf32> to vector<16x32xf32>
    %483 = arith.mulf %481, %482 : vector<16x32xf32>
    %484 = vector.broadcast %258 : vector<1x32xf32> to vector<16x32xf32>
    %485 = arith.addf %483, %484 : vector<16x32xf32>
    %c1_162 = arith.constant 1 : index
    %c0_163 = arith.constant 0 : index
    %c0_164 = arith.constant 0 : index
    %486 = vector.load %arg3[%c1_162, %c0_163, %c0_164] : memref<2x32x64xf32, #tpu.memory_space<vmem>>, vector<1x32x64xf32>
    %487 = vector.shape_cast %486 : vector<1x32x64xf32> to vector<32x64xf32>
    %cst_165 = arith.constant dense<0.000000e+00> : vector<16x64xf32>
    %488 = tpu.matmul %485, %487, %cst_165 {dimension_numbers = #tpu.dot_dimension_numbers<[1], [0], [0], [1], [0, 0, 1, 1], [], []>} : vector<16x32xf32>, vector<32x64xf32>, vector<16x64xf32> -> vector<16x64xf32>
    %489 = vector.broadcast %259 : vector<1x64xf32> to vector<16x64xf32>
    %490 = arith.addf %488, %489 : vector<16x64xf32>
    %cst_166 = arith.constant 5.000000e-01 : f32
    %491 = vector.broadcast %cst_166 : f32 to vector<16x64xf32>
    %492 = arith.mulf %491, %490 : vector<16x64xf32>
    %cst_167 = arith.constant 0.707106769 : f32
    %493 = vector.broadcast %cst_167 : f32 to vector<16x64xf32>
    %494 = arith.mulf %490, %493 : vector<16x64xf32>
    %495 = math.erf %494 : vector<16x64xf32>
    %cst_168 = arith.constant 1.000000e+00 : f32
    %496 = vector.broadcast %cst_168 : f32 to vector<16x64xf32>
    %497 = arith.addf %496, %495 : vector<16x64xf32>
    %498 = arith.mulf %492, %497 : vector<16x64xf32>
    %c1_169 = arith.constant 1 : index
    %c0_170 = arith.constant 0 : index
    %c0_171 = arith.constant 0 : index
    %499 = vector.load %arg4[%c1_169, %c0_170, %c0_171] : memref<2x64x32xf32, #tpu.memory_space<vmem>>, vector<1x64x32xf32>
    %500 = vector.shape_cast %499 : vector<1x64x32xf32> to vector<64x32xf32>
    %cst_172 = arith.constant dense<0.000000e+00> : vector<16x32xf32>
    %501 = tpu.matmul %498, %500, %cst_172 {dimension_numbers = #tpu.dot_dimension_numbers<[1], [0], [0], [1], [0, 0, 1, 1], [], []>} : vector<16x64xf32>, vector<64x32xf32>, vector<16x32xf32> -> vector<16x32xf32>
    %502 = vector.broadcast %260 : vector<1x32xf32> to vector<16x32xf32>
    %503 = arith.addf %501, %502 : vector<16x32xf32>
    %504 = arith.addf %463, %503 : vector<16x32xf32>
    %c16 = arith.constant 16 : index
    %c0_173 = arith.constant 0 : index
    %505 = vector.load %arg5[%c16, %c0_173] : memref<24x128xf32, #tpu.memory_space<vmem>>, vector<1x32xf32>
    %c17 = arith.constant 17 : index
    %c0_174 = arith.constant 0 : index
    %506 = vector.load %arg5[%c17, %c0_174] : memref<24x128xf32, #tpu.memory_space<vmem>>, vector<1x32xf32>
    %cst_175 = arith.constant dense<0.000000e+00> : vector<16xf32>
    %507 = vector.multi_reduction <add>, %504, %cst_175 [1] : vector<16x32xf32> to vector<16xf32>
    %508 = vector.shape_cast %507 : vector<16xf32> to vector<16x1xf32>
    %cst_176 = arith.constant 3.200000e+01 : f32
    %509 = vector.broadcast %cst_176 : f32 to vector<16x1xf32>
    %510 = arith.divf %508, %509 : vector<16x1xf32>
    %511 = vector.broadcast %510 : vector<16x1xf32> to vector<16x32xf32>
    %512 = arith.subf %504, %511 : vector<16x32xf32>
    %513 = arith.mulf %512, %512 : vector<16x32xf32>
    %cst_177 = arith.constant dense<0.000000e+00> : vector<16xf32>
    %514 = vector.multi_reduction <add>, %513, %cst_177 [1] : vector<16x32xf32> to vector<16xf32>
    %515 = vector.shape_cast %514 : vector<16xf32> to vector<16x1xf32>
    %cst_178 = arith.constant 3.200000e+01 : f32
    %516 = vector.broadcast %cst_178 : f32 to vector<16x1xf32>
    %517 = arith.divf %515, %516 : vector<16x1xf32>
    %518 = vector.broadcast %510 : vector<16x1xf32> to vector<16x32xf32>
    %519 = arith.subf %504, %518 : vector<16x32xf32>
    %cst_179 = arith.constant 9.99999997E-7 : f32
    %520 = vector.broadcast %cst_179 : f32 to vector<16x1xf32>
    %521 = arith.addf %517, %520 : vector<16x1xf32>
    %522 = math.rsqrt %521 : vector<16x1xf32>
    %523 = vector.broadcast %522 : vector<16x1xf32> to vector<16x32xf32>
    %524 = arith.mulf %519, %523 : vector<16x32xf32>
    %525 = vector.broadcast %505 : vector<1x32xf32> to vector<16x32xf32>
    %526 = arith.mulf %524, %525 : vector<16x32xf32>
    %527 = vector.broadcast %506 : vector<1x32xf32> to vector<16x32xf32>
    %528 = arith.addf %526, %527 : vector<16x32xf32>
    %c0_180 = arith.constant 0 : index
    %c0_181 = arith.constant 0 : index
    %529 = vector.load %arg6[%c0_180, %c0_181] : memref<16x32xf32, #tpu.memory_space<vmem>>, vector<16x32xf32>
    tpu.vector_store %arg6[%c0_180, %c0_181], %528 {strides = array<i32>} : memref<16x32xf32, #tpu.memory_space<vmem>>, vector<16x32xf32>,
    return
  }
}

</mosaic_0001>

<llo_original>
// kernel: tpu_custom_call.1
$region0: #{tpu_custom_call.1}
  #allocation0 [shape = 'u32[]', space=smem, size = 0x4, offset = 0x4, fixed_abs, tag = 'smem constant byte address 0x4 - core index']
  #allocation1 [shape = 'u32[144,128]{1,0:T(1,128)}', space=vmem, size = 0x12000, scoped, tag = 'internal scratch']
  %s0 = inlined_call_operand.hbm [shape: f32[16,32], index: 0, kind: input, shape index: {}]
  %s1 = inlined_call_operand.vmem [shape: f32[2,32,96], index: 1, kind: input, shape index: {}]
  %s2 = inlined_call_operand.vmem [shape: f32[2,32,32], index: 2, kind: input, shape index: {}]
  %s3 = inlined_call_operand.vmem [shape: f32[2,32,64], index: 3, kind: input, shape index: {}]
  %s4 = inlined_call_operand.vmem [shape: f32[2,64,32], index: 4, kind: input, shape index: {}]
  %s5 = inlined_call_operand.hbm [shape: f32[24,128], index: 5, kind: input, shape index: {}]
  %s6 = inlined_call_operand.hbm [shape: f32[16,32], index: 6, kind: output, shape index: {}]
  %s7 = sld [smem:[#allocation0]]
  $region42: #{tpu_custom_call.1} parent=0
    _
  %s9 = ssub.s32 1, %s7
  %s10 = scalar_select 0, %s9, %s7
  $region1: #{tpu_custom_call.1} parent=0
    #allocation2 [shape = 'u8[8192]{0}', space=vmem, size = 0x2000, scoped, tag = 'input window, operand 0, single buffered']
    #allocation3 [shape = 's32[1]{0}', space=sflag, size = 0x4, scoped, tag = 'scoped memory for tpu_custom_call.1']
    #allocation4 [shape = 's32[1]{0}', space=sflag, size = 0x4, scoped, tag = 'scoped memory for tpu_custom_call.1']
    #allocation5 [shape = 'u8[12288]{0}', space=vmem, size = 0x3000, scoped, tag = 'input window, operand 5, single buffered']
    #allocation6 [shape = 's32[1]{0}', space=sflag, size = 0x4, scoped, tag = 'scoped memory for tpu_custom_call.1']
    #allocation7 [shape = 'u8[8192]{0}', space=vmem, size = 0x2000, scoped, tag = 'output window, operand 0, single buffered']
    %11 = vsyncpa [#allocation3], 0
    %12 = vsyncpa [#allocation6], 0
    %13 = vsyncpa [#allocation4], 0
    // Predicated region
    $region2: #{tpu_custom_call.1} parent=1 // pred_check
      _
    $region3: #{tpu_custom_call.1} parent=1 // pred_check_branch
      %15 = sbr.rel (0) target = $region5
    $region4: #{tpu_custom_call.1} parent=1 // pred_region
      %s17 = ssub.s32 256, 256
      %18 = vsyncadd [#allocation3], %s17
      %s19 = sshll.u32 [#allocation2], 4
      %s20 = int_to_ptr.vmem [resolvable:$true] %s19
      %25 = dma.hbm_to_vmem [thread:$0]  %s0, 256, %s20, [#allocation3], 128, 128, 8
    $region5: #{tpu_custom_call.1} parent=1 // pred_fallthru
      _
    // Predicated region
    $region6: #{tpu_custom_call.1} parent=1 // pred_check
      _
    $region7: #{tpu_custom_call.1} parent=1 // pred_check_branch
      %27 = sbr.rel (0) target = $region9
    $region8: #{tpu_custom_call.1} parent=1 // pred_region
      _
    $region9: #{tpu_custom_call.1} parent=1 // pred_fallthru
      _
    // Predicated region
    $region10: #{tpu_custom_call.1} parent=1 // pred_check
      _
    $region11: #{tpu_custom_call.1} parent=1 // pred_check_branch
      %29 = sbr.rel (0) target = $region13
    $region12: #{tpu_custom_call.1} parent=1 // pred_region
      _
    $region13: #{tpu_custom_call.1} parent=1 // pred_fallthru
      _
    // Predicated region
    $region14: #{tpu_custom_call.1} parent=1 // pred_check
      _
    $region15: #{tpu_custom_call.1} parent=1 // pred_check_branch
      %31 = sbr.rel (0) target = $region17
    $region16: #{tpu_custom_call.1} parent=1 // pred_region
      _
    $region17: #{tpu_custom_call.1} parent=1 // pred_fallthru
      _
    // Predicated region
    $region18: #{tpu_custom_call.1} parent=1 // pred_check
      _
    $region19: #{tpu_custom_call.1} parent=1 // pred_check_branch
      %33 = sbr.rel (0) target = $region21
    $region20: #{tpu_custom_call.1} parent=1 // pred_region
      _
    $region21: #{tpu_custom_call.1} parent=1 // pred_fallthru
      _
    // Predicated region
    $region22: #{tpu_custom_call.1} parent=1 // pred_check
      _
    $region23: #{tpu_custom_call.1} parent=1 // pred_check_branch
      %35 = sbr.rel (0) target = $region25
    $region24: #{tpu_custom_call.1} parent=1 // pred_region
      %s37 = ssub.s32 384, 384
      %38 = vsyncadd [#allocation6], %s37
      %s39 = sshll.u32 [#allocation5], 4
      %s40 = int_to_ptr.vmem [resolvable:$true] %s39
      %45 = dma.hbm_to_vmem [thread:$0]  %s5, 384, %s40, [#allocation6], 128, 128, 8
    $region25: #{tpu_custom_call.1} parent=1 // pred_fallthru
      _
    // Predicated region
    $region26: #{tpu_custom_call.1} parent=1 // pred_check
      _
    $region27: #{tpu_custom_call.1} parent=1 // pred_check_branch
      %47 = sbr.rel (0) target = $region29
    $region28: #{tpu_custom_call.1} parent=1 // pred_region
      %48 = dma.done [#allocation3], 256
    $region29: #{tpu_custom_call.1} parent=1 // pred_fallthru
      _
    // Predicated region
    $region30: #{tpu_custom_call.1} parent=1 // pred_check
      _
    $region31: #{tpu_custom_call.1} parent=1 // pred_check_branch
      %50 = sbr.rel (0) target = $region33
    $region32: #{tpu_custom_call.1} parent=1 // pred_region
      %51 = dma.done [#allocation6], 384
    $region33: #{tpu_custom_call.1} parent=1 // pred_fallthru
      _
    %v52 = vld [vmem:[#allocation2] sm:$0xff]
    %v53 = vld [vmem:[#allocation2 + $0x8] sm:$0xff]
    %v54 = vld [vmem:[#allocation5] sm:$0x1]
    %v55 = vld [vmem:[#allocation5 + $0x1] sm:$0x1]
    %v56 = vld [vmem:[#allocation5 + $0x2] sm:$0x1]
    %v57 = vld [vmem:[#allocation5 + $0x3] sm:$0x1]
    %v58 = vld [vmem:[#allocation5 + $0x4] sm:$0x1]
    %v59 = vld [vmem:[#allocation5 + $0x5] sm:$0x1]
    %v60 = vld [vmem:[#allocation5 + $0x6] sm:$0x1]
    %v61 = vld [vmem:[#allocation5 + $0x7] sm:$0x1]
    %vm62 = vcmask 261120
    %v63 = vsel %vm62, %v52, 0.0
    %64 = vadd.xlane.f32.xlu0 %v63
    %v65 = vpop.xlane.xlu0 %64
    %v66 = vsel %vm62, %v53, 0.0
    %67 = vadd.xlane.f32.xlu0 %v66
    %v68 = vpop.xlane.xlu0 %67
    %v69 = vrcp.pop 32.0
    %v70 = vmul.f32 %v65, %v69
    %v71 = vmul.f32 %v68, %v69
    %v72 = vsub.f32 %v52, %v70
    %v73 = vsub.f32 %v53, %v71
    %v74 = vmul.f32 %v72, %v72
    %v75 = vmul.f32 %v73, %v73
    %v76 = vsel %vm62, %v74, 0.0
    %77 = vadd.xlane.f32.xlu0 %v76
    %v78 = vpop.xlane.xlu0 %77
    %v79 = vsel %vm62, %v75, 0.0
    %80 = vadd.xlane.f32.xlu0 %v79
    %v81 = vpop.xlane.xlu0 %80
    %v82 = vmul.f32 %v78, %v69
    %v83 = vmul.f32 %v81, %v69
    %v84 = vadd.f32 %v82, 1e-06
    %v85 = vadd.f32 %v83, 1e-06
    %v86 = vrsqrt.pop %v84
    %v87 = vrsqrt.pop %v85
    %v88 = vmul.f32 %v72, %v86
    %v89 = vmul.f32 %v73, %v87
    %v90 = vlaneseq
    %v91 = vshrl.u32 %v90, 7
    %v92 = vsub.s32 0, %v91
    %v93 = vrot.slane %v56, %v92
    %v94 = vmul.f32 %v88, %v93
    %v95 = vmul.f32 %v89, %v93
    %v96 = vlaneseq
    %v97 = vshrl.u32 %v96, 7
    %v98 = vsub.s32 0, %v97
    %v99 = vrot.slane %v57, %v98
    %v100 = vadd.f32 %v94, %v99
    %v101 = vadd.f32 %v95, %v99
    %v102 = vld [vmem:[%s1] sm:$0xff]
    %v103 = vld [vmem:[%s1 + $0x8] sm:$0xff]
    %v104 = vld [vmem:[%s1 + $0x10] sm:$0xff]
    %v105 = vld [vmem:[%s1 + $0x18] sm:$0xff]
    %v106 = vlaneseq
    %v107 = vshrl.u32 %v106, 7
    %v108 = vsub.s32 0, %v107
    %v109 = vrot.slane %v54, %v108
    %v111 = vsel %vm62, %v100, 0
    %v114 = vsel %vm62, %v101, 0
    %116 = vmatprep.subr.mxu0 0.0
    %117 = vmatpush1.msra.mxu0 %v102
    %118 = vmatprep.subr.mxu0 0.0
    %119 = vmatpush1.msra.mxu0 %v103
    %120 = vmatprep.subr.mxu0 0.0
    %121 = vmatpush1.msra.mxu0 %v104
    %122 = vmatprep.subr.mxu0 0.0
    %123 = vmatpush1.msra.mxu0 %v105
    %124 = vmatprep.subr.mxu0 0.0
    %125 = vmatpush1.msra.mxu0 0.0
    %126 = vmatprep.subr.mxu0 0.0
    %127 = vmatpush1.msra.mxu0 0.0
    %128 = vmatprep.subr.mxu0 0.0
    %129 = vmatpush1.msra.mxu0 0.0
    %130 = vmatprep.subr.mxu0 0.0
    %131 = vmatpush1.msra.mxu0 0.0
    %132 = vmatprep.subr.mxu0 0.0
    %133 = vmatpush1.msra.mxu0 0.0
    %134 = vmatprep.subr.mxu0 0.0
    %135 = vmatpush1.msra.mxu0 0.0
    %136 = vmatprep.subr.mxu0 0.0
    %137 = vmatpush1.msra.mxu0 0.0
    %138 = vmatprep.subr.mxu0 0.0
    %139 = vmatpush1.msra.mxu0 0.0
    %140 = vmatprep.subr.mxu0 0.0
    %141 = vmatpush1.msra.mxu0 0.0
    %142 = vmatprep.subr.mxu0 0.0
    %143 = vmatpush1.msra.mxu0 0.0
    %144 = vmatprep.subr.mxu0 0.0
    %145 = vmatpush1.msra.mxu0 0.0
    %146 = vmatprep.subr.mxu0 0.0
    %147 = vmatpush1.msra.mxu0 0.0
    %148 = vmatprep.subr.mxu0 0.0
    %149 = vmatpush1.msra.mxu0 0.0
    %150 = vmatprep.subr.mxu0 0.0
    %151 = vmatpush1.msra.mxu0 0.0
    %152 = vmatprep.subr.mxu0 0.0
    %153 = vmatpush1.msra.mxu0 0.0
    %154 = vmatprep.subr.mxu0 0.0
    %155 = vmatpush1.msra.mxu0 0.0
    %156 = vmatprep.subr.mxu0 0.0
    %157 = vmatpush1.msra.mxu0 0.0
    %158 = vmatprep.subr.mxu0 0.0
    %159 = vmatpush1.msra.mxu0 0.0
    %160 = vmatprep.subr.mxu0 0.0
    %161 = vmatpush1.msra.mxu0 0.0
    %162 = vmatprep.subr.mxu0 0.0
    %163 = vmatpush1.msra.mxu0 0.0
    %164 = vmatprep.subr.mxu0 0.0
    %165 = vmatpush1.msra.mxu0 0.0
    %166 = vmatprep.subr.mxu0 0.0
    %167 = vmatpush1.msra.mxu0 0.0
    %168 = vmatprep.subr.mxu0 0.0
    %169 = vmatpush1.msra.mxu0 0.0
    %170 = vmatprep.subr.mxu0 0.0
    %171 = vmatpush1.msra.mxu0 0.0
    %172 = vmatprep.subr.mxu0 0.0
    %173 = vmatpush1.msra.mxu0 0.0
    %174 = vmatprep.subr.mxu0 0.0
    %175 = vmatpush1.msra.mxu0 0.0
    %176 = vmatprep.subr.mxu0 0.0
    %177 = vmatpush1.msra.mxu0 0.0
    %178 = vmatprep.subr.mxu0 0.0
    %179 = vmatpush1.msra.mxu0 0.0
    %180 = vmatprep.mubr.f32.mxu0 0.0
    %181 = vmatmul.mubr.f32.gmra.mrb[0].mxu0 %v111
    %v182 = vpop.f32.mrb[0].mxu0
    %v183 = vadd.f32 %v109, %v182
    %v184 = vpop.f32.mrb[0].mxu0
    %185 = vmatprep.mubr.f32.mxu0 0.0
    %186 = vmatmul.mubr.f32.gmra.mrb[0].mxu0 %v114
    %v187 = vpop.f32.mrb[0].mxu0
    %v188 = vadd.f32 %v109, %v187
    %v189 = vpop.f32.mrb[0].mxu0
    %190 = vdwg.mxu0
    %v191 = vld [vmem:[%s2] sm:$0xff]
    %v192 = vld [vmem:[%s2 + $0x8] sm:$0xff]
    %v193 = vld [vmem:[%s2 + $0x10] sm:$0xff]
    %v194 = vld [vmem:[%s2 + $0x18] sm:$0xff]
    %196 = vrot.lane.b32.xlu0 %v183, 96
    %v197 = vpop.permute.xlu0 %196
    %vm198 = vcmask 64512
    %v199 = vsel %vm198, %v183, 0
    %v201 = vsel %vm198, %v197, 0
    %203 = vmatprep.subr.mxu0 0.0
    %204 = vmatpush1.xpose.msra.mxu0 %v201
    %205 = vmatprep.subr.mxu0 0.0
    %206 = vmatpush1.xpose.msra.mxu0 0.0
    %207 = vmatprep.subr.mxu0 0.0
    %208 = vmatpush1.xpose.msra.mxu0 0.0
    %209 = vmatprep.subr.mxu0 0.0
    %210 = vmatpush1.xpose.msra.mxu0 0.0
    %211 = vmatprep.subr.mxu0 0.0
    %212 = vmatpush1.xpose.msra.mxu0 0.0
    %213 = vmatprep.subr.mxu0 0.0
    %214 = vmatpush1.xpose.msra.mxu0 0.0
    %215 = vmatprep.subr.mxu0 0.0
    %216 = vmatpush1.xpose.msra.mxu0 0.0
    %217 = vmatprep.subr.mxu0 0.0
    %218 = vmatpush1.xpose.msra.mxu0 0.0
    %219 = vmatprep.subr.mxu0 0.0
    %220 = vmatpush1.xpose.msra.mxu0 0.0
    %221 = vmatprep.subr.mxu0 0.0
    %222 = vmatpush1.xpose.msra.mxu0 0.0
    %223 = vmatprep.subr.mxu0 0.0
    %224 = vmatpush1.xpose.msra.mxu0 0.0
    %225 = vmatprep.subr.mxu0 0.0
    %226 = vmatpush1.xpose.msra.mxu0 0.0
    %227 = vmatprep.subr.mxu0 0.0
    %228 = vmatpush1.xpose.msra.mxu0 0.0
    %229 = vmatprep.subr.mxu0 0.0
    %230 = vmatpush1.xpose.msra.mxu0 0.0
    %231 = vmatprep.subr.mxu0 0.0
    %232 = vmatpush1.xpose.msra.mxu0 0.0
    %233 = vmatprep.subr.mxu0 0.0
    %234 = vmatpush1.xpose.msra.mxu0 0.0
    %235 = vmatprep.subr.mxu0 0.0
    %236 = vmatpush1.xpose.msra.mxu0 0.0
    %237 = vmatprep.subr.mxu0 0.0
    %238 = vmatpush1.xpose.msra.mxu0 0.0
    %239 = vmatprep.subr.mxu0 0.0
    %240 = vmatpush1.xpose.msra.mxu0 0.0
    %241 = vmatprep.subr.mxu0 0.0
    %242 = vmatpush1.xpose.msra.mxu0 0.0
    %243 = vmatprep.subr.mxu0 0.0
    %244 = vmatpush1.xpose.msra.mxu0 0.0
    %245 = vmatprep.subr.mxu0 0.0
    %246 = vmatpush1.xpose.msra.mxu0 0.0
    %247 = vmatprep.subr.mxu0 0.0
    %248 = vmatpush1.xpose.msra.mxu0 0.0
    %249 = vmatprep.subr.mxu0 0.0
    %250 = vmatpush1.xpose.msra.mxu0 0.0
    %251 = vmatprep.subr.mxu0 0.0
    %252 = vmatpush1.xpose.msra.mxu0 0.0
    %253 = vmatprep.subr.mxu0 0.0
    %254 = vmatpush1.xpose.msra.mxu0 0.0
    %255 = vmatprep.subr.mxu0 0.0
    %256 = vmatpush1.xpose.msra.mxu0 0.0
    %257 = vmatprep.subr.mxu0 0.0
    %258 = vmatpush1.xpose.msra.mxu0 0.0
    %259 = vmatprep.subr.mxu0 0.0
    %260 = vmatpush1.xpose.msra.mxu0 0.0
    %261 = vmatprep.subr.mxu0 0.0
    %262 = vmatpush1.xpose.msra.mxu0 0.0
    %263 = vmatprep.subr.mxu0 0.0
    %264 = vmatpush1.xpose.msra.mxu0 0.0
    %265 = vmatprep.subr.mxu0 0.0
    %266 = vmatpush1.xpose.msra.mxu0 0.0
    %267 = vmatprep.mubr.f32.mxu0 0.0
    %268 = vmatmul.mubr.f32.gmra.mrb[0].mxu0 %v199
    %v269 = vpop.f32.mrb[0].mxu0
    %v270 = vadd.f32 0.0, %v269
    %v271 = vpop.f32.mrb[0].mxu0
    %272 = vdwg.mxu0
    %v273 = vmul.f32 %v270, 0.35355338
    %v274 = vsel %vm198, %v273, -inf
    %275 = vmax.xlane.f32.xlu0 %v274
    %v276 = vpop.xlane.xlu0 %275
    %v277 = vsub.f32 %v273, %v276
    %v278 = vmul.f32 %v277, 1.442695
    %v279 = vpow.pop %v278
    %v280 = vsel %vm198, %v279, 0.0
    %281 = vadd.xlane.f32.xlu0 %v280
    %v282 = vpop.xlane.xlu0 %281
    %v283 = vrcp.pop %v282
    %v284 = vmul.f32 %v279, %v283
    %285 = vrot.lane.b32.xlu0 %v183, 64
    %v286 = vpop.permute.xlu0 %285
    %v289 = vsel %vm198, %v284, 0
    %291 = vmatprep.subr.mxu0 0.0
    %292 = vmatpush1.msra.mxu0 %v286
    %293 = vmatprep.subr.mxu0 0.0
    %294 = vmatpush1.msra.mxu0 0.0
    %295 = vmatprep.subr.mxu0 0.0
    %296 = vmatpush1.msra.mxu0 0.0
    %297 = vmatprep.subr.mxu0 0.0
    %298 = vmatpush1.msra.mxu0 0.0
    %299 = vmatprep.subr.mxu0 0.0
    %300 = vmatpush1.msra.mxu0 0.0
    %301 = vmatprep.subr.mxu0 0.0
    %302 = vmatpush1.msra.mxu0 0.0
    %303 = vmatprep.subr.mxu0 0.0
    %304 = vmatpush1.msra.mxu0 0.0
    %305 = vmatprep.subr.mxu0 0.0
    %306 = vmatpush1.msra.mxu0 0.0
    %307 = vmatprep.subr.mxu0 0.0
    %308 = vmatpush1.msra.mxu0 0.0
    %309 = vmatprep.subr.mxu0 0.0
    %310 = vmatpush1.msra.mxu0 0.0
    %311 = vmatprep.subr.mxu0 0.0
    %312 = vmatpush1.msra.mxu0 0.0
    %313 = vmatprep.subr.mxu0 0.0
    %314 = vmatpush1.msra.mxu0 0.0
    %315 = vmatprep.subr.mxu0 0.0
    %316 = vmatpush1.msra.mxu0 0.0
    %317 = vmatprep.subr.mxu0 0.0
    %318 = vmatpush1.msra.mxu0 0.0
    %319 = vmatprep.subr.mxu0 0.0
    %320 = vmatpush1.msra.mxu0 0.0
    %321 = vmatprep.subr.mxu0 0.0
    %322 = vmatpush1.msra.mxu0 0.0
    %323 = vmatprep.subr.mxu0 0.0
    %324 = vmatpush1.msra.mxu0 0.0
    %325 = vmatprep.subr.mxu0 0.0
    %326 = vmatpush1.msra.mxu0 0.0
    %327 = vmatprep.subr.mxu0 0.0
    %328 = vmatpush1.msra.mxu0 0.0
    %329 = vmatprep.subr.mxu0 0.0
    %330 = vmatpush1.msra.mxu0 0.0
    %331 = vmatprep.subr.mxu0 0.0
    %332 = vmatpush1.msra.mxu0 0.0
    %333 = vmatprep.subr.mxu0 0.0
    %334 = vmatpush1.msra.mxu0 0.0
    %335 = vmatprep.subr.mxu0 0.0
    %336 = vmatpush1.msra.mxu0 0.0
    %337 = vmatprep.subr.mxu0 0.0
    %338 = vmatpush1.msra.mxu0 0.0
    %339 = vmatprep.subr.mxu0 0.0
    %340 = vmatpush1.msra.mxu0 0.0
    %341 = vmatprep.subr.mxu0 0.0
    %342 = vmatpush1.msra.mxu0 0.0
    %343 = vmatprep.subr.mxu0 0.0
    %344 = vmatpush1.msra.mxu0 0.0
    %345 = vmatprep.subr.mxu0 0.0
    %346 = vmatpush1.msra.mxu0 0.0
    %347 = vmatprep.subr.mxu0 0.0
    %348 = vmatpush1.msra.mxu0 0.0
    %349 = vmatprep.subr.mxu0 0.0
    %350 = vmatpush1.msra.mxu0 0.0
    %351 = vmatprep.subr.mxu0 0.0
    %352 = vmatpush1.msra.mxu0 0.0
    %353 = vmatprep.subr.mxu0 0.0
    %354 = vmatpush1.msra.mxu0 0.0
    %355 = vmatprep.mubr.f32.mxu0 0.0
    %356 = vmatmul.mubr.f32.gmra.mrb[0].mxu0 %v289
    %v357 = vpop.f32.mrb[0].mxu0
    %v358 = vadd.f32 0.0, %v357
    %v359 = vpop.f32.mrb[0].mxu0
    %360 = vdwg.mxu0
    %361 = vrot.lane.b32.xlu0 %v183, 120
    %v362 = vpop.permute.xlu0 %361
    %363 = vrot.lane.b32.xlu0 %v183, 88
    %v364 = vpop.permute.xlu0 %363
    %v365 = vsel %vm198, %v362, 0
    %v367 = vsel %vm198, %v364, 0
    %369 = vmatprep.subr.mxu0 0.0
    %370 = vmatpush1.xpose.msra.mxu0 %v367
    %371 = vmatprep.subr.mxu0 0.0
    %372 = vmatpush1.xpose.msra.mxu0 0.0
    %373 = vmatprep.subr.mxu0 0.0
    %374 = vmatpush1.xpose.msra.mxu0 0.0
    %375 = vmatprep.subr.mxu0 0.0
    %376 = vmatpush1.xpose.msra.mxu0 0.0
    %377 = vmatprep.subr.mxu0 0.0
    %378 = vmatpush1.xpose.msra.mxu0 0.0
    %379 = vmatprep.subr.mxu0 0.0
    %380 = vmatpush1.xpose.msra.mxu0 0.0
    %381 = vmatprep.subr.mxu0 0.0
    %382 = vmatpush1.xpose.msra.mxu0 0.0
    %383 = vmatprep.subr.mxu0 0.0
    %384 = vmatpush1.xpose.msra.mxu0 0.0
    %385 = vmatprep.subr.mxu0 0.0
    %386 = vmatpush1.xpose.msra.mxu0 0.0
    %387 = vmatprep.subr.mxu0 0.0
    %388 = vmatpush1.xpose.msra.mxu0 0.0
    %389 = vmatprep.subr.mxu0 0.0
    %390 = vmatpush1.xpose.msra.mxu0 0.0
    %391 = vmatprep.subr.mxu0 0.0
    %392 = vmatpush1.xpose.msra.mxu0 0.0
    %393 = vmatprep.subr.mxu0 0.0
    %394 = vmatpush1.xpose.msra.mxu0 0.0
    %395 = vmatprep.subr.mxu0 0.0
    %396 = vmatpush1.xpose.msra.mxu0 0.0
    %397 = vmatprep.subr.mxu0 0.0
    %398 = vmatpush1.xpose.msra.mxu0 0.0
    %399 = vmatprep.subr.mxu0 0.0
    %400 = vmatpush1.xpose.msra.mxu0 0.0
    %401 = vmatprep.subr.mxu0 0.0
    %402 = vmatpush1.xpose.msra.mxu0 0.0
    %403 = vmatprep.subr.mxu0 0.0
    %404 = vmatpush1.xpose.msra.mxu0 0.0
    %405 = vmatprep.subr.mxu0 0.0
    %406 = vmatpush1.xpose.msra.mxu0 0.0
    %407 = vmatprep.subr.mxu0 0.0
    %408 = vmatpush1.xpose.msra.mxu0 0.0
    %409 = vmatprep.subr.mxu0 0.0
    %410 = vmatpush1.xpose.msra.mxu0 0.0
    %411 = vmatprep.subr.mxu0 0.0
    %412 = vmatpush1.xpose.msra.mxu0 0.0
    %413 = vmatprep.subr.mxu0 0.0
    %414 = vmatpush1.xpose.msra.mxu0 0.0
    %415 = vmatprep.subr.mxu0 0.0
    %416 = vmatpush1.xpose.msra.mxu0 0.0
    %417 = vmatprep.subr.mxu0 0.0
    %418 = vmatpush1.xpose.msra.mxu0 0.0
    %419 = vmatprep.subr.mxu0 0.0
    %420 = vmatpush1.xpose.msra.mxu0 0.0
    %421 = vmatprep.subr.mxu0 0.0
    %422 = vmatpush1.xpose.msra.mxu0 0.0
    %423 = vmatprep.subr.mxu0 0.0
    %424 = vmatpush1.xpose.msra.mxu0 0.0
    %425 = vmatprep.subr.mxu0 0.0
    %426 = vmatpush1.xpose.msra.mxu0 0.0
    %427 = vmatprep.subr.mxu0 0.0
    %428 = vmatpush1.xpose.msra.mxu0 0.0
    %429 = vmatprep.subr.mxu0 0.0
    %430 = vmatpush1.xpose.msra.mxu0 0.0
    %431 = vmatprep.subr.mxu0 0.0
    %432 = vmatpush1.xpose.msra.mxu0 0.0
    %433 = vmatprep.mubr.f32.mxu0 0.0
    %434 = vmatmul.mubr.f32.gmra.mrb[0].mxu0 %v365
    %v435 = vpop.f32.mrb[0].mxu0
    %v436 = vadd.f32 0.0, %v435
    %v437 = vpop.f32.mrb[0].mxu0
    %438 = vdwg.mxu0
    %v439 = vmul.f32 %v436, 0.35355338
    %v440 = vsel %vm198, %v439, -inf
    %441 = vmax.xlane.f32.xlu0 %v440
    %v442 = vpop.xlane.xlu0 %441
    %v443 = vsub.f32 %v439, %v442
    %v444 = vmul.f32 %v443, 1.442695
    %v445 = vpow.pop %v444
    %v446 = vsel %vm198, %v445, 0.0
    %447 = vadd.xlane.f32.xlu0 %v446
    %v448 = vpop.xlane.xlu0 %447
    %v449 = vrcp.pop %v448
    %v450 = vmul.f32 %v445, %v449
    %451 = vrot.lane.b32.xlu0 %v183, 56
    %v452 = vpop.permute.xlu0 %451
    %v455 = vsel %vm198, %v450, 0
    %457 = vmatprep.subr.mxu0 0.0
    %458 = vmatpush1.msra.mxu0 %v452
    %459 = vmatprep.subr.mxu0 0.0
    %460 = vmatpush1.msra.mxu0 0.0
    %461 = vmatprep.subr.mxu0 0.0
    %462 = vmatpush1.msra.mxu0 0.0
    %463 = vmatprep.subr.mxu0 0.0
    %464 = vmatpush1.msra.mxu0 0.0
    %465 = vmatprep.subr.mxu0 0.0
    %466 = vmatpush1.msra.mxu0 0.0
    %467 = vmatprep.subr.mxu0 0.0
    %468 = vmatpush1.msra.mxu0 0.0
    %469 = vmatprep.subr.mxu0 0.0
    %470 = vmatpush1.msra.mxu0 0.0
    %471 = vmatprep.subr.mxu0 0.0
    %472 = vmatpush1.msra.mxu0 0.0
    %473 = vmatprep.subr.mxu0 0.0
    %474 = vmatpush1.msra.mxu0 0.0
    %475 = vmatprep.subr.mxu0 0.0
    %476 = vmatpush1.msra.mxu0 0.0
    %477 = vmatprep.subr.mxu0 0.0
    %478 = vmatpush1.msra.mxu0 0.0
    %479 = vmatprep.subr.mxu0 0.0
    %480 = vmatpush1.msra.mxu0 0.0
    %481 = vmatprep.subr.mxu0 0.0
    %482 = vmatpush1.msra.mxu0 0.0
    %483 = vmatprep.subr.mxu0 0.0
    %484 = vmatpush1.msra.mxu0 0.0
    %485 = vmatprep.subr.mxu0 0.0
    %486 = vmatpush1.msra.mxu0 0.0
    %487 = vmatprep.subr.mxu0 0.0
    %488 = vmatpush1.msra.mxu0 0.0
    %489 = vmatprep.subr.mxu0 0.0
    %490 = vmatpush1.msra.mxu0 0.0
    %491 = vmatprep.subr.mxu0 0.0
    %492 = vmatpush1.msra.mxu0 0.0
    %493 = vmatprep.subr.mxu0 0.0
    %494 = vmatpush1.msra.mxu0 0.0
    %495 = vmatprep.subr.mxu0 0.0
    %496 = vmatpush1.msra.mxu0 0.0
    %497 = vmatprep.subr.mxu0 0.0
    %498 = vmatpush1.msra.mxu0 0.0
    %499 = vmatprep.subr.mxu0 0.0
    %500 = vmatpush1.msra.mxu0 0.0
    %501 = vmatprep.subr.mxu0 0.0
    %502 = vmatpush1.msra.mxu0 0.0
    %503 = vmatprep.subr.mxu0 0.0
    %504 = vmatpush1.msra.mxu0 0.0
    %505 = vmatprep.subr.mxu0 0.0
    %506 = vmatpush1.msra.mxu0 0.0
    %507 = vmatprep.subr.mxu0 0.0
    %508 = vmatpush1.msra.mxu0 0.0
    %509 = vmatprep.subr.mxu0 0.0
    %510 = vmatpush1.msra.mxu0 0.0
    %511 = vmatprep.subr.mxu0 0.0
    %512 = vmatpush1.msra.mxu0 0.0
    %513 = vmatprep.subr.mxu0 0.0
    %514 = vmatpush1.msra.mxu0 0.0
    %515 = vmatprep.subr.mxu0 0.0
    %516 = vmatpush1.msra.mxu0 0.0
    %517 = vmatprep.subr.mxu0 0.0
    %518 = vmatpush1.msra.mxu0 0.0
    %519 = vmatprep.subr.mxu0 0.0
    %520 = vmatpush1.msra.mxu0 0.0
    %521 = vmatprep.mubr.f32.mxu0 0.0
    %522 = vmatmul.mubr.f32.gmra.mrb[0].mxu0 %v455
    %v523 = vpop.f32.mrb[0].mxu0
    %v524 = vadd.f32 0.0, %v523
    %v525 = vpop.f32.mrb[0].mxu0
    %526 = vdwg.mxu0
    %v528 = vsel %vm198, %v524, 0
    %530 = vmatprep.subr.mxu0 0.0
    %531 = vmatpush1.msra.mxu0 %v192
    %532 = vmatprep.subr.mxu0 0.0
    %533 = vmatpush1.msra.mxu0 0.0
    %534 = vmatprep.subr.mxu0 0.0
    %535 = vmatpush1.msra.mxu0 0.0
    %536 = vmatprep.subr.mxu0 0.0
    %537 = vmatpush1.msra.mxu0 0.0
    %538 = vmatprep.subr.mxu0 0.0
    %539 = vmatpush1.msra.mxu0 0.0
    %540 = vmatprep.subr.mxu0 0.0
    %541 = vmatpush1.msra.mxu0 0.0
    %542 = vmatprep.subr.mxu0 0.0
    %543 = vmatpush1.msra.mxu0 0.0
    %544 = vmatprep.subr.mxu0 0.0
    %545 = vmatpush1.msra.mxu0 0.0
    %546 = vmatprep.subr.mxu0 0.0
    %547 = vmatpush1.msra.mxu0 0.0
    %548 = vmatprep.subr.mxu0 0.0
    %549 = vmatpush1.msra.mxu0 0.0
    %550 = vmatprep.subr.mxu0 0.0
    %551 = vmatpush1.msra.mxu0 0.0
    %552 = vmatprep.subr.mxu0 0.0
    %553 = vmatpush1.msra.mxu0 0.0
    %554 = vmatprep.subr.mxu0 0.0
    %555 = vmatpush1.msra.mxu0 0.0
    %556 = vmatprep.subr.mxu0 0.0
    %557 = vmatpush1.msra.mxu0 0.0
    %558 = vmatprep.subr.mxu0 0.0
    %559 = vmatpush1.msra.mxu0 0.0
    %560 = vmatprep.subr.mxu0 0.0
    %561 = vmatpush1.msra.mxu0 0.0
    %562 = vmatprep.subr.mxu0 0.0
    %563 = vmatpush1.msra.mxu0 0.0
    %564 = vmatprep.subr.mxu0 0.0
    %565 = vmatpush1.msra.mxu0 0.0
    %566 = vmatprep.subr.mxu0 0.0
    %567 = vmatpush1.msra.mxu0 0.0
    %568 = vmatprep.subr.mxu0 0.0
    %569 = vmatpush1.msra.mxu0 0.0
    %570 = vmatprep.subr.mxu0 0.0
    %571 = vmatpush1.msra.mxu0 0.0
    %572 = vmatprep.subr.mxu0 0.0
    %573 = vmatpush1.msra.mxu0 0.0
    %574 = vmatprep.subr.mxu0 0.0
    %575 = vmatpush1.msra.mxu0 0.0
    %576 = vmatprep.subr.mxu0 0.0
    %577 = vmatpush1.msra.mxu0 0.0
    %578 = vmatprep.subr.mxu0 0.0
    %579 = vmatpush1.msra.mxu0 0.0
    %580 = vmatprep.subr.mxu0 0.0
    %581 = vmatpush1.msra.mxu0 0.0
    %582 = vmatprep.subr.mxu0 0.0
    %583 = vmatpush1.msra.mxu0 0.0
    %584 = vmatprep.subr.mxu0 0.0
    %585 = vmatpush1.msra.mxu0 0.0
    %586 = vmatprep.subr.mxu0 0.0
    %587 = vmatpush1.msra.mxu0 0.0
    %588 = vmatprep.subr.mxu0 0.0
    %589 = vmatpush1.msra.mxu0 0.0
    %590 = vmatprep.subr.mxu0 0.0
    %591 = vmatpush1.msra.mxu0 0.0
    %592 = vmatprep.subr.mxu0 0.0
    %593 = vmatpush1.msra.mxu0 0.0
    %594 = vmatprep.mubr.f32.mxu0 0.0
    %595 = vmatmul.mubr.f32.gmra.mrb[0].mxu0 %v528
    %v596 = vpop.f32.mrb[0].mxu0
    %v597 = vadd.f32 0.0, %v596
    %v598 = vpop.f32.mrb[0].mxu0
    %599 = vdwg.mxu0
    %v601 = vsel %vm198, %v358, 0
    %603 = vmatprep.subr.mxu0 0.0
    %604 = vmatpush1.msra.mxu0 %v191
    %605 = vmatprep.subr.mxu0 0.0
    %606 = vmatpush1.msra.mxu0 0.0
    %607 = vmatprep.subr.mxu0 0.0
    %608 = vmatpush1.msra.mxu0 0.0
    %609 = vmatprep.subr.mxu0 0.0
    %610 = vmatpush1.msra.mxu0 0.0
    %611 = vmatprep.subr.mxu0 0.0
    %612 = vmatpush1.msra.mxu0 0.0
    %613 = vmatprep.subr.mxu0 0.0
    %614 = vmatpush1.msra.mxu0 0.0
    %615 = vmatprep.subr.mxu0 0.0
    %616 = vmatpush1.msra.mxu0 0.0
    %617 = vmatprep.subr.mxu0 0.0
    %618 = vmatpush1.msra.mxu0 0.0
    %619 = vmatprep.subr.mxu0 0.0
    %620 = vmatpush1.msra.mxu0 0.0
    %621 = vmatprep.subr.mxu0 0.0
    %622 = vmatpush1.msra.mxu0 0.0
    %623 = vmatprep.subr.mxu0 0.0
    %624 = vmatpush1.msra.mxu0 0.0
    %625 = vmatprep.subr.mxu0 0.0
    %626 = vmatpush1.msra.mxu0 0.0
    %627 = vmatprep.subr.mxu0 0.0
    %628 = vmatpush1.msra.mxu0 0.0
    %629 = vmatprep.subr.mxu0 0.0
    %630 = vmatpush1.msra.mxu0 0.0
    %631 = vmatprep.subr.mxu0 0.0
    %632 = vmatpush1.msra.mxu0 0.0
    %633 = vmatprep.subr.mxu0 0.0
    %634 = vmatpush1.msra.mxu0 0.0
    %635 = vmatprep.subr.mxu0 0.0
    %636 = vmatpush1.msra.mxu0 0.0
    %637 = vmatprep.subr.mxu0 0.0
    %638 = vmatpush1.msra.mxu0 0.0
    %639 = vmatprep.subr.mxu0 0.0
    %640 = vmatpush1.msra.mxu0 0.0
    %641 = vmatprep.subr.mxu0 0.0
    %642 = vmatpush1.msra.mxu0 0.0
    %643 = vmatprep.subr.mxu0 0.0
    %644 = vmatpush1.msra.mxu0 0.0
    %645 = vmatprep.subr.mxu0 0.0
    %646 = vmatpush1.msra.mxu0 0.0
    %647 = vmatprep.subr.mxu0 0.0
    %648 = vmatpush1.msra.mxu0 0.0
    %649 = vmatprep.subr.mxu0 0.0
    %650 = vmatpush1.msra.mxu0 0.0
    %651 = vmatprep.subr.mxu0 0.0
    %652 = vmatpush1.msra.mxu0 0.0
    %653 = vmatprep.subr.mxu0 0.0
    %654 = vmatpush1.msra.mxu0 0.0
    %655 = vmatprep.subr.mxu0 0.0
    %656 = vmatpush1.msra.mxu0 0.0
    %657 = vmatprep.subr.mxu0 0.0
    %658 = vmatpush1.msra.mxu0 0.0
    %659 = vmatprep.subr.mxu0 0.0
    %660 = vmatpush1.msra.mxu0 0.0
    %661 = vmatprep.subr.mxu0 0.0
    %662 = vmatpush1.msra.mxu0 0.0
    %663 = vmatprep.subr.mxu0 0.0
    %664 = vmatpush1.msra.mxu0 0.0
    %665 = vmatprep.subr.mxu0 0.0
    %666 = vmatpush1.msra.mxu0 0.0
    %667 = vmatprep.mubr.f32.mxu0 0.0
    %668 = vmatmul.mubr.f32.gmra.mrb[0].mxu0 %v601
    %v669 = vpop.f32.mrb[0].mxu0
    %v670 = vadd.f32 %v597, %v669
    %v671 = vpop.f32.mrb[0].mxu0
    %672 = vdwg.mxu0
    %673 = vrot.lane.b32.xlu0 %v183, 112
    %v674 = vpop.permute.xlu0 %673
    %675 = vrot.lane.b32.xlu0 %v183, 80
    %v676 = vpop.permute.xlu0 %675
    %v677 = vsel %vm198, %v674, 0
    %v679 = vsel %vm198, %v676, 0
    %681 = vmatprep.subr.mxu0 0.0
    %682 = vmatpush1.xpose.msra.mxu0 %v679
    %683 = vmatprep.subr.mxu0 0.0
    %684 = vmatpush1.xpose.msra.mxu0 0.0
    %685 = vmatprep.subr.mxu0 0.0
    %686 = vmatpush1.xpose.msra.mxu0 0.0
    %687 = vmatprep.subr.mxu0 0.0
    %688 = vmatpush1.xpose.msra.mxu0 0.0
    %689 = vmatprep.subr.mxu0 0.0
    %690 = vmatpush1.xpose.msra.mxu0 0.0
    %691 = vmatprep.subr.mxu0 0.0
    %692 = vmatpush1.xpose.msra.mxu0 0.0
    %693 = vmatprep.subr.mxu0 0.0
    %694 = vmatpush1.xpose.msra.mxu0 0.0
    %695 = vmatprep.subr.mxu0 0.0
    %696 = vmatpush1.xpose.msra.mxu0 0.0
    %697 = vmatprep.subr.mxu0 0.0
    %698 = vmatpush1.xpose.msra.mxu0 0.0
    %699 = vmatprep.subr.mxu0 0.0
    %700 = vmatpush1.xpose.msra.mxu0 0.0
    %701 = vmatprep.subr.mxu0 0.0
    %702 = vmatpush1.xpose.msra.mxu0 0.0
    %703 = vmatprep.subr.mxu0 0.0
    %704 = vmatpush1.xpose.msra.mxu0 0.0
    %705 = vmatprep.subr.mxu0 0.0
    %706 = vmatpush1.xpose.msra.mxu0 0.0
    %707 = vmatprep.subr.mxu0 0.0
    %708 = vmatpush1.xpose.msra.mxu0 0.0
    %709 = vmatprep.subr.mxu0 0.0
    %710 = vmatpush1.xpose.msra.mxu0 0.0
    %711 = vmatprep.subr.mxu0 0.0
    %712 = vmatpush1.xpose.msra.mxu0 0.0
    %713 = vmatprep.subr.mxu0 0.0
    %714 = vmatpush1.xpose.msra.mxu0 0.0
    %715 = vmatprep.subr.mxu0 0.0
    %716 = vmatpush1.xpose.msra.mxu0 0.0
    %717 = vmatprep.subr.mxu0 0.0
    %718 = vmatpush1.xpose.msra.mxu0 0.0
    %719 = vmatprep.subr.mxu0 0.0
    %720 = vmatpush1.xpose.msra.mxu0 0.0
    %721 = vmatprep.subr.mxu0 0.0
    %722 = vmatpush1.xpose.msra.mxu0 0.0
    %723 = vmatprep.subr.mxu0 0.0
    %724 = vmatpush1.xpose.msra.mxu0 0.0
    %725 = vmatprep.subr.mxu0 0.0
    %726 = vmatpush1.xpose.msra.mxu0 0.0
    %727 = vmatprep.subr.mxu0 0.0
    %728 = vmatpush1.xpose.msra.mxu0 0.0
    %729 = vmatprep.subr.mxu0 0.0
    %730 = vmatpush1.xpose.msra.mxu0 0.0
    %731 = vmatprep.subr.mxu0 0.0
    %732 = vmatpush1.xpose.msra.mxu0 0.0
    %733 = vmatprep.subr.mxu0 0.0
    %734 = vmatpush1.xpose.msra.mxu0 0.0
    %735 = vmatprep.subr.mxu0 0.0
    %736 = vmatpush1.xpose.msra.mxu0 0.0
    %737 = vmatprep.subr.mxu0 0.0
    %738 = vmatpush1.xpose.msra.mxu0 0.0
    %739 = vmatprep.subr.mxu0 0.0
    %740 = vmatpush1.xpose.msra.mxu0 0.0
    %741 = vmatprep.subr.mxu0 0.0
    %742 = vmatpush1.xpose.msra.mxu0 0.0
    %743 = vmatprep.subr.mxu0 0.0
    %744 = vmatpush1.xpose.msra.mxu0 0.0
    %745 = vmatprep.mubr.f32.mxu0 0.0
    %746 = vmatmul.mubr.f32.gmra.mrb[0].mxu0 %v677
    %v747 = vpop.f32.mrb[0].mxu0
    %v748 = vadd.f32 0.0, %v747
    %v749 = vpop.f32.mrb[0].mxu0
    %750 = vdwg.mxu0
    %v751 = vmul.f32 %v748, 0.35355338
    %v752 = vsel %vm198, %v751, -inf
    %753 = vmax.xlane.f32.xlu0 %v752
    %v754 = vpop.xlane.xlu0 %753
    %v755 = vsub.f32 %v751, %v754
    %v756 = vmul.f32 %v755, 1.442695
    %v757 = vpow.pop %v756
    %v758 = vsel %vm198, %v757, 0.0
    %759 = vadd.xlane.f32.xlu0 %v758
    %v760 = vpop.xlane.xlu0 %759
    %v761 = vrcp.pop %v760
    %v762 = vmul.f32 %v757, %v761
    %763 = vrot.lane.b32.xlu0 %v183, 48
    %v764 = vpop.permute.xlu0 %763
    %v767 = vsel %vm198, %v762, 0
    %769 = vmatprep.subr.mxu0 0.0
    %770 = vmatpush1.msra.mxu0 %v764
    %771 = vmatprep.subr.mxu0 0.0
    %772 = vmatpush1.msra.mxu0 0.0
    %773 = vmatprep.subr.mxu0 0.0
    %774 = vmatpush1.msra.mxu0 0.0
    %775 = vmatprep.subr.mxu0 0.0
    %776 = vmatpush1.msra.mxu0 0.0
    %777 = vmatprep.subr.mxu0 0.0
    %778 = vmatpush1.msra.mxu0 0.0
    %779 = vmatprep.subr.mxu0 0.0
    %780 = vmatpush1.msra.mxu0 0.0
    %781 = vmatprep.subr.mxu0 0.0
    %782 = vmatpush1.msra.mxu0 0.0
    %783 = vmatprep.subr.mxu0 0.0
    %784 = vmatpush1.msra.mxu0 0.0
    %785 = vmatprep.subr.mxu0 0.0
    %786 = vmatpush1.msra.mxu0 0.0
    %787 = vmatprep.subr.mxu0 0.0
    %788 = vmatpush1.msra.mxu0 0.0
    %789 = vmatprep.subr.mxu0 0.0
    %790 = vmatpush1.msra.mxu0 0.0
    %791 = vmatprep.subr.mxu0 0.0
    %792 = vmatpush1.msra.mxu0 0.0
    %793 = vmatprep.subr.mxu0 0.0
    %794 = vmatpush1.msra.mxu0 0.0
    %795 = vmatprep.subr.mxu0 0.0
    %796 = vmatpush1.msra.mxu0 0.0
    %797 = vmatprep.subr.mxu0 0.0
    %798 = vmatpush1.msra.mxu0 0.0
    %799 = vmatprep.subr.mxu0 0.0
    %800 = vmatpush1.msra.mxu0 0.0
    %801 = vmatprep.subr.mxu0 0.0
    %802 = vmatpush1.msra.mxu0 0.0
    %803 = vmatprep.subr.mxu0 0.0
    %804 = vmatpush1.msra.mxu0 0.0
    %805 = vmatprep.subr.mxu0 0.0
    %806 = vmatpush1.msra.mxu0 0.0
    %807 = vmatprep.subr.mxu0 0.0
    %808 = vmatpush1.msra.mxu0 0.0
    %809 = vmatprep.subr.mxu0 0.0
    %810 = vmatpush1.msra.mxu0 0.0
    %811 = vmatprep.subr.mxu0 0.0
    %812 = vmatpush1.msra.mxu0 0.0
    %813 = vmatprep.subr.mxu0 0.0
    %814 = vmatpush1.msra.mxu0 0.0
    %815 = vmatprep.subr.mxu0 0.0
    %816 = vmatpush1.msra.mxu0 0.0
    %817 = vmatprep.subr.mxu0 0.0
    %818 = vmatpush1.msra.mxu0 0.0
    %819 = vmatprep.subr.mxu0 0.0
    %820 = vmatpush1.msra.mxu0 0.0
    %821 = vmatprep.subr.mxu0 0.0
    %822 = vmatpush1.msra.mxu0 0.0
    %823 = vmatprep.subr.mxu0 0.0
    %824 = vmatpush1.msra.mxu0 0.0
    %825 = vmatprep.subr.mxu0 0.0
    %826 = vmatpush1.msra.mxu0 0.0
    %827 = vmatprep.subr.mxu0 0.0
    %828 = vmatpush1.msra.mxu0 0.0
    %829 = vmatprep.subr.mxu0 0.0
    %830 = vmatpush1.msra.mxu0 0.0
    %831 = vmatprep.subr.mxu0 0.0
    %832 = vmatpush1.msra.mxu0 0.0
    %833 = vmatprep.mubr.f32.mxu0 0.0
    %834 = vmatmul.mubr.f32.gmra.mrb[0].mxu0 %v767
    %v835 = vpop.f32.mrb[0].mxu0
    %v836 = vadd.f32 0.0, %v835
    %v837 = vpop.f32.mrb[0].mxu0
    %838 = vdwg.mxu0
    %v840 = vsel %vm198, %v836, 0
    %842 = vmatprep.subr.mxu0 0.0
    %843 = vmatpush1.msra.mxu0 %v193
    %844 = vmatprep.subr.mxu0 0.0
    %845 = vmatpush1.msra.mxu0 0.0
    %846 = vmatprep.subr.mxu0 0.0
    %847 = vmatpush1.msra.mxu0 0.0
    %848 = vmatprep.subr.mxu0 0.0
    %849 = vmatpush1.msra.mxu0 0.0
    %850 = vmatprep.subr.mxu0 0.0
    %851 = vmatpush1.msra.mxu0 0.0
    %852 = vmatprep.subr.mxu0 0.0
    %853 = vmatpush1.msra.mxu0 0.0
    %854 = vmatprep.subr.mxu0 0.0
    %855 = vmatpush1.msra.mxu0 0.0
    %856 = vmatprep.subr.mxu0 0.0
    %857 = vmatpush1.msra.mxu0 0.0
    %858 = vmatprep.subr.mxu0 0.0
    %859 = vmatpush1.msra.mxu0 0.0
    %860 = vmatprep.subr.mxu0 0.0
    %861 = vmatpush1.msra.mxu0 0.0
    %862 = vmatprep.subr.mxu0 0.0
    %863 = vmatpush1.msra.mxu0 0.0
    %864 = vmatprep.subr.mxu0 0.0
    %865 = vmatpush1.msra.mxu0 0.0
    %866 = vmatprep.subr.mxu0 0.0
    %867 = vmatpush1.msra.mxu0 0.0
    %868 = vmatprep.subr.mxu0 0.0
    %869 = vmatpush1.msra.mxu0 0.0
    %870 = vmatprep.subr.mxu0 0.0
    %871 = vmatpush1.msra.mxu0 0.0
    %872 = vmatprep.subr.mxu0 0.0
    %873 = vmatpush1.msra.mxu0 0.0
    %874 = vmatprep.subr.mxu0 0.0
    %875 = vmatpush1.msra.mxu0 0.0
    %876 = vmatprep.subr.mxu0 0.0
    %877 = vmatpush1.msra.mxu0 0.0
    %878 = vmatprep.subr.mxu0 0.0
    %879 = vmatpush1.msra.mxu0 0.0
    %880 = vmatprep.subr.mxu0 0.0
    %881 = vmatpush1.msra.mxu0 0.0
    %882 = vmatprep.subr.mxu0 0.0
    %883 = vmatpush1.msra.mxu0 0.0
    %884 = vmatprep.subr.mxu0 0.0
    %885 = vmatpush1.msra.mxu0 0.0
    %886 = vmatprep.subr.mxu0 0.0
    %887 = vmatpush1.msra.mxu0 0.0
    %888 = vmatprep.subr.mxu0 0.0
    %889 = vmatpush1.msra.mxu0 0.0
    %890 = vmatprep.subr.mxu0 0.0
    %891 = vmatpush1.msra.mxu0 0.0
    %892 = vmatprep.subr.mxu0 0.0
    %893 = vmatpush1.msra.mxu0 0.0
    %894 = vmatprep.subr.mxu0 0.0
    %895 = vmatpush1.msra.mxu0 0.0
    %896 = vmatprep.subr.mxu0 0.0
    %897 = vmatpush1.msra.mxu0 0.0
    %898 = vmatprep.subr.mxu0 0.0
    %899 = vmatpush1.msra.mxu0 0.0
    %900 = vmatprep.subr.mxu0 0.0
    %901 = vmatpush1.msra.mxu0 0.0
    %902 = vmatprep.subr.mxu0 0.0
    %903 = vmatpush1.msra.mxu0 0.0
    %904 = vmatprep.subr.mxu0 0.0
    %905 = vmatpush1.msra.mxu0 0.0
    %906 = vmatprep.mubr.f32.mxu0 0.0
    %907 = vmatmul.mubr.f32.gmra.mrb[0].mxu0 %v840
    %v908 = vpop.f32.mrb[0].mxu0
    %v909 = vadd.f32 0.0, %v908
    %v910 = vpop.f32.mrb[0].mxu0
    %911 = vdwg.mxu0
    %v912 = vadd.f32 %v670, %v909
    %913 = vrot.lane.b32.xlu0 %v183, 104
    %v914 = vpop.permute.xlu0 %913
    %915 = vrot.lane.b32.xlu0 %v183, 72
    %v916 = vpop.permute.xlu0 %915
    %v917 = vsel %vm198, %v914, 0
    %v919 = vsel %vm198, %v916, 0
    %921 = vmatprep.subr.mxu0 0.0
    %922 = vmatpush1.xpose.msra.mxu0 %v919
    %923 = vmatprep.subr.mxu0 0.0
    %924 = vmatpush1.xpose.msra.mxu0 0.0
    %925 = vmatprep.subr.mxu0 0.0
    %926 = vmatpush1.xpose.msra.mxu0 0.0
    %927 = vmatprep.subr.mxu0 0.0
    %928 = vmatpush1.xpose.msra.mxu0 0.0
    %929 = vmatprep.subr.mxu0 0.0
    %930 = vmatpush1.xpose.msra.mxu0 0.0
    %931 = vmatprep.subr.mxu0 0.0
    %932 = vmatpush1.xpose.msra.mxu0 0.0
    %933 = vmatprep.subr.mxu0 0.0
    %934 = vmatpush1.xpose.msra.mxu0 0.0
    %935 = vmatprep.subr.mxu0 0.0
    %936 = vmatpush1.xpose.msra.mxu0 0.0
    %937 = vmatprep.subr.mxu0 0.0
    %938 = vmatpush1.xpose.msra.mxu0 0.0
    %939 = vmatprep.subr.mxu0 0.0
    %940 = vmatpush1.xpose.msra.mxu0 0.0
    %941 = vmatprep.subr.mxu0 0.0
    %942 = vmatpush1.xpose.msra.mxu0 0.0
    %943 = vmatprep.subr.mxu0 0.0
    %944 = vmatpush1.xpose.msra.mxu0 0.0
    %945 = vmatprep.subr.mxu0 0.0
    %946 = vmatpush1.xpose.msra.mxu0 0.0
    %947 = vmatprep.subr.mxu0 0.0
    %948 = vmatpush1.xpose.msra.mxu0 0.0
    %949 = vmatprep.subr.mxu0 0.0
    %950 = vmatpush1.xpose.msra.mxu0 0.0
    %951 = vmatprep.subr.mxu0 0.0
    %952 = vmatpush1.xpose.msra.mxu0 0.0
    %953 = vmatprep.subr.mxu0 0.0
    %954 = vmatpush1.xpose.msra.mxu0 0.0
    %955 = vmatprep.subr.mxu0 0.0
    %956 = vmatpush1.xpose.msra.mxu0 0.0
    %957 = vmatprep.subr.mxu0 0.0
    %958 = vmatpush1.xpose.msra.mxu0 0.0
    %959 = vmatprep.subr.mxu0 0.0
    %960 = vmatpush1.xpose.msra.mxu0 0.0
    %961 = vmatprep.subr.mxu0 0.0
    %962 = vmatpush1.xpose.msra.mxu0 0.0
    %963 = vmatprep.subr.mxu0 0.0
    %964 = vmatpush1.xpose.msra.mxu0 0.0
    %965 = vmatprep.subr.mxu0 0.0
    %966 = vmatpush1.xpose.msra.mxu0 0.0
    %967 = vmatprep.subr.mxu0 0.0
    %968 = vmatpush1.xpose.msra.mxu0 0.0
    %969 = vmatprep.subr.mxu0 0.0
    %970 = vmatpush1.xpose.msra.mxu0 0.0
    %971 = vmatprep.subr.mxu0 0.0
    %972 = vmatpush1.xpose.msra.mxu0 0.0
    %973 = vmatprep.subr.mxu0 0.0
    %974 = vmatpush1.xpose.msra.mxu0 0.0
    %975 = vmatprep.subr.mxu0 0.0
    %976 = vmatpush1.xpose.msra.mxu0 0.0
    %977 = vmatprep.subr.mxu0 0.0
    %978 = vmatpush1.xpose.msra.mxu0 0.0
    %979 = vmatprep.subr.mxu0 0.0
    %980 = vmatpush1.xpose.msra.mxu0 0.0
    %981 = vmatprep.subr.mxu0 0.0
    %982 = vmatpush1.xpose.msra.mxu0 0.0
    %983 = vmatprep.subr.mxu0 0.0
    %984 = vmatpush1.xpose.msra.mxu0 0.0
    %985 = vmatprep.mubr.f32.mxu0 0.0
    %986 = vmatmul.mubr.f32.gmra.mrb[0].mxu0 %v917
    %v987 = vpop.f32.mrb[0].mxu0
    %v988 = vadd.f32 0.0, %v987
    %v989 = vpop.f32.mrb[0].mxu0
    %990 = vdwg.mxu0
    %v991 = vmul.f32 %v988, 0.35355338
    %v992 = vsel %vm198, %v991, -inf
    %993 = vmax.xlane.f32.xlu0 %v992
    %v994 = vpop.xlane.xlu0 %993
    %v995 = vsub.f32 %v991, %v994
    %v996 = vmul.f32 %v995, 1.442695
    %v997 = vpow.pop %v996
    %v998 = vsel %vm198, %v997, 0.0
    %999 = vadd.xlane.f32.xlu0 %v998
    %v1000 = vpop.xlane.xlu0 %999
    %v1001 = vrcp.pop %v1000
    %v1002 = vmul.f32 %v997, %v1001
    %1003 = vrot.lane.b32.xlu0 %v183, 40
    %v1004 = vpop.permute.xlu0 %1003
    %v1007 = vsel %vm198, %v1002, 0
    %1009 = vmatprep.subr.mxu0 0.0
    %1010 = vmatpush1.msra.mxu0 %v1004
    %1011 = vmatprep.subr.mxu0 0.0
    %1012 = vmatpush1.msra.mxu0 0.0
    %1013 = vmatprep.subr.mxu0 0.0
    %1014 = vmatpush1.msra.mxu0 0.0
    %1015 = vmatprep.subr.mxu0 0.0
    %1016 = vmatpush1.msra.mxu0 0.0
    %1017 = vmatprep.subr.mxu0 0.0
    %1018 = vmatpush1.msra.mxu0 0.0
    %1019 = vmatprep.subr.mxu0 0.0
    %1020 = vmatpush1.msra.mxu0 0.0
    %1021 = vmatprep.subr.mxu0 0.0
    %1022 = vmatpush1.msra.mxu0 0.0
    %1023 = vmatprep.subr.mxu0 0.0
    %1024 = vmatpush1.msra.mxu0 0.0
    %1025 = vmatprep.subr.mxu0 0.0
    %1026 = vmatpush1.msra.mxu0 0.0
    %1027 = vmatprep.subr.mxu0 0.0
    %1028 = vmatpush1.msra.mxu0 0.0
    %1029 = vmatprep.subr.mxu0 0.0
    %1030 = vmatpush1.msra.mxu0 0.0
    %1031 = vmatprep.subr.mxu0 0.0
    %1032 = vmatpush1.msra.mxu0 0.0
    %1033 = vmatprep.subr.mxu0 0.0
    %1034 = vmatpush1.msra.mxu0 0.0
    %1035 = vmatprep.subr.mxu0 0.0
    %1036 = vmatpush1.msra.mxu0 0.0
    %1037 = vmatprep.subr.mxu0 0.0
    %1038 = vmatpush1.msra.mxu0 0.0
    %1039 = vmatprep.subr.mxu0 0.0
    %1040 = vmatpush1.msra.mxu0 0.0
    %1041 = vmatprep.subr.mxu0 0.0
    %1042 = vmatpush1.msra.mxu0 0.0
    %1043 = vmatprep.subr.mxu0 0.0
    %1044 = vmatpush1.msra.mxu0 0.0
    %1045 = vmatprep.subr.mxu0 0.0
    %1046 = vmatpush1.msra.mxu0 0.0
    %1047 = vmatprep.subr.mxu0 0.0
    %1048 = vmatpush1.msra.mxu0 0.0
    %1049 = vmatprep.subr.mxu0 0.0
    %1050 = vmatpush1.msra.mxu0 0.0
    %1051 = vmatprep.subr.mxu0 0.0
    %1052 = vmatpush1.msra.mxu0 0.0
    %1053 = vmatprep.subr.mxu0 0.0
    %1054 = vmatpush1.msra.mxu0 0.0
    %1055 = vmatprep.subr.mxu0 0.0
    %1056 = vmatpush1.msra.mxu0 0.0
    %1057 = vmatprep.subr.mxu0 0.0
    %1058 = vmatpush1.msra.mxu0 0.0
    %1059 = vmatprep.subr.mxu0 0.0
    %1060 = vmatpush1.msra.mxu0 0.0
    %1061 = vmatprep.subr.mxu0 0.0
    %1062 = vmatpush1.msra.mxu0 0.0
    %1063 = vmatprep.subr.mxu0 0.0
    %1064 = vmatpush1.msra.mxu0 0.0
    %1065 = vmatprep.subr.mxu0 0.0
    %1066 = vmatpush1.msra.mxu0 0.0
    %1067 = vmatprep.subr.mxu0 0.0
    %1068 = vmatpush1.msra.mxu0 0.0
    %1069 = vmatprep.subr.mxu0 0.0
    %1070 = vmatpush1.msra.mxu0 0.0
    %1071 = vmatprep.subr.mxu0 0.0
    %1072 = vmatpush1.msra.mxu0 0.0
    %1073 = vmatprep.mubr.f32.mxu0 0.0
    %1074 = vmatmul.mubr.f32.gmra.mrb[0].mxu0 %v1007
    %v1075 = vpop.f32.mrb[0].mxu0
    %v1076 = vadd.f32 0.0, %v1075
    %v1077 = vpop.f32.mrb[0].mxu0
    %1078 = vdwg.mxu0
    %v1080 = vsel %vm198, %v1076, 0
    %1082 = vmatprep.subr.mxu0 0.0
    %1083 = vmatpush1.msra.mxu0 %v194
    %1084 = vmatprep.subr.mxu0 0.0
    %1085 = vmatpush1.msra.mxu0 0.0
    %1086 = vmatprep.subr.mxu0 0.0
    %1087 = vmatpush1.msra.mxu0 0.0
    %1088 = vmatprep.subr.mxu0 0.0
    %1089 = vmatpush1.msra.mxu0 0.0
    %1090 = vmatprep.subr.mxu0 0.0
    %1091 = vmatpush1.msra.mxu0 0.0
    %1092 = vmatprep.subr.mxu0 0.0
    %1093 = vmatpush1.msra.mxu0 0.0
    %1094 = vmatprep.subr.mxu0 0.0
    %1095 = vmatpush1.msra.mxu0 0.0
    %1096 = vmatprep.subr.mxu0 0.0
    %1097 = vmatpush1.msra.mxu0 0.0
    %1098 = vmatprep.subr.mxu0 0.0
    %1099 = vmatpush1.msra.mxu0 0.0
    %1100 = vmatprep.subr.mxu0 0.0
    %1101 = vmatpush1.msra.mxu0 0.0
    %1102 = vmatprep.subr.mxu0 0.0
    %1103 = vmatpush1.msra.mxu0 0.0
    %1104 = vmatprep.subr.mxu0 0.0
    %1105 = vmatpush1.msra.mxu0 0.0
    %1106 = vmatprep.subr.mxu0 0.0
    %1107 = vmatpush1.msra.mxu0 0.0
    %1108 = vmatprep.subr.mxu0 0.0
    %1109 = vmatpush1.msra.mxu0 0.0
    %1110 = vmatprep.subr.mxu0 0.0
    %1111 = vmatpush1.msra.mxu0 0.0
    %1112 = vmatprep.subr.mxu0 0.0
    %1113 = vmatpush1.msra.mxu0 0.0
    %1114 = vmatprep.subr.mxu0 0.0
    %1115 = vmatpush1.msra.mxu0 0.0
    %1116 = vmatprep.subr.mxu0 0.0
    %1117 = vmatpush1.msra.mxu0 0.0
    %1118 = vmatprep.subr.mxu0 0.0
    %1119 = vmatpush1.msra.mxu0 0.0
    %1120 = vmatprep.subr.mxu0 0.0
    %1121 = vmatpush1.msra.mxu0 0.0
    %1122 = vmatprep.subr.mxu0 0.0
    %1123 = vmatpush1.msra.mxu0 0.0
    %1124 = vmatprep.subr.mxu0 0.0
    %1125 = vmatpush1.msra.mxu0 0.0
    %1126 = vmatprep.subr.mxu0 0.0
    %1127 = vmatpush1.msra.mxu0 0.0
    %1128 = vmatprep.subr.mxu0 0.0
    %1129 = vmatpush1.msra.mxu0 0.0
    %1130 = vmatprep.subr.mxu0 0.0
    %1131 = vmatpush1.msra.mxu0 0.0
    %1132 = vmatprep.subr.mxu0 0.0
    %1133 = vmatpush1.msra.mxu0 0.0
    %1134 = vmatprep.subr.mxu0 0.0
    %1135 = vmatpush1.msra.mxu0 0.0
    %1136 = vmatprep.subr.mxu0 0.0
    %1137 = vmatpush1.msra.mxu0 0.0
    %1138 = vmatprep.subr.mxu0 0.0
    %1139 = vmatpush1.msra.mxu0 0.0
    %1140 = vmatprep.subr.mxu0 0.0
    %1141 = vmatpush1.msra.mxu0 0.0
    %1142 = vmatprep.subr.mxu0 0.0
    %1143 = vmatpush1.msra.mxu0 0.0
    %1144 = vmatprep.subr.mxu0 0.0
    %1145 = vmatpush1.msra.mxu0 0.0
    %1146 = vmatprep.mubr.f32.mxu0 0.0
    %1147 = vmatmul.mubr.f32.gmra.mrb[0].mxu0 %v1080
    %v1148 = vpop.f32.mrb[0].mxu0
    %v1149 = vadd.f32 0.0, %v1148
    %v1150 = vpop.f32.mrb[0].mxu0
    %1151 = vdwg.mxu0
    %v1152 = vadd.f32 %v912, %v1149
    %1154 = vrot.lane.b32.xlu0 %v188, 96
    %v1155 = vpop.permute.xlu0 %1154
    %v1156 = vsel %vm198, %v188, 0
    %v1158 = vsel %vm198, %v1155, 0
    %1160 = vmatprep.subr.mxu0 0.0
    %1161 = vmatpush1.xpose.msra.mxu0 %v1158
    %1162 = vmatprep.subr.mxu0 0.0
    %1163 = vmatpush1.xpose.msra.mxu0 0.0
    %1164 = vmatprep.subr.mxu0 0.0
    %1165 = vmatpush1.xpose.msra.mxu0 0.0
    %1166 = vmatprep.subr.mxu0 0.0
    %1167 = vmatpush1.xpose.msra.mxu0 0.0
    %1168 = vmatprep.subr.mxu0 0.0
    %1169 = vmatpush1.xpose.msra.mxu0 0.0
    %1170 = vmatprep.subr.mxu0 0.0
    %1171 = vmatpush1.xpose.msra.mxu0 0.0
    %1172 = vmatprep.subr.mxu0 0.0
    %1173 = vmatpush1.xpose.msra.mxu0 0.0
    %1174 = vmatprep.subr.mxu0 0.0
    %1175 = vmatpush1.xpose.msra.mxu0 0.0
    %1176 = vmatprep.subr.mxu0 0.0
    %1177 = vmatpush1.xpose.msra.mxu0 0.0
    %1178 = vmatprep.subr.mxu0 0.0
    %1179 = vmatpush1.xpose.msra.mxu0 0.0
    %1180 = vmatprep.subr.mxu0 0.0
    %1181 = vmatpush1.xpose.msra.mxu0 0.0
    %1182 = vmatprep.subr.mxu0 0.0
    %1183 = vmatpush1.xpose.msra.mxu0 0.0
    %1184 = vmatprep.subr.mxu0 0.0
    %1185 = vmatpush1.xpose.msra.mxu0 0.0
    %1186 = vmatprep.subr.mxu0 0.0
    %1187 = vmatpush1.xpose.msra.mxu0 0.0
    %1188 = vmatprep.subr.mxu0 0.0
    %1189 = vmatpush1.xpose.msra.mxu0 0.0
    %1190 = vmatprep.subr.mxu0 0.0
    %1191 = vmatpush1.xpose.msra.mxu0 0.0
    %1192 = vmatprep.subr.mxu0 0.0
    %1193 = vmatpush1.xpose.msra.mxu0 0.0
    %1194 = vmatprep.subr.mxu0 0.0
    %1195 = vmatpush1.xpose.msra.mxu0 0.0
    %1196 = vmatprep.subr.mxu0 0.0
    %1197 = vmatpush1.xpose.msra.mxu0 0.0
    %1198 = vmatprep.subr.mxu0 0.0
    %1199 = vmatpush1.xpose.msra.mxu0 0.0
    %1200 = vmatprep.subr.mxu0 0.0
    %1201 = vmatpush1.xpose.msra.mxu0 0.0
    %1202 = vmatprep.subr.mxu0 0.0
    %1203 = vmatpush1.xpose.msra.mxu0 0.0
    %1204 = vmatprep.subr.mxu0 0.0
    %1205 = vmatpush1.xpose.msra.mxu0 0.0
    %1206 = vmatprep.subr.mxu0 0.0
    %1207 = vmatpush1.xpose.msra.mxu0 0.0
    %1208 = vmatprep.subr.mxu0 0.0
    %1209 = vmatpush1.xpose.msra.mxu0 0.0
    %1210 = vmatprep.subr.mxu0 0.0
    %1211 = vmatpush1.xpose.msra.mxu0 0.0
    %1212 = vmatprep.subr.mxu0 0.0
    %1213 = vmatpush1.xpose.msra.mxu0 0.0
    %1214 = vmatprep.subr.mxu0 0.0
    %1215 = vmatpush1.xpose.msra.mxu0 0.0
    %1216 = vmatprep.subr.mxu0 0.0
    %1217 = vmatpush1.xpose.msra.mxu0 0.0
    %1218 = vmatprep.subr.mxu0 0.0
    %1219 = vmatpush1.xpose.msra.mxu0 0.0
    %1220 = vmatprep.subr.mxu0 0.0
    %1221 = vmatpush1.xpose.msra.mxu0 0.0
    %1222 = vmatprep.subr.mxu0 0.0
    %1223 = vmatpush1.xpose.msra.mxu0 0.0
    %1224 = vmatprep.mubr.f32.mxu0 0.0
    %1225 = vmatmul.mubr.f32.gmra.mrb[0].mxu0 %v1156
    %v1226 = vpop.f32.mrb[0].mxu0
    %v1227 = vadd.f32 0.0, %v1226
    %v1228 = vpop.f32.mrb[0].mxu0
    %1229 = vdwg.mxu0
    %v1230 = vmul.f32 %v1227, 0.35355338
    %v1231 = vsel %vm198, %v1230, -inf
    %1232 = vmax.xlane.f32.xlu0 %v1231
    %v1233 = vpop.xlane.xlu0 %1232
    %v1234 = vsub.f32 %v1230, %v1233
    %v1235 = vmul.f32 %v1234, 1.442695
    %v1236 = vpow.pop %v1235
    %v1237 = vsel %vm198, %v1236, 0.0
    %1238 = vadd.xlane.f32.xlu0 %v1237
    %v1239 = vpop.xlane.xlu0 %1238
    %v1240 = vrcp.pop %v1239
    %v1241 = vmul.f32 %v1236, %v1240
    %1242 = vrot.lane.b32.xlu0 %v188, 64
    %v1243 = vpop.permute.xlu0 %1242
    %v1246 = vsel %vm198, %v1241, 0
    %1248 = vmatprep.subr.mxu0 0.0
    %1249 = vmatpush1.msra.mxu0 %v1243
    %1250 = vmatprep.subr.mxu0 0.0
    %1251 = vmatpush1.msra.mxu0 0.0
    %1252 = vmatprep.subr.mxu0 0.0
    %1253 = vmatpush1.msra.mxu0 0.0
    %1254 = vmatprep.subr.mxu0 0.0
    %1255 = vmatpush1.msra.mxu0 0.0
    %1256 = vmatprep.subr.mxu0 0.0
    %1257 = vmatpush1.msra.mxu0 0.0
    %1258 = vmatprep.subr.mxu0 0.0
    %1259 = vmatpush1.msra.mxu0 0.0
    %1260 = vmatprep.subr.mxu0 0.0
    %1261 = vmatpush1.msra.mxu0 0.0
    %1262 = vmatprep.subr.mxu0 0.0
    %1263 = vmatpush1.msra.mxu0 0.0
    %1264 = vmatprep.subr.mxu0 0.0
    %1265 = vmatpush1.msra.mxu0 0.0
    %1266 = vmatprep.subr.mxu0 0.0
    %1267 = vmatpush1.msra.mxu0 0.0
    %1268 = vmatprep.subr.mxu0 0.0
    %1269 = vmatpush1.msra.mxu0 0.0
    %1270 = vmatprep.subr.mxu0 0.0
    %1271 = vmatpush1.msra.mxu0 0.0
    %1272 = vmatprep.subr.mxu0 0.0
    %1273 = vmatpush1.msra.mxu0 0.0
    %1274 = vmatprep.subr.mxu0 0.0
    %1275 = vmatpush1.msra.mxu0 0.0
    %1276 = vmatprep.subr.mxu0 0.0
    %1277 = vmatpush1.msra.mxu0 0.0
    %1278 = vmatprep.subr.mxu0 0.0
    %1279 = vmatpush1.msra.mxu0 0.0
    %1280 = vmatprep.subr.mxu0 0.0
    %1281 = vmatpush1.msra.mxu0 0.0
    %1282 = vmatprep.subr.mxu0 0.0
    %1283 = vmatpush1.msra.mxu0 0.0
    %1284 = vmatprep.subr.mxu0 0.0
    %1285 = vmatpush1.msra.mxu0 0.0
    %1286 = vmatprep.subr.mxu0 0.0
    %1287 = vmatpush1.msra.mxu0 0.0
    %1288 = vmatprep.subr.mxu0 0.0
    %1289 = vmatpush1.msra.mxu0 0.0
    %1290 = vmatprep.subr.mxu0 0.0
    %1291 = vmatpush1.msra.mxu0 0.0
    %1292 = vmatprep.subr.mxu0 0.0
    %1293 = vmatpush1.msra.mxu0 0.0
    %1294 = vmatprep.subr.mxu0 0.0
    %1295 = vmatpush1.msra.mxu0 0.0
    %1296 = vmatprep.subr.mxu0 0.0
    %1297 = vmatpush1.msra.mxu0 0.0
    %1298 = vmatprep.subr.mxu0 0.0
    %1299 = vmatpush1.msra.mxu0 0.0
    %1300 = vmatprep.subr.mxu0 0.0
    %1301 = vmatpush1.msra.mxu0 0.0
    %1302 = vmatprep.subr.mxu0 0.0
    %1303 = vmatpush1.msra.mxu0 0.0
    %1304 = vmatprep.subr.mxu0 0.0
    %1305 = vmatpush1.msra.mxu0 0.0
    %1306 = vmatprep.subr.mxu0 0.0
    %1307 = vmatpush1.msra.mxu0 0.0
    %1308 = vmatprep.subr.mxu0 0.0
    %1309 = vmatpush1.msra.mxu0 0.0
    %1310 = vmatprep.subr.mxu0 0.0
    %1311 = vmatpush1.msra.mxu0 0.0
    %1312 = vmatprep.mubr.f32.mxu0 0.0
    %1313 = vmatmul.mubr.f32.gmra.mrb[0].mxu0 %v1246
    %v1314 = vpop.f32.mrb[0].mxu0
    %v1315 = vadd.f32 0.0, %v1314
    %v1316 = vpop.f32.mrb[0].mxu0
    %1317 = vdwg.mxu0
    %1318 = vrot.lane.b32.xlu0 %v188, 120
    %v1319 = vpop.permute.xlu0 %1318
    %1320 = vrot.lane.b32.xlu0 %v188, 88
    %v1321 = vpop.permute.xlu0 %1320
    %v1322 = vsel %vm198, %v1319, 0
    %v1324 = vsel %vm198, %v1321, 0
    %1326 = vmatprep.subr.mxu0 0.0
    %1327 = vmatpush1.xpose.msra.mxu0 %v1324
    %1328 = vmatprep.subr.mxu0 0.0
    %1329 = vmatpush1.xpose.msra.mxu0 0.0
    %1330 = vmatprep.subr.mxu0 0.0
    %1331 = vmatpush1.xpose.msra.mxu0 0.0
    %1332 = vmatprep.subr.mxu0 0.0
    %1333 = vmatpush1.xpose.msra.mxu0 0.0
    %1334 = vmatprep.subr.mxu0 0.0
    %1335 = vmatpush1.xpose.msra.mxu0 0.0
    %1336 = vmatprep.subr.mxu0 0.0
    %1337 = vmatpush1.xpose.msra.mxu0 0.0
    %1338 = vmatprep.subr.mxu0 0.0
    %1339 = vmatpush1.xpose.msra.mxu0 0.0
    %1340 = vmatprep.subr.mxu0 0.0
    %1341 = vmatpush1.xpose.msra.mxu0 0.0
    %1342 = vmatprep.subr.mxu0 0.0
    %1343 = vmatpush1.xpose.msra.mxu0 0.0
    %1344 = vmatprep.subr.mxu0 0.0
    %1345 = vmatpush1.xpose.msra.mxu0 0.0
    %1346 = vmatprep.subr.mxu0 0.0
    %1347 = vmatpush1.xpose.msra.mxu0 0.0
    %1348 = vmatprep.subr.mxu0 0.0
    %1349 = vmatpush1.xpose.msra.mxu0 0.0
    %1350 = vmatprep.subr.mxu0 0.0
    %1351 = vmatpush1.xpose.msra.mxu0 0.0
    %1352 = vmatprep.subr.mxu0 0.0
    %1353 = vmatpush1.xpose.msra.mxu0 0.0
    %1354 = vmatprep.subr.mxu0 0.0
    %1355 = vmatpush1.xpose.msra.mxu0 0.0
    %1356 = vmatprep.subr.mxu0 0.0
    %1357 = vmatpush1.xpose.msra.mxu0 0.0
    %1358 = vmatprep.subr.mxu0 0.0
    %1359 = vmatpush1.xpose.msra.mxu0 0.0
    %1360 = vmatprep.subr.mxu0 0.0
    %1361 = vmatpush1.xpose.msra.mxu0 0.0
    %1362 = vmatprep.subr.mxu0 0.0
    %1363 = vmatpush1.xpose.msra.mxu0 0.0
    %1364 = vmatprep.subr.mxu0 0.0
    %1365 = vmatpush1.xpose.msra.mxu0 0.0
    %1366 = vmatprep.subr.mxu0 0.0
    %1367 = vmatpush1.xpose.msra.mxu0 0.0
    %1368 = vmatprep.subr.mxu0 0.0
    %1369 = vmatpush1.xpose.msra.mxu0 0.0
    %1370 = vmatprep.subr.mxu0 0.0
    %1371 = vmatpush1.xpose.msra.mxu0 0.0
    %1372 = vmatprep.subr.mxu0 0.0
    %1373 = vmatpush1.xpose.msra.mxu0 0.0
    %1374 = vmatprep.subr.mxu0 0.0
    %1375 = vmatpush1.xpose.msra.mxu0 0.0
    %1376 = vmatprep.subr.mxu0 0.0
    %1377 = vmatpush1.xpose.msra.mxu0 0.0
    %1378 = vmatprep.subr.mxu0 0.0
    %1379 = vmatpush1.xpose.msra.mxu0 0.0
    %1380 = vmatprep.subr.mxu0 0.0
    %1381 = vmatpush1.xpose.msra.mxu0 0.0
    %1382 = vmatprep.subr.mxu0 0.0
    %1383 = vmatpush1.xpose.msra.mxu0 0.0
    %1384 = vmatprep.subr.mxu0 0.0
    %1385 = vmatpush1.xpose.msra.mxu0 0.0
    %1386 = vmatprep.subr.mxu0 0.0
    %1387 = vmatpush1.xpose.msra.mxu0 0.0
    %1388 = vmatprep.subr.mxu0 0.0
    %1389 = vmatpush1.xpose.msra.mxu0 0.0
    %1390 = vmatprep.mubr.f32.mxu0 0.0
    %1391 = vmatmul.mubr.f32.gmra.mrb[0].mxu0 %v1322
    %v1392 = vpop.f32.mrb[0].mxu0
    %v1393 = vadd.f32 0.0, %v1392
    %v1394 = vpop.f32.mrb[0].mxu0
    %1395 = vdwg.mxu0
    %v1396 = vmul.f32 %v1393, 0.35355338
    %v1397 = vsel %vm198, %v1396, -inf
    %1398 = vmax.xlane.f32.xlu0 %v1397
    %v1399 = vpop.xlane.xlu0 %1398
    %v1400 = vsub.f32 %v1396, %v1399
    %v1401 = vmul.f32 %v1400, 1.442695
    %v1402 = vpow.pop %v1401
    %v1403 = vsel %vm198, %v1402, 0.0
    %1404 = vadd.xlane.f32.xlu0 %v1403
    %v1405 = vpop.xlane.xlu0 %1404
    %v1406 = vrcp.pop %v1405
    %v1407 = vmul.f32 %v1402, %v1406
    %1408 = vrot.lane.b32.xlu0 %v188, 56
    %v1409 = vpop.permute.xlu0 %1408
    %v1412 = vsel %vm198, %v1407, 0
    %1414 = vmatprep.subr.mxu0 0.0
    %1415 = vmatpush1.msra.mxu0 %v1409
    %1416 = vmatprep.subr.mxu0 0.0
    %1417 = vmatpush1.msra.mxu0 0.0
    %1418 = vmatprep.subr.mxu0 0.0
    %1419 = vmatpush1.msra.mxu0 0.0
    %1420 = vmatprep.subr.mxu0 0.0
    %1421 = vmatpush1.msra.mxu0 0.0
    %1422 = vmatprep.subr.mxu0 0.0
    %1423 = vmatpush1.msra.mxu0 0.0
    %1424 = vmatprep.subr.mxu0 0.0
    %1425 = vmatpush1.msra.mxu0 0.0
    %1426 = vmatprep.subr.mxu0 0.0
    %1427 = vmatpush1.msra.mxu0 0.0
    %1428 = vmatprep.subr.mxu0 0.0
    %1429 = vmatpush1.msra.mxu0 0.0
    %1430 = vmatprep.subr.mxu0 0.0
    %1431 = vmatpush1.msra.mxu0 0.0
    %1432 = vmatprep.subr.mxu0 0.0
    %1433 = vmatpush1.msra.mxu0 0.0
    %1434 = vmatprep.subr.mxu0 0.0
    %1435 = vmatpush1.msra.mxu0 0.0
    %1436 = vmatprep.subr.mxu0 0.0
    %1437 = vmatpush1.msra.mxu0 0.0
    %1438 = vmatprep.subr.mxu0 0.0
    %1439 = vmatpush1.msra.mxu0 0.0
    %1440 = vmatprep.subr.mxu0 0.0
    %1441 = vmatpush1.msra.mxu0 0.0
    %1442 = vmatprep.subr.mxu0 0.0
    %1443 = vmatpush1.msra.mxu0 0.0
    %1444 = vmatprep.subr.mxu0 0.0
    %1445 = vmatpush1.msra.mxu0 0.0
    %1446 = vmatprep.subr.mxu0 0.0
    %1447 = vmatpush1.msra.mxu0 0.0
    %1448 = vmatprep.subr.mxu0 0.0
    %1449 = vmatpush1.msra.mxu0 0.0
    %1450 = vmatprep.subr.mxu0 0.0
    %1451 = vmatpush1.msra.mxu0 0.0
    %1452 = vmatprep.subr.mxu0 0.0
    %1453 = vmatpush1.msra.mxu0 0.0
    %1454 = vmatprep.subr.mxu0 0.0
    %1455 = vmatpush1.msra.mxu0 0.0
    %1456 = vmatprep.subr.mxu0 0.0
    %1457 = vmatpush1.msra.mxu0 0.0
    %1458 = vmatprep.subr.mxu0 0.0
    %1459 = vmatpush1.msra.mxu0 0.0
    %1460 = vmatprep.subr.mxu0 0.0
    %1461 = vmatpush1.msra.mxu0 0.0
    %1462 = vmatprep.subr.mxu0 0.0
    %1463 = vmatpush1.msra.mxu0 0.0
    %1464 = vmatprep.subr.mxu0 0.0
    %1465 = vmatpush1.msra.mxu0 0.0
    %1466 = vmatprep.subr.mxu0 0.0
    %1467 = vmatpush1.msra.mxu0 0.0
    %1468 = vmatprep.subr.mxu0 0.0
    %1469 = vmatpush1.msra.mxu0 0.0
    %1470 = vmatprep.subr.mxu0 0.0
    %1471 = vmatpush1.msra.mxu0 0.0
    %1472 = vmatprep.subr.mxu0 0.0
    %1473 = vmatpush1.msra.mxu0 0.0
    %1474 = vmatprep.subr.mxu0 0.0
    %1475 = vmatpush1.msra.mxu0 0.0
    %1476 = vmatprep.subr.mxu0 0.0
    %1477 = vmatpush1.msra.mxu0 0.0
    %1478 = vmatprep.mubr.f32.mxu0 0.0
    %1479 = vmatmul.mubr.f32.gmra.mrb[0].mxu0 %v1412
    %v1480 = vpop.f32.mrb[0].mxu0
    %v1481 = vadd.f32 0.0, %v1480
    %v1482 = vpop.f32.mrb[0].mxu0
    %1483 = vdwg.mxu0
    %v1485 = vsel %vm198, %v1481, 0
    %1487 = vmatprep.subr.mxu0 0.0
    %1488 = vmatpush1.msra.mxu0 %v192
    %1489 = vmatprep.subr.mxu0 0.0
    %1490 = vmatpush1.msra.mxu0 0.0
    %1491 = vmatprep.subr.mxu0 0.0
    %1492 = vmatpush1.msra.mxu0 0.0
    %1493 = vmatprep.subr.mxu0 0.0
    %1494 = vmatpush1.msra.mxu0 0.0
    %1495 = vmatprep.subr.mxu0 0.0
    %1496 = vmatpush1.msra.mxu0 0.0
    %1497 = vmatprep.subr.mxu0 0.0
    %1498 = vmatpush1.msra.mxu0 0.0
    %1499 = vmatprep.subr.mxu0 0.0
    %1500 = vmatpush1.msra.mxu0 0.0
    %1501 = vmatprep.subr.mxu0 0.0
    %1502 = vmatpush1.msra.mxu0 0.0
    %1503 = vmatprep.subr.mxu0 0.0
    %1504 = vmatpush1.msra.mxu0 0.0
    %1505 = vmatprep.subr.mxu0 0.0
    %1506 = vmatpush1.msra.mxu0 0.0
    %1507 = vmatprep.subr.mxu0 0.0
    %1508 = vmatpush1.msra.mxu0 0.0
    %1509 = vmatprep.subr.mxu0 0.0
    %1510 = vmatpush1.msra.mxu0 0.0
    %1511 = vmatprep.subr.mxu0 0.0
    %1512 = vmatpush1.msra.mxu0 0.0
    %1513 = vmatprep.subr.mxu0 0.0
    %1514 = vmatpush1.msra.mxu0 0.0
    %1515 = vmatprep.subr.mxu0 0.0
    %1516 = vmatpush1.msra.mxu0 0.0
    %1517 = vmatprep.subr.mxu0 0.0
    %1518 = vmatpush1.msra.mxu0 0.0
    %1519 = vmatprep.subr.mxu0 0.0
    %1520 = vmatpush1.msra.mxu0 0.0
    %1521 = vmatprep.subr.mxu0 0.0
    %1522 = vmatpush1.msra.mxu0 0.0
    %1523 = vmatprep.subr.mxu0 0.0
    %1524 = vmatpush1.msra.mxu0 0.0
    %1525 = vmatprep.subr.mxu0 0.0
    %1526 = vmatpush1.msra.mxu0 0.0
    %1527 = vmatprep.subr.mxu0 0.0
    %1528 = vmatpush1.msra.mxu0 0.0
    %1529 = vmatprep.subr.mxu0 0.0
    %1530 = vmatpush1.msra.mxu0 0.0
    %1531 = vmatprep.subr.mxu0 0.0
    %1532 = vmatpush1.msra.mxu0 0.0
    %1533 = vmatprep.subr.mxu0 0.0
    %1534 = vmatpush1.msra.mxu0 0.0
    %1535 = vmatprep.subr.mxu0 0.0
    %1536 = vmatpush1.msra.mxu0 0.0
    %1537 = vmatprep.subr.mxu0 0.0
    %1538 = vmatpush1.msra.mxu0 0.0
    %1539 = vmatprep.subr.mxu0 0.0
    %1540 = vmatpush1.msra.mxu0 0.0
    %1541 = vmatprep.subr.mxu0 0.0
    %1542 = vmatpush1.msra.mxu0 0.0
    %1543 = vmatprep.subr.mxu0 0.0
    %1544 = vmatpush1.msra.mxu0 0.0
    %1545 = vmatprep.subr.mxu0 0.0
    %1546 = vmatpush1.msra.mxu0 0.0
    %1547 = vmatprep.subr.mxu0 0.0
    %1548 = vmatpush1.msra.mxu0 0.0
    %1549 = vmatprep.subr.mxu0 0.0
    %1550 = vmatpush1.msra.mxu0 0.0
    %1551 = vmatprep.mubr.f32.mxu0 0.0
    %1552 = vmatmul.mubr.f32.gmra.mrb[0].mxu0 %v1485
    %v1553 = vpop.f32.mrb[0].mxu0
    %v1554 = vadd.f32 0.0, %v1553
    %v1555 = vpop.f32.mrb[0].mxu0
    %1556 = vdwg.mxu0
    %v1558 = vsel %vm198, %v1315, 0
    %1560 = vmatprep.subr.mxu0 0.0
    %1561 = vmatpush1.msra.mxu0 %v191
    %1562 = vmatprep.subr.mxu0 0.0
    %1563 = vmatpush1.msra.mxu0 0.0
    %1564 = vmatprep.subr.mxu0 0.0
    %1565 = vmatpush1.msra.mxu0 0.0
    %1566 = vmatprep.subr.mxu0 0.0
    %1567 = vmatpush1.msra.mxu0 0.0
    %1568 = vmatprep.subr.mxu0 0.0
    %1569 = vmatpush1.msra.mxu0 0.0
    %1570 = vmatprep.subr.mxu0 0.0
    %1571 = vmatpush1.msra.mxu0 0.0
    %1572 = vmatprep.subr.mxu0 0.0
    %1573 = vmatpush1.msra.mxu0 0.0
    %1574 = vmatprep.subr.mxu0 0.0
    %1575 = vmatpush1.msra.mxu0 0.0
    %1576 = vmatprep.subr.mxu0 0.0
    %1577 = vmatpush1.msra.mxu0 0.0
    %1578 = vmatprep.subr.mxu0 0.0
    %1579 = vmatpush1.msra.mxu0 0.0
    %1580 = vmatprep.subr.mxu0 0.0
    %1581 = vmatpush1.msra.mxu0 0.0
    %1582 = vmatprep.subr.mxu0 0.0
    %1583 = vmatpush1.msra.mxu0 0.0
    %1584 = vmatprep.subr.mxu0 0.0
    %1585 = vmatpush1.msra.mxu0 0.0
    %1586 = vmatprep.subr.mxu0 0.0
    %1587 = vmatpush1.msra.mxu0 0.0
    %1588 = vmatprep.subr.mxu0 0.0
    %1589 = vmatpush1.msra.mxu0 0.0
    %1590 = vmatprep.subr.mxu0 0.0
    %1591 = vmatpush1.msra.mxu0 0.0
    %1592 = vmatprep.subr.mxu0 0.0
    %1593 = vmatpush1.msra.mxu0 0.0
    %1594 = vmatprep.subr.mxu0 0.0
    %1595 = vmatpush1.msra.mxu0 0.0
    %1596 = vmatprep.subr.mxu0 0.0
    %1597 = vmatpush1.msra.mxu0 0.0
    %1598 = vmatprep.subr.mxu0 0.0
    %1599 = vmatpush1.msra.mxu0 0.0
    %1600 = vmatprep.subr.mxu0 0.0
    %1601 = vmatpush1.msra.mxu0 0.0
    %1602 = vmatprep.subr.mxu0 0.0
    %1603 = vmatpush1.msra.mxu0 0.0
    %1604 = vmatprep.subr.mxu0 0.0
    %1605 = vmatpush1.msra.mxu0 0.0
    %1606 = vmatprep.subr.mxu0 0.0
    %1607 = vmatpush1.msra.mxu0 0.0
    %1608 = vmatprep.subr.mxu0 0.0
    %1609 = vmatpush1.msra.mxu0 0.0
    %1610 = vmatprep.subr.mxu0 0.0
    %1611 = vmatpush1.msra.mxu0 0.0
    %1612 = vmatprep.subr.mxu0 0.0
    %1613 = vmatpush1.msra.mxu0 0.0
    %1614 = vmatprep.subr.mxu0 0.0
    %1615 = vmatpush1.msra.mxu0 0.0
    %1616 = vmatprep.subr.mxu0 0.0
    %1617 = vmatpush1.msra.mxu0 0.0
    %1618 = vmatprep.subr.mxu0 0.0
    %1619 = vmatpush1.msra.mxu0 0.0
    %1620 = vmatprep.subr.mxu0 0.0
    %1621 = vmatpush1.msra.mxu0 0.0
    %1622 = vmatprep.subr.mxu0 0.0
    %1623 = vmatpush1.msra.mxu0 0.0
    %1624 = vmatprep.mubr.f32.mxu0 0.0
    %1625 = vmatmul.mubr.f32.gmra.mrb[0].mxu0 %v1558
    %v1626 = vpop.f32.mrb[0].mxu0
    %v1627 = vadd.f32 %v1554, %v1626
    %v1628 = vpop.f32.mrb[0].mxu0
    %1629 = vdwg.mxu0
    %1630 = vrot.lane.b32.xlu0 %v188, 112
    %v1631 = vpop.permute.xlu0 %1630
    %1632 = vrot.lane.b32.xlu0 %v188, 80
    %v1633 = vpop.permute.xlu0 %1632
    %v1634 = vsel %vm198, %v1631, 0
    %v1636 = vsel %vm198, %v1633, 0
    %1638 = vmatprep.subr.mxu0 0.0
    %1639 = vmatpush1.xpose.msra.mxu0 %v1636
    %1640 = vmatprep.subr.mxu0 0.0
    %1641 = vmatpush1.xpose.msra.mxu0 0.0
    %1642 = vmatprep.subr.mxu0 0.0
    %1643 = vmatpush1.xpose.msra.mxu0 0.0
    %1644 = vmatprep.subr.mxu0 0.0
    %1645 = vmatpush1.xpose.msra.mxu0 0.0
    %1646 = vmatprep.subr.mxu0 0.0
    %1647 = vmatpush1.xpose.msra.mxu0 0.0
    %1648 = vmatprep.subr.mxu0 0.0
    %1649 = vmatpush1.xpose.msra.mxu0 0.0
    %1650 = vmatprep.subr.mxu0 0.0
    %1651 = vmatpush1.xpose.msra.mxu0 0.0
    %1652 = vmatprep.subr.mxu0 0.0
    %1653 = vmatpush1.xpose.msra.mxu0 0.0
    %1654 = vmatprep.subr.mxu0 0.0
    %1655 = vmatpush1.xpose.msra.mxu0 0.0
    %1656 = vmatprep.subr.mxu0 0.0
    %1657 = vmatpush1.xpose.msra.mxu0 0.0
    %1658 = vmatprep.subr.mxu0 0.0
    %1659 = vmatpush1.xpose.msra.mxu0 0.0
    %1660 = vmatprep.subr.mxu0 0.0
    %1661 = vmatpush1.xpose.msra.mxu0 0.0
    %1662 = vmatprep.subr.mxu0 0.0
    %1663 = vmatpush1.xpose.msra.mxu0 0.0
    %1664 = vmatprep.subr.mxu0 0.0
    %1665 = vmatpush1.xpose.msra.mxu0 0.0
    %1666 = vmatprep.subr.mxu0 0.0
    %1667 = vmatpush1.xpose.msra.mxu0 0.0
    %1668 = vmatprep.subr.mxu0 0.0
    %1669 = vmatpush1.xpose.msra.mxu0 0.0
    %1670 = vmatprep.subr.mxu0 0.0
    %1671 = vmatpush1.xpose.msra.mxu0 0.0
    %1672 = vmatprep.subr.mxu0 0.0
    %1673 = vmatpush1.xpose.msra.mxu0 0.0
    %1674 = vmatprep.subr.mxu0 0.0
    %1675 = vmatpush1.xpose.msra.mxu0 0.0
    %1676 = vmatprep.subr.mxu0 0.0
    %1677 = vmatpush1.xpose.msra.mxu0 0.0
    %1678 = vmatprep.subr.mxu0 0.0
    %1679 = vmatpush1.xpose.msra.mxu0 0.0
    %1680 = vmatprep.subr.mxu0 0.0
    %1681 = vmatpush1.xpose.msra.mxu0 0.0
    %1682 = vmatprep.subr.mxu0 0.0
    %1683 = vmatpush1.xpose.msra.mxu0 0.0
    %1684 = vmatprep.subr.mxu0 0.0
    %1685 = vmatpush1.xpose.msra.mxu0 0.0
    %1686 = vmatprep.subr.mxu0 0.0
    %1687 = vmatpush1.xpose.msra.mxu0 0.0
    %1688 = vmatprep.subr.mxu0 0.0
    %1689 = vmatpush1.xpose.msra.mxu0 0.0
    %1690 = vmatprep.subr.mxu0 0.0
    %1691 = vmatpush1.xpose.msra.mxu0 0.0
    %1692 = vmatprep.subr.mxu0 0.0
    %1693 = vmatpush1.xpose.msra.mxu0 0.0
    %1694 = vmatprep.subr.mxu0 0.0
    %1695 = vmatpush1.xpose.msra.mxu0 0.0
    %1696 = vmatprep.subr.mxu0 0.0
    %1697 = vmatpush1.xpose.msra.mxu0 0.0
    %1698 = vmatprep.subr.mxu0 0.0
    %1699 = vmatpush1.xpose.msra.mxu0 0.0
    %1700 = vmatprep.subr.mxu0 0.0
    %1701 = vmatpush1.xpose.msra.mxu0 0.0
    %1702 = vmatprep.mubr.f32.mxu0 0.0
    %1703 = vmatmul.mubr.f32.gmra.mrb[0].mxu0 %v1634
    %v1704 = vpop.f32.mrb[0].mxu0
    %v1705 = vadd.f32 0.0, %v1704
    %v1706 = vpop.f32.mrb[0].mxu0
    %1707 = vdwg.mxu0
    %v1708 = vmul.f32 %v1705, 0.35355338
    %v1709 = vsel %vm198, %v1708, -inf
    %1710 = vmax.xlane.f32.xlu0 %v1709
    %v1711 = vpop.xlane.xlu0 %1710
    %v1712 = vsub.f32 %v1708, %v1711
    %v1713 = vmul.f32 %v1712, 1.442695
    %v1714 = vpow.pop %v1713
    %v1715 = vsel %vm198, %v1714, 0.0
    %1716 = vadd.xlane.f32.xlu0 %v1715
    %v1717 = vpop.xlane.xlu0 %1716
    %v1718 = vrcp.pop %v1717
    %v1719 = vmul.f32 %v1714, %v1718
    %1720 = vrot.lane.b32.xlu0 %v188, 48
    %v1721 = vpop.permute.xlu0 %1720
    %v1724 = vsel %vm198, %v1719, 0
    %1726 = vmatprep.subr.mxu0 0.0
    %1727 = vmatpush1.msra.mxu0 %v1721
    %1728 = vmatprep.subr.mxu0 0.0
    %1729 = vmatpush1.msra.mxu0 0.0
    %1730 = vmatprep.subr.mxu0 0.0
    %1731 = vmatpush1.msra.mxu0 0.0
    %1732 = vmatprep.subr.mxu0 0.0
    %1733 = vmatpush1.msra.mxu0 0.0
    %1734 = vmatprep.subr.mxu0 0.0
    %1735 = vmatpush1.msra.mxu0 0.0
    %1736 = vmatprep.subr.mxu0 0.0
    %1737 = vmatpush1.msra.mxu0 0.0
    %1738 = vmatprep.subr.mxu0 0.0
    %1739 = vmatpush1.msra.mxu0 0.0
    %1740 = vmatprep.subr.mxu0 0.0
    %1741 = vmatpush1.msra.mxu0 0.0
    %1742 = vmatprep.subr.mxu0 0.0
    %1743 = vmatpush1.msra.mxu0 0.0
    %1744 = vmatprep.subr.mxu0 0.0
    %1745 = vmatpush1.msra.mxu0 0.0
    %1746 = vmatprep.subr.mxu0 0.0
    %1747 = vmatpush1.msra.mxu0 0.0
    %1748 = vmatprep.subr.mxu0 0.0
    %1749 = vmatpush1.msra.mxu0 0.0
    %1750 = vmatprep.subr.mxu0 0.0
    %1751 = vmatpush1.msra.mxu0 0.0
    %1752 = vmatprep.subr.mxu0 0.0
    %1753 = vmatpush1.msra.mxu0 0.0
    %1754 = vmatprep.subr.mxu0 0.0
    %1755 = vmatpush1.msra.mxu0 0.0
    %1756 = vmatprep.subr.mxu0 0.0
    %1757 = vmatpush1.msra.mxu0 0.0
    %1758 = vmatprep.subr.mxu0 0.0
    %1759 = vmatpush1.msra.mxu0 0.0
    %1760 = vmatprep.subr.mxu0 0.0
    %1761 = vmatpush1.msra.mxu0 0.0
    %1762 = vmatprep.subr.mxu0 0.0
    %1763 = vmatpush1.msra.mxu0 0.0
    %1764 = vmatprep.subr.mxu0 0.0
    %1765 = vmatpush1.msra.mxu0 0.0
    %1766 = vmatprep.subr.mxu0 0.0
    %1767 = vmatpush1.msra.mxu0 0.0
    %1768 = vmatprep.subr.mxu0 0.0
    %1769 = vmatpush1.msra.mxu0 0.0
    %1770 = vmatprep.subr.mxu0 0.0
    %1771 = vmatpush1.msra.mxu0 0.0
    %1772 = vmatprep.subr.mxu0 0.0
    %1773 = vmatpush1.msra.mxu0 0.0
    %1774 = vmatprep.subr.mxu0 0.0
    %1775 = vmatpush1.msra.mxu0 0.0
    %1776 = vmatprep.subr.mxu0 0.0
    %1777 = vmatpush1.msra.mxu0 0.0
    %1778 = vmatprep.subr.mxu0 0.0
    %1779 = vmatpush1.msra.mxu0 0.0
    %1780 = vmatprep.subr.mxu0 0.0
    %1781 = vmatpush1.msra.mxu0 0.0
    %1782 = vmatprep.subr.mxu0 0.0
    %1783 = vmatpush1.msra.mxu0 0.0
    %1784 = vmatprep.subr.mxu0 0.0
    %1785 = vmatpush1.msra.mxu0 0.0
    %1786 = vmatprep.subr.mxu0 0.0
    %1787 = vmatpush1.msra.mxu0 0.0
    %1788 = vmatprep.subr.mxu0 0.0
    %1789 = vmatpush1.msra.mxu0 0.0
    %1790 = vmatprep.mubr.f32.mxu0 0.0
    %1791 = vmatmul.mubr.f32.gmra.mrb[0].mxu0 %v1724
    %v1792 = vpop.f32.mrb[0].mxu0
    %v1793 = vadd.f32 0.0, %v1792
    %v1794 = vpop.f32.mrb[0].mxu0
    %1795 = vdwg.mxu0
    %v1797 = vsel %vm198, %v1793, 0
    %1799 = vmatprep.subr.mxu0 0.0
    %1800 = vmatpush1.msra.mxu0 %v193
    %1801 = vmatprep.subr.mxu0 0.0
    %1802 = vmatpush1.msra.mxu0 0.0
    %1803 = vmatprep.subr.mxu0 0.0
    %1804 = vmatpush1.msra.mxu0 0.0
    %1805 = vmatprep.subr.mxu0 0.0
    %1806 = vmatpush1.msra.mxu0 0.0
    %1807 = vmatprep.subr.mxu0 0.0
    %1808 = vmatpush1.msra.mxu0 0.0
    %1809 = vmatprep.subr.mxu0 0.0
    %1810 = vmatpush1.msra.mxu0 0.0
    %1811 = vmatprep.subr.mxu0 0.0
    %1812 = vmatpush1.msra.mxu0 0.0
    %1813 = vmatprep.subr.mxu0 0.0
    %1814 = vmatpush1.msra.mxu0 0.0
    %1815 = vmatprep.subr.mxu0 0.0
    %1816 = vmatpush1.msra.mxu0 0.0
    %1817 = vmatprep.subr.mxu0 0.0
    %1818 = vmatpush1.msra.mxu0 0.0
    %1819 = vmatprep.subr.mxu0 0.0
    %1820 = vmatpush1.msra.mxu0 0.0
    %1821 = vmatprep.subr.mxu0 0.0
    %1822 = vmatpush1.msra.mxu0 0.0
    %1823 = vmatprep.subr.mxu0 0.0
    %1824 = vmatpush1.msra.mxu0 0.0
    %1825 = vmatprep.subr.mxu0 0.0
    %1826 = vmatpush1.msra.mxu0 0.0
    %1827 = vmatprep.subr.mxu0 0.0
    %1828 = vmatpush1.msra.mxu0 0.0
    %1829 = vmatprep.subr.mxu0 0.0
    %1830 = vmatpush1.msra.mxu0 0.0
    %1831 = vmatprep.subr.mxu0 0.0
    %1832 = vmatpush1.msra.mxu0 0.0
    %1833 = vmatprep.subr.mxu0 0.0
    %1834 = vmatpush1.msra.mxu0 0.0
    %1835 = vmatprep.subr.mxu0 0.0
    %1836 = vmatpush1.msra.mxu0 0.0
    %1837 = vmatprep.subr.mxu0 0.0
    %1838 = vmatpush1.msra.mxu0 0.0
    %1839 = vmatprep.subr.mxu0 0.0
    %1840 = vmatpush1.msra.mxu0 0.0
    %1841 = vmatprep.subr.mxu0 0.0
    %1842 = vmatpush1.msra.mxu0 0.0
    %1843 = vmatprep.subr.mxu0 0.0
    %1844 = vmatpush1.msra.mxu0 0.0
    %1845 = vmatprep.subr.mxu0 0.0
    %1846 = vmatpush1.msra.mxu0 0.0
    %1847 = vmatprep.subr.mxu0 0.0
    %1848 = vmatpush1.msra.mxu0 0.0
    %1849 = vmatprep.subr.mxu0 0.0
    %1850 = vmatpush1.msra.mxu0 0.0
    %1851 = vmatprep.subr.mxu0 0.0
    %1852 = vmatpush1.msra.mxu0 0.0
    %1853 = vmatprep.subr.mxu0 0.0
    %1854 = vmatpush1.msra.mxu0 0.0
    %1855 = vmatprep.subr.mxu0 0.0
    %1856 = vmatpush1.msra.mxu0 0.0
    %1857 = vmatprep.subr.mxu0 0.0
    %1858 = vmatpush1.msra.mxu0 0.0
    %1859 = vmatprep.subr.mxu0 0.0
    %1860 = vmatpush1.msra.mxu0 0.0
    %1861 = vmatprep.subr.mxu0 0.0
    %1862 = vmatpush1.msra.mxu0 0.0
    %1863 = vmatprep.mubr.f32.mxu0 0.0
    %1864 = vmatmul.mubr.f32.gmra.mrb[0].mxu0 %v1797
    %v1865 = vpop.f32.mrb[0].mxu0
    %v1866 = vadd.f32 0.0, %v1865
    %v1867 = vpop.f32.mrb[0].mxu0
    %1868 = vdwg.mxu0
    %v1869 = vadd.f32 %v1627, %v1866
    %1870 = vrot.lane.b32.xlu0 %v188, 104
    %v1871 = vpop.permute.xlu0 %1870
    %1872 = vrot.lane.b32.xlu0 %v188, 72
    %v1873 = vpop.permute.xlu0 %1872
    %v1874 = vsel %vm198, %v1871, 0
    %v1876 = vsel %vm198, %v1873, 0
    %1878 = vmatprep.subr.mxu0 0.0
    %1879 = vmatpush1.xpose.msra.mxu0 %v1876
    %1880 = vmatprep.subr.mxu0 0.0
    %1881 = vmatpush1.xpose.msra.mxu0 0.0
    %1882 = vmatprep.subr.mxu0 0.0
    %1883 = vmatpush1.xpose.msra.mxu0 0.0
    %1884 = vmatprep.subr.mxu0 0.0
    %1885 = vmatpush1.xpose.msra.mxu0 0.0
    %1886 = vmatprep.subr.mxu0 0.0
    %1887 = vmatpush1.xpose.msra.mxu0 0.0
    %1888 = vmatprep.subr.mxu0 0.0
    %1889 = vmatpush1.xpose.msra.mxu0 0.0
    %1890 = vmatprep.subr.mxu0 0.0
    %1891 = vmatpush1.xpose.msra.mxu0 0.0
    %1892 = vmatprep.subr.mxu0 0.0
    %1893 = vmatpush1.xpose.msra.mxu0 0.0
    %1894 = vmatprep.subr.mxu0 0.0
    %1895 = vmatpush1.xpose.msra.mxu0 0.0
    %1896 = vmatprep.subr.mxu0 0.0
    %1897 = vmatpush1.xpose.msra.mxu0 0.0
    %1898 = vmatprep.subr.mxu0 0.0
    %1899 = vmatpush1.xpose.msra.mxu0 0.0
    %1900 = vmatprep.subr.mxu0 0.0
    %1901 = vmatpush1.xpose.msra.mxu0 0.0
    %1902 = vmatprep.subr.mxu0 0.0
    %1903 = vmatpush1.xpose.msra.mxu0 0.0
    %1904 = vmatprep.subr.mxu0 0.0
    %1905 = vmatpush1.xpose.msra.mxu0 0.0
    %1906 = vmatprep.subr.mxu0 0.0
    %1907 = vmatpush1.xpose.msra.mxu0 0.0
    %1908 = vmatprep.subr.mxu0 0.0
    %1909 = vmatpush1.xpose.msra.mxu0 0.0
    %1910 = vmatprep.subr.mxu0 0.0
    %1911 = vmatpush1.xpose.msra.mxu0 0.0
    %1912 = vmatprep.subr.mxu0 0.0
    %1913 = vmatpush1.xpose.msra.mxu0 0.0
    %1914 = vmatprep.subr.mxu0 0.0
    %1915 = vmatpush1.xpose.msra.mxu0 0.0
    %1916 = vmatprep.subr.mxu0 0.0
    %1917 = vmatpush1.xpose.msra.mxu0 0.0
    %1918 = vmatprep.subr.mxu0 0.0
    %1919 = vmatpush1.xpose.msra.mxu0 0.0
    %1920 = vmatprep.subr.mxu0 0.0
    %1921 = vmatpush1.xpose.msra.mxu0 0.0
    %1922 = vmatprep.subr.mxu0 0.0
    %1923 = vmatpush1.xpose.msra.mxu0 0.0
    %1924 = vmatprep.subr.mxu0 0.0
    %1925 = vmatpush1.xpose.msra.mxu0 0.0
    %1926 = vmatprep.subr.mxu0 0.0
    %1927 = vmatpush1.xpose.msra.mxu0 0.0
    %1928 = vmatprep.subr.mxu0 0.0
    %1929 = vmatpush1.xpose.msra.mxu0 0.0
    %1930 = vmatprep.subr.mxu0 0.0
    %1931 = vmatpush1.xpose.msra.mxu0 0.0
    %1932 = vmatprep.subr.mxu0 0.0
    %1933 = vmatpush1.xpose.msra.mxu0 0.0
    %1934 = vmatprep.subr.mxu0 0.0
    %1935 = vmatpush1.xpose.msra.mxu0 0.0
    %1936 = vmatprep.subr.mxu0 0.0
    %1937 = vmatpush1.xpose.msra.mxu0 0.0
    %1938 = vmatprep.subr.mxu0 0.0
    %1939 = vmatpush1.xpose.msra.mxu0 0.0
    %1940 = vmatprep.subr.mxu0 0.0
    %1941 = vmatpush1.xpose.msra.mxu0 0.0
    %1942 = vmatprep.mubr.f32.mxu0 0.0
    %1943 = vmatmul.mubr.f32.gmra.mrb[0].mxu0 %v1874
    %v1944 = vpop.f32.mrb[0].mxu0
    %v1945 = vadd.f32 0.0, %v1944
    %v1946 = vpop.f32.mrb[0].mxu0
    %1947 = vdwg.mxu0
    %v1948 = vmul.f32 %v1945, 0.35355338
    %v1949 = vsel %vm198, %v1948, -inf
    %1950 = vmax.xlane.f32.xlu0 %v1949
    %v1951 = vpop.xlane.xlu0 %1950
    %v1952 = vsub.f32 %v1948, %v1951
    %v1953 = vmul.f32 %v1952, 1.442695
    %v1954 = vpow.pop %v1953
    %v1955 = vsel %vm198, %v1954, 0.0
    %1956 = vadd.xlane.f32.xlu0 %v1955
    %v1957 = vpop.xlane.xlu0 %1956
    %v1958 = vrcp.pop %v1957
    %v1959 = vmul.f32 %v1954, %v1958
    %1960 = vrot.lane.b32.xlu0 %v188, 40
    %v1961 = vpop.permute.xlu0 %1960
    %v1964 = vsel %vm198, %v1959, 0
    %1966 = vmatprep.subr.mxu0 0.0
    %1967 = vmatpush1.msra.mxu0 %v1961
    %1968 = vmatprep.subr.mxu0 0.0
    %1969 = vmatpush1.msra.mxu0 0.0
    %1970 = vmatprep.subr.mxu0 0.0
    %1971 = vmatpush1.msra.mxu0 0.0
    %1972 = vmatprep.subr.mxu0 0.0
    %1973 = vmatpush1.msra.mxu0 0.0
    %1974 = vmatprep.subr.mxu0 0.0
    %1975 = vmatpush1.msra.mxu0 0.0
    %1976 = vmatprep.subr.mxu0 0.0
    %1977 = vmatpush1.msra.mxu0 0.0
    %1978 = vmatprep.subr.mxu0 0.0
    %1979 = vmatpush1.msra.mxu0 0.0
    %1980 = vmatprep.subr.mxu0 0.0
    %1981 = vmatpush1.msra.mxu0 0.0
    %1982 = vmatprep.subr.mxu0 0.0
    %1983 = vmatpush1.msra.mxu0 0.0
    %1984 = vmatprep.subr.mxu0 0.0
    %1985 = vmatpush1.msra.mxu0 0.0
    %1986 = vmatprep.subr.mxu0 0.0
    %1987 = vmatpush1.msra.mxu0 0.0
    %1988 = vmatprep.subr.mxu0 0.0
    %1989 = vmatpush1.msra.mxu0 0.0
    %1990 = vmatprep.subr.mxu0 0.0
    %1991 = vmatpush1.msra.mxu0 0.0
    %1992 = vmatprep.subr.mxu0 0.0
    %1993 = vmatpush1.msra.mxu0 0.0
    %1994 = vmatprep.subr.mxu0 0.0
    %1995 = vmatpush1.msra.mxu0 0.0
    %1996 = vmatprep.subr.mxu0 0.0
    %1997 = vmatpush1.msra.mxu0 0.0
    %1998 = vmatprep.subr.mxu0 0.0
    %1999 = vmatpush1.msra.mxu0 0.0
    %2000 = vmatprep.subr.mxu0 0.0
    %2001 = vmatpush1.msra.mxu0 0.0
    %2002 = vmatprep.subr.mxu0 0.0
    %2003 = vmatpush1.msra.mxu0 0.0
    %2004 = vmatprep.subr.mxu0 0.0
    %2005 = vmatpush1.msra.mxu0 0.0
    %2006 = vmatprep.subr.mxu0 0.0
    %2007 = vmatpush1.msra.mxu0 0.0
    %2008 = vmatprep.subr.mxu0 0.0
    %2009 = vmatpush1.msra.mxu0 0.0
    %2010 = vmatprep.subr.mxu0 0.0
    %2011 = vmatpush1.msra.mxu0 0.0
    %2012 = vmatprep.subr.mxu0 0.0
    %2013 = vmatpush1.msra.mxu0 0.0
    %2014 = vmatprep.subr.mxu0 0.0
    %2015 = vmatpush1.msra.mxu0 0.0
    %2016 = vmatprep.subr.mxu0 0.0
    %2017 = vmatpush1.msra.mxu0 0.0
    %2018 = vmatprep.subr.mxu0 0.0
    %2019 = vmatpush1.msra.mxu0 0.0
    %2020 = vmatprep.subr.mxu0 0.0
    %2021 = vmatpush1.msra.mxu0 0.0
    %2022 = vmatprep.subr.mxu0 0.0
    %2023 = vmatpush1.msra.mxu0 0.0
    %2024 = vmatprep.subr.mxu0 0.0
    %2025 = vmatpush1.msra.mxu0 0.0
    %2026 = vmatprep.subr.mxu0 0.0
    %2027 = vmatpush1.msra.mxu0 0.0
    %2028 = vmatprep.subr.mxu0 0.0
    %2029 = vmatpush1.msra.mxu0 0.0
    %2030 = vmatprep.mubr.f32.mxu0 0.0
    %2031 = vmatmul.mubr.f32.gmra.mrb[0].mxu0 %v1964
    %v2032 = vpop.f32.mrb[0].mxu0
    %v2033 = vadd.f32 0.0, %v2032
    %v2034 = vpop.f32.mrb[0].mxu0
    %2035 = vdwg.mxu0
    %v2037 = vsel %vm198, %v2033, 0
    %2039 = vmatprep.subr.mxu0 0.0
    %2040 = vmatpush1.msra.mxu0 %v194
    %2041 = vmatprep.subr.mxu0 0.0
    %2042 = vmatpush1.msra.mxu0 0.0
    %2043 = vmatprep.subr.mxu0 0.0
    %2044 = vmatpush1.msra.mxu0 0.0
    %2045 = vmatprep.subr.mxu0 0.0
    %2046 = vmatpush1.msra.mxu0 0.0
    %2047 = vmatprep.subr.mxu0 0.0
    %2048 = vmatpush1.msra.mxu0 0.0
    %2049 = vmatprep.subr.mxu0 0.0
    %2050 = vmatpush1.msra.mxu0 0.0
    %2051 = vmatprep.subr.mxu0 0.0
    %2052 = vmatpush1.msra.mxu0 0.0
    %2053 = vmatprep.subr.mxu0 0.0
    %2054 = vmatpush1.msra.mxu0 0.0
    %2055 = vmatprep.subr.mxu0 0.0
    %2056 = vmatpush1.msra.mxu0 0.0
    %2057 = vmatprep.subr.mxu0 0.0
    %2058 = vmatpush1.msra.mxu0 0.0
    %2059 = vmatprep.subr.mxu0 0.0
    %2060 = vmatpush1.msra.mxu0 0.0
    %2061 = vmatprep.subr.mxu0 0.0
    %2062 = vmatpush1.msra.mxu0 0.0
    %2063 = vmatprep.subr.mxu0 0.0
    %2064 = vmatpush1.msra.mxu0 0.0
    %2065 = vmatprep.subr.mxu0 0.0
    %2066 = vmatpush1.msra.mxu0 0.0
    %2067 = vmatprep.subr.mxu0 0.0
    %2068 = vmatpush1.msra.mxu0 0.0
    %2069 = vmatprep.subr.mxu0 0.0
    %2070 = vmatpush1.msra.mxu0 0.0
    %2071 = vmatprep.subr.mxu0 0.0
    %2072 = vmatpush1.msra.mxu0 0.0
    %2073 = vmatprep.subr.mxu0 0.0
    %2074 = vmatpush1.msra.mxu0 0.0
    %2075 = vmatprep.subr.mxu0 0.0
    %2076 = vmatpush1.msra.mxu0 0.0
    %2077 = vmatprep.subr.mxu0 0.0
    %2078 = vmatpush1.msra.mxu0 0.0
    %2079 = vmatprep.subr.mxu0 0.0
    %2080 = vmatpush1.msra.mxu0 0.0
    %2081 = vmatprep.subr.mxu0 0.0
    %2082 = vmatpush1.msra.mxu0 0.0
    %2083 = vmatprep.subr.mxu0 0.0
    %2084 = vmatpush1.msra.mxu0 0.0
    %2085 = vmatprep.subr.mxu0 0.0
    %2086 = vmatpush1.msra.mxu0 0.0
    %2087 = vmatprep.subr.mxu0 0.0
    %2088 = vmatpush1.msra.mxu0 0.0
    %2089 = vmatprep.subr.mxu0 0.0
    %2090 = vmatpush1.msra.mxu0 0.0
    %2091 = vmatprep.subr.mxu0 0.0
    %2092 = vmatpush1.msra.mxu0 0.0
    %2093 = vmatprep.subr.mxu0 0.0
    %2094 = vmatpush1.msra.mxu0 0.0
    %2095 = vmatprep.subr.mxu0 0.0
    %2096 = vmatpush1.msra.mxu0 0.0
    %2097 = vmatprep.subr.mxu0 0.0
    %2098 = vmatpush1.msra.mxu0 0.0
    %2099 = vmatprep.subr.mxu0 0.0
    %2100 = vmatpush1.msra.mxu0 0.0
    %2101 = vmatprep.subr.mxu0 0.0
    %2102 = vmatpush1.msra.mxu0 0.0
    %2103 = vmatprep.mubr.f32.mxu0 0.0
    %2104 = vmatmul.mubr.f32.gmra.mrb[0].mxu0 %v2037
    %v2105 = vpop.f32.mrb[0].mxu0
    %v2106 = vadd.f32 0.0, %v2105
    %v2107 = vpop.f32.mrb[0].mxu0
    %2108 = vdwg.mxu0
    %v2109 = vadd.f32 %v1869, %v2106
    %v2110 = vlaneseq
    %v2111 = vshrl.u32 %v2110, 7
    %v2112 = vsub.s32 0, %v2111
    %v2113 = vrot.slane %v55, %v2112
    %v2114 = vadd.f32 %v1152, %v2113
    %v2115 = vadd.f32 %v2109, %v2113
    %v2116 = vadd.f32 %v52, %v2114
    %v2117 = vadd.f32 %v53, %v2115
    %v2118 = vsel %vm62, %v2116, 0.0
    %2119 = vadd.xlane.f32.xlu0 %v2118
    %v2120 = vpop.xlane.xlu0 %2119
    %v2121 = vsel %vm62, %v2117, 0.0
    %2122 = vadd.xlane.f32.xlu0 %v2121
    %v2123 = vpop.xlane.xlu0 %2122
    %v2124 = vmul.f32 %v2120, %v69
    %v2125 = vmul.f32 %v2123, %v69
    %v2126 = vsub.f32 %v2116, %v2124
    %v2127 = vsub.f32 %v2117, %v2125
    %v2128 = vmul.f32 %v2126, %v2126
    %v2129 = vmul.f32 %v2127, %v2127
    %v2130 = vsel %vm62, %v2128, 0.0
    %2131 = vadd.xlane.f32.xlu0 %v2130
    %v2132 = vpop.xlane.xlu0 %2131
    %v2133 = vsel %vm62, %v2129, 0.0
    %2134 = vadd.xlane.f32.xlu0 %v2133
    %v2135 = vpop.xlane.xlu0 %2134
    %v2136 = vmul.f32 %v2132, %v69
    %v2137 = vmul.f32 %v2135, %v69
    %v2138 = vadd.f32 %v2136, 1e-06
    %v2139 = vadd.f32 %v2137, 1e-06
    %v2140 = vrsqrt.pop %v2138
    %v2141 = vrsqrt.pop %v2139
    %v2142 = vmul.f32 %v2126, %v2140
    %v2143 = vmul.f32 %v2127, %v2141
    %v2144 = vlaneseq
    %v2145 = vshrl.u32 %v2144, 7
    %v2146 = vsub.s32 0, %v2145
    %v2147 = vrot.slane %v58, %v2146
    %v2148 = vmul.f32 %v2142, %v2147
    %v2149 = vmul.f32 %v2143, %v2147
    %v2150 = vlaneseq
    %v2151 = vshrl.u32 %v2150, 7
    %v2152 = vsub.s32 0, %v2151
    %v2153 = vrot.slane %v59, %v2152
    %v2154 = vadd.f32 %v2148, %v2153
    %v2155 = vadd.f32 %v2149, %v2153
    %v2156 = vld [vmem:[%s3] sm:$0xff]
    %v2157 = vld [vmem:[%s3 + $0x8] sm:$0xff]
    %v2158 = vld [vmem:[%s3 + $0x10] sm:$0xff]
    %v2159 = vld [vmem:[%s3 + $0x18] sm:$0xff]
    %v2160 = vlaneseq
    %v2161 = vshrl.u32 %v2160, 7
    %v2162 = vsub.s32 0, %v2161
    %v2163 = vrot.slane %v60, %v2162
    %v2165 = vsel %vm62, %v2154, 0
    %v2168 = vsel %vm62, %v2155, 0
    %2170 = vmatprep.subr.mxu0 0.0
    %2171 = vmatpush1.msra.mxu0 %v2156
    %2172 = vmatprep.subr.mxu0 0.0
    %2173 = vmatpush1.msra.mxu0 %v2157
    %2174 = vmatprep.subr.mxu0 0.0
    %2175 = vmatpush1.msra.mxu0 %v2158
    %2176 = vmatprep.subr.mxu0 0.0
    %2177 = vmatpush1.msra.mxu0 %v2159
    %2178 = vmatprep.subr.mxu0 0.0
    %2179 = vmatpush1.msra.mxu0 0.0
    %2180 = vmatprep.subr.mxu0 0.0
    %2181 = vmatpush1.msra.mxu0 0.0
    %2182 = vmatprep.subr.mxu0 0.0
    %2183 = vmatpush1.msra.mxu0 0.0
    %2184 = vmatprep.subr.mxu0 0.0
    %2185 = vmatpush1.msra.mxu0 0.0
    %2186 = vmatprep.subr.mxu0 0.0
    %2187 = vmatpush1.msra.mxu0 0.0
    %2188 = vmatprep.subr.mxu0 0.0
    %2189 = vmatpush1.msra.mxu0 0.0
    %2190 = vmatprep.subr.mxu0 0.0
    %2191 = vmatpush1.msra.mxu0 0.0
    %2192 = vmatprep.subr.mxu0 0.0
    %2193 = vmatpush1.msra.mxu0 0.0
    %2194 = vmatprep.subr.mxu0 0.0
    %2195 = vmatpush1.msra.mxu0 0.0
    %2196 = vmatprep.subr.mxu0 0.0
    %2197 = vmatpush1.msra.mxu0 0.0
    %2198 = vmatprep.subr.mxu0 0.0
    %2199 = vmatpush1.msra.mxu0 0.0
    %2200 = vmatprep.subr.mxu0 0.0
    %2201 = vmatpush1.msra.mxu0 0.0
    %2202 = vmatprep.subr.mxu0 0.0
    %2203 = vmatpush1.msra.mxu0 0.0
    %2204 = vmatprep.subr.mxu0 0.0
    %2205 = vmatpush1.msra.mxu0 0.0
    %2206 = vmatprep.subr.mxu0 0.0
    %2207 = vmatpush1.msra.mxu0 0.0
    %2208 = vmatprep.subr.mxu0 0.0
    %2209 = vmatpush1.msra.mxu0 0.0
    %2210 = vmatprep.subr.mxu0 0.0
    %2211 = vmatpush1.msra.mxu0 0.0
    %2212 = vmatprep.subr.mxu0 0.0
    %2213 = vmatpush1.msra.mxu0 0.0
    %2214 = vmatprep.subr.mxu0 0.0
    %2215 = vmatpush1.msra.mxu0 0.0
    %2216 = vmatprep.subr.mxu0 0.0
    %2217 = vmatpush1.msra.mxu0 0.0
    %2218 = vmatprep.subr.mxu0 0.0
    %2219 = vmatpush1.msra.mxu0 0.0
    %2220 = vmatprep.subr.mxu0 0.0
    %2221 = vmatpush1.msra.mxu0 0.0
    %2222 = vmatprep.subr.mxu0 0.0
    %2223 = vmatpush1.msra.mxu0 0.0
    %2224 = vmatprep.subr.mxu0 0.0
    %2225 = vmatpush1.msra.mxu0 0.0
    %2226 = vmatprep.subr.mxu0 0.0
    %2227 = vmatpush1.msra.mxu0 0.0
    %2228 = vmatprep.subr.mxu0 0.0
    %2229 = vmatpush1.msra.mxu0 0.0
    %2230 = vmatprep.subr.mxu0 0.0
    %2231 = vmatpush1.msra.mxu0 0.0
    %2232 = vmatprep.subr.mxu0 0.0
    %2233 = vmatpush1.msra.mxu0 0.0
    %2234 = vmatprep.mubr.f32.mxu0 0.0
    %2235 = vmatmul.mubr.f32.gmra.mrb[0].mxu0 %v2165
    %v2236 = vpop.f32.mrb[0].mxu0
    %v2237 = vadd.f32 %v2163, %v2236
    %v2238 = vpop.f32.mrb[0].mxu0
    %2239 = vmatprep.mubr.f32.mxu0 0.0
    %2240 = vmatmul.mubr.f32.gmra.mrb[0].mxu0 %v2168
    %v2241 = vpop.f32.mrb[0].mxu0
    %v2242 = vadd.f32 %v2163, %v2241
    %v2243 = vpop.f32.mrb[0].mxu0
    %2244 = vdwg.mxu0
    %v2245 = vmul.f32 %v2237, 0.5
    %v2246 = vmul.f32 %v2242, 0.5
    %v2247 = vmul.f32 %v2237, 0.70710677
    %v2248 = vmul.f32 %v2242, 0.70710677
    %v2249 = verf.f32.pop %v2247
    %v2250 = verf.f32.pop %v2248
    %v2251 = vadd.f32 %v2249, 1.0
    %v2252 = vadd.f32 %v2250, 1.0
    %v2253 = vmul.f32 %v2245, %v2251
    %v2254 = vmul.f32 %v2246, %v2252
    %v2255 = vld [vmem:[%s4] sm:$0xff]
    %v2256 = vld [vmem:[%s4 + $0x8] sm:$0xff]
    %v2257 = vld [vmem:[%s4 + $0x10] sm:$0xff]
    %v2258 = vld [vmem:[%s4 + $0x18] sm:$0xff]
    %v2259 = vld [vmem:[%s4 + $0x20] sm:$0xff]
    %v2260 = vld [vmem:[%s4 + $0x28] sm:$0xff]
    %v2261 = vld [vmem:[%s4 + $0x30] sm:$0xff]
    %v2262 = vld [vmem:[%s4 + $0x38] sm:$0xff]
    %v2263 = vlaneseq
    %v2264 = vshrl.u32 %v2263, 7
    %v2265 = vsub.s32 0, %v2264
    %v2266 = vrot.slane %v61, %v2265
    %vm2267 = vcmask 523264
    %v2269 = vsel %vm2267, %v2253, 0
    %v2272 = vsel %vm2267, %v2254, 0
    %2274 = vmatprep.subr.mxu0 0.0
    %2275 = vmatpush1.msra.mxu0 %v2255
    %2276 = vmatprep.subr.mxu0 0.0
    %2277 = vmatpush1.msra.mxu0 %v2256
    %2278 = vmatprep.subr.mxu0 0.0
    %2279 = vmatpush1.msra.mxu0 %v2257
    %2280 = vmatprep.subr.mxu0 0.0
    %2281 = vmatpush1.msra.mxu0 %v2258
    %2282 = vmatprep.subr.mxu0 0.0
    %2283 = vmatpush1.msra.mxu0 %v2259
    %2284 = vmatprep.subr.mxu0 0.0
    %2285 = vmatpush1.msra.mxu0 %v2260
    %2286 = vmatprep.subr.mxu0 0.0
    %2287 = vmatpush1.msra.mxu0 %v2261
    %2288 = vmatprep.subr.mxu0 0.0
    %2289 = vmatpush1.msra.mxu0 %v2262
    %2290 = vmatprep.subr.mxu0 0.0
    %2291 = vmatpush1.msra.mxu0 0.0
    %2292 = vmatprep.subr.mxu0 0.0
    %2293 = vmatpush1.msra.mxu0 0.0
    %2294 = vmatprep.subr.mxu0 0.0
    %2295 = vmatpush1.msra.mxu0 0.0
    %2296 = vmatprep.subr.mxu0 0.0
    %2297 = vmatpush1.msra.mxu0 0.0
    %2298 = vmatprep.subr.mxu0 0.0
    %2299 = vmatpush1.msra.mxu0 0.0
    %2300 = vmatprep.subr.mxu0 0.0
    %2301 = vmatpush1.msra.mxu0 0.0
    %2302 = vmatprep.subr.mxu0 0.0
    %2303 = vmatpush1.msra.mxu0 0.0
    %2304 = vmatprep.subr.mxu0 0.0
    %2305 = vmatpush1.msra.mxu0 0.0
    %2306 = vmatprep.subr.mxu0 0.0
    %2307 = vmatpush1.msra.mxu0 0.0
    %2308 = vmatprep.subr.mxu0 0.0
    %2309 = vmatpush1.msra.mxu0 0.0
    %2310 = vmatprep.subr.mxu0 0.0
    %2311 = vmatpush1.msra.mxu0 0.0
    %2312 = vmatprep.subr.mxu0 0.0
    %2313 = vmatpush1.msra.mxu0 0.0
    %2314 = vmatprep.subr.mxu0 0.0
    %2315 = vmatpush1.msra.mxu0 0.0
    %2316 = vmatprep.subr.mxu0 0.0
    %2317 = vmatpush1.msra.mxu0 0.0
    %2318 = vmatprep.subr.mxu0 0.0
    %2319 = vmatpush1.msra.mxu0 0.0
    %2320 = vmatprep.subr.mxu0 0.0
    %2321 = vmatpush1.msra.mxu0 0.0
    %2322 = vmatprep.subr.mxu0 0.0
    %2323 = vmatpush1.msra.mxu0 0.0
    %2324 = vmatprep.subr.mxu0 0.0
    %2325 = vmatpush1.msra.mxu0 0.0
    %2326 = vmatprep.subr.mxu0 0.0
    %2327 = vmatpush1.msra.mxu0 0.0
    %2328 = vmatprep.subr.mxu0 0.0
    %2329 = vmatpush1.msra.mxu0 0.0
    %2330 = vmatprep.subr.mxu0 0.0
    %2331 = vmatpush1.msra.mxu0 0.0
    %2332 = vmatprep.subr.mxu0 0.0
    %2333 = vmatpush1.msra.mxu0 0.0
    %2334 = vmatprep.subr.mxu0 0.0
    %2335 = vmatpush1.msra.mxu0 0.0
    %2336 = vmatprep.subr.mxu0 0.0
    %2337 = vmatpush1.msra.mxu0 0.0
    %2338 = vmatprep.mubr.f32.mxu0 0.0
    %2339 = vmatmul.mubr.f32.gmra.mrb[0].mxu0 %v2269
    %v2340 = vpop.f32.mrb[0].mxu0
    %v2341 = vadd.f32 %v2266, %v2340
    %v2342 = vpop.f32.mrb[0].mxu0
    %2343 = vmatprep.mubr.f32.mxu0 0.0
    %2344 = vmatmul.mubr.f32.gmra.mrb[0].mxu0 %v2272
    %v2345 = vpop.f32.mrb[0].mxu0
    %v2346 = vadd.f32 %v2266, %v2345
    %v2347 = vpop.f32.mrb[0].mxu0
    %2348 = vdwg.mxu0
    %v2349 = vadd.f32 %v2116, %v2341
    %v2350 = vadd.f32 %v2117, %v2346
    %v2351 = vld [vmem:[#allocation5 + $0x8] sm:$0x1]
    %v2352 = vld [vmem:[#allocation5 + $0x9] sm:$0x1]
    %v2353 = vld [vmem:[#allocation5 + $0xa] sm:$0x1]
    %v2354 = vld [vmem:[#allocation5 + $0xb] sm:$0x1]
    %v2355 = vld [vmem:[#allocation5 + $0xc] sm:$0x1]
    %v2356 = vld [vmem:[#allocation5 + $0xd] sm:$0x1]
    %v2357 = vld [vmem:[#allocation5 + $0xe] sm:$0x1]
    %v2358 = vld [vmem:[#allocation5 + $0xf] sm:$0x1]
    %v2359 = vsel %vm62, %v2349, 0.0
    %2360 = vadd.xlane.f32.xlu0 %v2359
    %v2361 = vpop.xlane.xlu0 %2360
    %v2362 = vsel %vm62, %v2350, 0.0
    %2363 = vadd.xlane.f32.xlu0 %v2362
    %v2364 = vpop.xlane.xlu0 %2363
    %v2365 = vmul.f32 %v2361, %v69
    %v2366 = vmul.f32 %v2364, %v69
    %v2367 = vsub.f32 %v2349, %v2365
    %v2368 = vsub.f32 %v2350, %v2366
    %v2369 = vmul.f32 %v2367, %v2367
    %v2370 = vmul.f32 %v2368, %v2368
    %v2371 = vsel %vm62, %v2369, 0.0
    %2372 = vadd.xlane.f32.xlu0 %v2371
    %v2373 = vpop.xlane.xlu0 %2372
    %v2374 = vsel %vm62, %v2370, 0.0
    %2375 = vadd.xlane.f32.xlu0 %v2374
    %v2376 = vpop.xlane.xlu0 %2375
    %v2377 = vmul.f32 %v2373, %v69
    %v2378 = vmul.f32 %v2376, %v69
    %v2379 = vadd.f32 %v2377, 1e-06
    %v2380 = vadd.f32 %v2378, 1e-06
    %v2381 = vrsqrt.pop %v2379
    %v2382 = vrsqrt.pop %v2380
    %v2383 = vmul.f32 %v2367, %v2381
    %v2384 = vmul.f32 %v2368, %v2382
    %v2385 = vlaneseq
    %v2386 = vshrl.u32 %v2385, 7
    %v2387 = vsub.s32 0, %v2386
    %v2388 = vrot.slane %v2353, %v2387
    %v2389 = vmul.f32 %v2383, %v2388
    %v2390 = vmul.f32 %v2384, %v2388
    %v2391 = vlaneseq
    %v2392 = vshrl.u32 %v2391, 7
    %v2393 = vsub.s32 0, %v2392
    %v2394 = vrot.slane %v2354, %v2393
    %v2395 = vadd.f32 %v2389, %v2394
    %v2396 = vadd.f32 %v2390, %v2394
    %s2397 = scalar_lea.vmem %s1, 32
    %v2398 = vld [vmem:[%s2397] sm:$0xff]
    %v2399 = vld [vmem:[%s2397 + $0x8] sm:$0xff]
    %v2400 = vld [vmem:[%s2397 + $0x10] sm:$0xff]
    %v2401 = vld [vmem:[%s2397 + $0x18] sm:$0xff]
    %v2402 = vlaneseq
    %v2403 = vshrl.u32 %v2402, 7
    %v2404 = vsub.s32 0, %v2403
    %v2405 = vrot.slane %v2351, %v2404
    %v2407 = vsel %vm62, %v2395, 0
    %v2410 = vsel %vm62, %v2396, 0
    %2412 = vmatprep.subr.mxu0 0.0
    %2413 = vmatpush1.msra.mxu0 %v2398
    %2414 = vmatprep.subr.mxu0 0.0
    %2415 = vmatpush1.msra.mxu0 %v2399
    %2416 = vmatprep.subr.mxu0 0.0
    %2417 = vmatpush1.msra.mxu0 %v2400
    %2418 = vmatprep.subr.mxu0 0.0
    %2419 = vmatpush1.msra.mxu0 %v2401
    %2420 = vmatprep.subr.mxu0 0.0
    %2421 = vmatpush1.msra.mxu0 0.0
    %2422 = vmatprep.subr.mxu0 0.0
    %2423 = vmatpush1.msra.mxu0 0.0
    %2424 = vmatprep.subr.mxu0 0.0
    %2425 = vmatpush1.msra.mxu0 0.0
    %2426 = vmatprep.subr.mxu0 0.0
    %2427 = vmatpush1.msra.mxu0 0.0
    %2428 = vmatprep.subr.mxu0 0.0
    %2429 = vmatpush1.msra.mxu0 0.0
    %2430 = vmatprep.subr.mxu0 0.0
    %2431 = vmatpush1.msra.mxu0 0.0
    %2432 = vmatprep.subr.mxu0 0.0
    %2433 = vmatpush1.msra.mxu0 0.0
    %2434 = vmatprep.subr.mxu0 0.0
    %2435 = vmatpush1.msra.mxu0 0.0
    %2436 = vmatprep.subr.mxu0 0.0
    %2437 = vmatpush1.msra.mxu0 0.0
    %2438 = vmatprep.subr.mxu0 0.0
    %2439 = vmatpush1.msra.mxu0 0.0
    %2440 = vmatprep.subr.mxu0 0.0
    %2441 = vmatpush1.msra.mxu0 0.0
    %2442 = vmatprep.subr.mxu0 0.0
    %2443 = vmatpush1.msra.mxu0 0.0
    %2444 = vmatprep.subr.mxu0 0.0
    %2445 = vmatpush1.msra.mxu0 0.0
    %2446 = vmatprep.subr.mxu0 0.0
    %2447 = vmatpush1.msra.mxu0 0.0
    %2448 = vmatprep.subr.mxu0 0.0
    %2449 = vmatpush1.msra.mxu0 0.0
    %2450 = vmatprep.subr.mxu0 0.0
    %2451 = vmatpush1.msra.mxu0 0.0
    %2452 = vmatprep.subr.mxu0 0.0
    %2453 = vmatpush1.msra.mxu0 0.0
    %2454 = vmatprep.subr.mxu0 0.0
    %2455 = vmatpush1.msra.mxu0 0.0
    %2456 = vmatprep.subr.mxu0 0.0
    %2457 = vmatpush1.msra.mxu0 0.0
    %2458 = vmatprep.subr.mxu0 0.0
    %2459 = vmatpush1.msra.mxu0 0.0
    %2460 = vmatprep.subr.mxu0 0.0
    %2461 = vmatpush1.msra.mxu0 0.0
    %2462 = vmatprep.subr.mxu0 0.0
    %2463 = vmatpush1.msra.mxu0 0.0
    %2464 = vmatprep.subr.mxu0 0.0
    %2465 = vmatpush1.msra.mxu0 0.0
    %2466 = vmatprep.subr.mxu0 0.0
    %2467 = vmatpush1.msra.mxu0 0.0
    %2468 = vmatprep.subr.mxu0 0.0
    %2469 = vmatpush1.msra.mxu0 0.0
    %2470 = vmatprep.subr.mxu0 0.0
    %2471 = vmatpush1.msra.mxu0 0.0
    %2472 = vmatprep.subr.mxu0 0.0
    %2473 = vmatpush1.msra.mxu0 0.0
    %2474 = vmatprep.subr.mxu0 0.0
    %2475 = vmatpush1.msra.mxu0 0.0
    %2476 = vmatprep.mubr.f32.mxu0 0.0
    %2477 = vmatmul.mubr.f32.gmra.mrb[0].mxu0 %v2407
    %v2478 = vpop.f32.mrb[0].mxu0
    %v2479 = vadd.f32 %v2405, %v2478
    %v2480 = vpop.f32.mrb[0].mxu0
    %2481 = vmatprep.mubr.f32.mxu0 0.0
    %2482 = vmatmul.mubr.f32.gmra.mrb[0].mxu0 %v2410
    %v2483 = vpop.f32.mrb[0].mxu0
    %v2484 = vadd.f32 %v2405, %v2483
    %v2485 = vpop.f32.mrb[0].mxu0
    %2486 = vdwg.mxu0
    %s2487 = scalar_lea.vmem %s2, 32
    %v2488 = vld [vmem:[%s2487] sm:$0xff]
    %v2489 = vld [vmem:[%s2487 + $0x8] sm:$0xff]
    %v2490 = vld [vmem:[%s2487 + $0x10] sm:$0xff]
    %v2491 = vld [vmem:[%s2487 + $0x18] sm:$0xff]
    %2493 = vrot.lane.b32.xlu0 %v2479, 96
    %v2494 = vpop.permute.xlu0 %2493
    %v2495 = vsel %vm198, %v2479, 0
    %v2497 = vsel %vm198, %v2494, 0
    %2499 = vmatprep.subr.mxu0 0.0
    %2500 = vmatpush1.xpose.msra.mxu0 %v2497
    %2501 = vmatprep.subr.mxu0 0.0
    %2502 = vmatpush1.xpose.msra.mxu0 0.0
    %2503 = vmatprep.subr.mxu0 0.0
    %2504 = vmatpush1.xpose.msra.mxu0 0.0
    %2505 = vmatprep.subr.mxu0 0.0
    %2506 = vmatpush1.xpose.msra.mxu0 0.0
    %2507 = vmatprep.subr.mxu0 0.0
    %2508 = vmatpush1.xpose.msra.mxu0 0.0
    %2509 = vmatprep.subr.mxu0 0.0
    %2510 = vmatpush1.xpose.msra.mxu0 0.0
    %2511 = vmatprep.subr.mxu0 0.0
    %2512 = vmatpush1.xpose.msra.mxu0 0.0
    %2513 = vmatprep.subr.mxu0 0.0
    %2514 = vmatpush1.xpose.msra.mxu0 0.0
    %2515 = vmatprep.subr.mxu0 0.0
    %2516 = vmatpush1.xpose.msra.mxu0 0.0
    %2517 = vmatprep.subr.mxu0 0.0
    %2518 = vmatpush1.xpose.msra.mxu0 0.0
    %2519 = vmatprep.subr.mxu0 0.0
    %2520 = vmatpush1.xpose.msra.mxu0 0.0
    %2521 = vmatprep.subr.mxu0 0.0
    %2522 = vmatpush1.xpose.msra.mxu0 0.0
    %2523 = vmatprep.subr.mxu0 0.0
    %2524 = vmatpush1.xpose.msra.mxu0 0.0
    %2525 = vmatprep.subr.mxu0 0.0
    %2526 = vmatpush1.xpose.msra.mxu0 0.0
    %2527 = vmatprep.subr.mxu0 0.0
    %2528 = vmatpush1.xpose.msra.mxu0 0.0
    %2529 = vmatprep.subr.mxu0 0.0
    %2530 = vmatpush1.xpose.msra.mxu0 0.0
    %2531 = vmatprep.subr.mxu0 0.0
    %2532 = vmatpush1.xpose.msra.mxu0 0.0
    %2533 = vmatprep.subr.mxu0 0.0
    %2534 = vmatpush1.xpose.msra.mxu0 0.0
    %2535 = vmatprep.subr.mxu0 0.0
    %2536 = vmatpush1.xpose.msra.mxu0 0.0
    %2537 = vmatprep.subr.mxu0 0.0
    %2538 = vmatpush1.xpose.msra.mxu0 0.0
    %2539 = vmatprep.subr.mxu0 0.0
    %2540 = vmatpush1.xpose.msra.mxu0 0.0
    %2541 = vmatprep.subr.mxu0 0.0
    %2542 = vmatpush1.xpose.msra.mxu0 0.0
    %2543 = vmatprep.subr.mxu0 0.0
    %2544 = vmatpush1.xpose.msra.mxu0 0.0
    %2545 = vmatprep.subr.mxu0 0.0
    %2546 = vmatpush1.xpose.msra.mxu0 0.0
    %2547 = vmatprep.subr.mxu0 0.0
    %2548 = vmatpush1.xpose.msra.mxu0 0.0
    %2549 = vmatprep.subr.mxu0 0.0
    %2550 = vmatpush1.xpose.msra.mxu0 0.0
    %2551 = vmatprep.subr.mxu0 0.0
    %2552 = vmatpush1.xpose.msra.mxu0 0.0
    %2553 = vmatprep.subr.mxu0 0.0
    %2554 = vmatpush1.xpose.msra.mxu0 0.0
    %2555 = vmatprep.subr.mxu0 0.0
    %2556 = vmatpush1.xpose.msra.mxu0 0.0
    %2557 = vmatprep.subr.mxu0 0.0
    %2558 = vmatpush1.xpose.msra.mxu0 0.0
    %2559 = vmatprep.subr.mxu0 0.0
    %2560 = vmatpush1.xpose.msra.mxu0 0.0
    %2561 = vmatprep.subr.mxu0 0.0
    %2562 = vmatpush1.xpose.msra.mxu0 0.0
    %2563 = vmatprep.mubr.f32.mxu0 0.0
    %2564 = vmatmul.mubr.f32.gmra.mrb[0].mxu0 %v2495
    %v2565 = vpop.f32.mrb[0].mxu0
    %v2566 = vadd.f32 0.0, %v2565
    %v2567 = vpop.f32.mrb[0].mxu0
    %2568 = vdwg.mxu0
    %v2569 = vmul.f32 %v2566, 0.35355338
    %v2570 = vsel %vm198, %v2569, -inf
    %2571 = vmax.xlane.f32.xlu0 %v2570
    %v2572 = vpop.xlane.xlu0 %2571
    %v2573 = vsub.f32 %v2569, %v2572
    %v2574 = vmul.f32 %v2573, 1.442695
    %v2575 = vpow.pop %v2574
    %v2576 = vsel %vm198, %v2575, 0.0
    %2577 = vadd.xlane.f32.xlu0 %v2576
    %v2578 = vpop.xlane.xlu0 %2577
    %v2579 = vrcp.pop %v2578
    %v2580 = vmul.f32 %v2575, %v2579
    %2581 = vrot.lane.b32.xlu0 %v2479, 64
    %v2582 = vpop.permute.xlu0 %2581
    %v2585 = vsel %vm198, %v2580, 0
    %2587 = vmatprep.subr.mxu0 0.0
    %2588 = vmatpush1.msra.mxu0 %v2582
    %2589 = vmatprep.subr.mxu0 0.0
    %2590 = vmatpush1.msra.mxu0 0.0
    %2591 = vmatprep.subr.mxu0 0.0
    %2592 = vmatpush1.msra.mxu0 0.0
    %2593 = vmatprep.subr.mxu0 0.0
    %2594 = vmatpush1.msra.mxu0 0.0
    %2595 = vmatprep.subr.mxu0 0.0
    %2596 = vmatpush1.msra.mxu0 0.0
    %2597 = vmatprep.subr.mxu0 0.0
    %2598 = vmatpush1.msra.mxu0 0.0
    %2599 = vmatprep.subr.mxu0 0.0
    %2600 = vmatpush1.msra.mxu0 0.0
    %2601 = vmatprep.subr.mxu0 0.0
    %2602 = vmatpush1.msra.mxu0 0.0
    %2603 = vmatprep.subr.mxu0 0.0
    %2604 = vmatpush1.msra.mxu0 0.0
    %2605 = vmatprep.subr.mxu0 0.0
    %2606 = vmatpush1.msra.mxu0 0.0
    %2607 = vmatprep.subr.mxu0 0.0
    %2608 = vmatpush1.msra.mxu0 0.0
    %2609 = vmatprep.subr.mxu0 0.0
    %2610 = vmatpush1.msra.mxu0 0.0
    %2611 = vmatprep.subr.mxu0 0.0
    %2612 = vmatpush1.msra.mxu0 0.0
    %2613 = vmatprep.subr.mxu0 0.0
    %2614 = vmatpush1.msra.mxu0 0.0
    %2615 = vmatprep.subr.mxu0 0.0
    %2616 = vmatpush1.msra.mxu0 0.0
    %2617 = vmatprep.subr.mxu0 0.0
    %2618 = vmatpush1.msra.mxu0 0.0
    %2619 = vmatprep.subr.mxu0 0.0
    %2620 = vmatpush1.msra.mxu0 0.0
    %2621 = vmatprep.subr.mxu0 0.0
    %2622 = vmatpush1.msra.mxu0 0.0
    %2623 = vmatprep.subr.mxu0 0.0
    %2624 = vmatpush1.msra.mxu0 0.0
    %2625 = vmatprep.subr.mxu0 0.0
    %2626 = vmatpush1.msra.mxu0 0.0
    %2627 = vmatprep.subr.mxu0 0.0
    %2628 = vmatpush1.msra.mxu0 0.0
    %2629 = vmatprep.subr.mxu0 0.0
    %2630 = vmatpush1.msra.mxu0 0.0
    %2631 = vmatprep.subr.mxu0 0.0
    %2632 = vmatpush1.msra.mxu0 0.0
    %2633 = vmatprep.subr.mxu0 0.0
    %2634 = vmatpush1.msra.mxu0 0.0
    %2635 = vmatprep.subr.mxu0 0.0
    %2636 = vmatpush1.msra.mxu0 0.0
    %2637 = vmatprep.subr.mxu0 0.0
    %2638 = vmatpush1.msra.mxu0 0.0
    %2639 = vmatprep.subr.mxu0 0.0
    %2640 = vmatpush1.msra.mxu0 0.0
    %2641 = vmatprep.subr.mxu0 0.0
    %2642 = vmatpush1.msra.mxu0 0.0
    %2643 = vmatprep.subr.mxu0 0.0
    %2644 = vmatpush1.msra.mxu0 0.0
    %2645 = vmatprep.subr.mxu0 0.0
    %2646 = vmatpush1.msra.mxu0 0.0
    %2647 = vmatprep.subr.mxu0 0.0
    %2648 = vmatpush1.msra.mxu0 0.0
    %2649 = vmatprep.subr.mxu0 0.0
    %2650 = vmatpush1.msra.mxu0 0.0
    %2651 = vmatprep.mubr.f32.mxu0 0.0
    %2652 = vmatmul.mubr.f32.gmra.mrb[0].mxu0 %v2585
    %v2653 = vpop.f32.mrb[0].mxu0
    %v2654 = vadd.f32 0.0, %v2653
    %v2655 = vpop.f32.mrb[0].mxu0
    %2656 = vdwg.mxu0
    %2657 = vrot.lane.b32.xlu0 %v2479, 120
    %v2658 = vpop.permute.xlu0 %2657
    %2659 = vrot.lane.b32.xlu0 %v2479, 88
    %v2660 = vpop.permute.xlu0 %2659
    %v2661 = vsel %vm198, %v2658, 0
    %v2663 = vsel %vm198, %v2660, 0
    %2665 = vmatprep.subr.mxu0 0.0
    %2666 = vmatpush1.xpose.msra.mxu0 %v2663
    %2667 = vmatprep.subr.mxu0 0.0
    %2668 = vmatpush1.xpose.msra.mxu0 0.0
    %2669 = vmatprep.subr.mxu0 0.0
    %2670 = vmatpush1.xpose.msra.mxu0 0.0
    %2671 = vmatprep.subr.mxu0 0.0
    %2672 = vmatpush1.xpose.msra.mxu0 0.0
    %2673 = vmatprep.subr.mxu0 0.0
    %2674 = vmatpush1.xpose.msra.mxu0 0.0
    %2675 = vmatprep.subr.mxu0 0.0
    %2676 = vmatpush1.xpose.msra.mxu0 0.0
    %2677 = vmatprep.subr.mxu0 0.0
    %2678 = vmatpush1.xpose.msra.mxu0 0.0
    %2679 = vmatprep.subr.mxu0 0.0
    %2680 = vmatpush1.xpose.msra.mxu0 0.0
    %2681 = vmatprep.subr.mxu0 0.0
    %2682 = vmatpush1.xpose.msra.mxu0 0.0
    %2683 = vmatprep.subr.mxu0 0.0
    %2684 = vmatpush1.xpose.msra.mxu0 0.0
    %2685 = vmatprep.subr.mxu0 0.0
    %2686 = vmatpush1.xpose.msra.mxu0 0.0
    %2687 = vmatprep.subr.mxu0 0.0
    %2688 = vmatpush1.xpose.msra.mxu0 0.0
    %2689 = vmatprep.subr.mxu0 0.0
    %2690 = vmatpush1.xpose.msra.mxu0 0.0
    %2691 = vmatprep.subr.mxu0 0.0
    %2692 = vmatpush1.xpose.msra.mxu0 0.0
    %2693 = vmatprep.subr.mxu0 0.0
    %2694 = vmatpush1.xpose.msra.mxu0 0.0
    %2695 = vmatprep.subr.mxu0 0.0
    %2696 = vmatpush1.xpose.msra.mxu0 0.0
    %2697 = vmatprep.subr.mxu0 0.0
    %2698 = vmatpush1.xpose.msra.mxu0 0.0
    %2699 = vmatprep.subr.mxu0 0.0
    %2700 = vmatpush1.xpose.msra.mxu0 0.0
    %2701 = vmatprep.subr.mxu0 0.0
    %2702 = vmatpush1.xpose.msra.mxu0 0.0
    %2703 = vmatprep.subr.mxu0 0.0
    %2704 = vmatpush1.xpose.msra.mxu0 0.0
    %2705 = vmatprep.subr.mxu0 0.0
    %2706 = vmatpush1.xpose.msra.mxu0 0.0
    %2707 = vmatprep.subr.mxu0 0.0
    %2708 = vmatpush1.xpose.msra.mxu0 0.0
    %2709 = vmatprep.subr.mxu0 0.0
    %2710 = vmatpush1.xpose.msra.mxu0 0.0
    %2711 = vmatprep.subr.mxu0 0.0
    %2712 = vmatpush1.xpose.msra.mxu0 0.0
    %2713 = vmatprep.subr.mxu0 0.0
    %2714 = vmatpush1.xpose.msra.mxu0 0.0
    %2715 = vmatprep.subr.mxu0 0.0
    %2716 = vmatpush1.xpose.msra.mxu0 0.0
    %2717 = vmatprep.subr.mxu0 0.0
    %2718 = vmatpush1.xpose.msra.mxu0 0.0
    %2719 = vmatprep.subr.mxu0 0.0
    %2720 = vmatpush1.xpose.msra.mxu0 0.0
    %2721 = vmatprep.subr.mxu0 0.0
    %2722 = vmatpush1.xpose.msra.mxu0 0.0
    %2723 = vmatprep.subr.mxu0 0.0
    %2724 = vmatpush1.xpose.msra.mxu0 0.0
    %2725 = vmatprep.subr.mxu0 0.0
    %2726 = vmatpush1.xpose.msra.mxu0 0.0
    %2727 = vmatprep.subr.mxu0 0.0
    %2728 = vmatpush1.xpose.msra.mxu0 0.0
    %2729 = vmatprep.mubr.f32.mxu0 0.0
    %2730 = vmatmul.mubr.f32.gmra.mrb[0].mxu0 %v2661
    %v2731 = vpop.f32.mrb[0].mxu0
    %v2732 = vadd.f32 0.0, %v2731
    %v2733 = vpop.f32.mrb[0].mxu0
    %2734 = vdwg.mxu0
    %v2735 = vmul.f32 %v2732, 0.35355338
    %v2736 = vsel %vm198, %v2735, -inf
    %2737 = vmax.xlane.f32.xlu0 %v2736
    %v2738 = vpop.xlane.xlu0 %2737
    %v2739 = vsub.f32 %v2735, %v2738
    %v2740 = vmul.f32 %v2739, 1.442695
    %v2741 = vpow.pop %v2740
    %v2742 = vsel %vm198, %v2741, 0.0
    %2743 = vadd.xlane.f32.xlu0 %v2742
    %v2744 = vpop.xlane.xlu0 %2743
    %v2745 = vrcp.pop %v2744
    %v2746 = vmul.f32 %v2741, %v2745
    %2747 = vrot.lane.b32.xlu0 %v2479, 56
    %v2748 = vpop.permute.xlu0 %2747
    %v2751 = vsel %vm198, %v2746, 0
    %2753 = vmatprep.subr.mxu0 0.0
    %2754 = vmatpush1.msra.mxu0 %v2748
    %2755 = vmatprep.subr.mxu0 0.0
    %2756 = vmatpush1.msra.mxu0 0.0
    %2757 = vmatprep.subr.mxu0 0.0
    %2758 = vmatpush1.msra.mxu0 0.0
    %2759 = vmatprep.subr.mxu0 0.0
    %2760 = vmatpush1.msra.mxu0 0.0
    %2761 = vmatprep.subr.mxu0 0.0
    %2762 = vmatpush1.msra.mxu0 0.0
    %2763 = vmatprep.subr.mxu0 0.0
    %2764 = vmatpush1.msra.mxu0 0.0
    %2765 = vmatprep.subr.mxu0 0.0
    %2766 = vmatpush1.msra.mxu0 0.0
    %2767 = vmatprep.subr.mxu0 0.0
    %2768 = vmatpush1.msra.mxu0 0.0
    %2769 = vmatprep.subr.mxu0 0.0
    %2770 = vmatpush1.msra.mxu0 0.0
    %2771 = vmatprep.subr.mxu0 0.0
    %2772 = vmatpush1.msra.mxu0 0.0
    %2773 = vmatprep.subr.mxu0 0.0
    %2774 = vmatpush1.msra.mxu0 0.0
    %2775 = vmatprep.subr.mxu0 0.0
    %2776 = vmatpush1.msra.mxu0 0.0
    %2777 = vmatprep.subr.mxu0 0.0
    %2778 = vmatpush1.msra.mxu0 0.0
    %2779 = vmatprep.subr.mxu0 0.0
    %2780 = vmatpush1.msra.mxu0 0.0
    %2781 = vmatprep.subr.mxu0 0.0
    %2782 = vmatpush1.msra.mxu0 0.0
    %2783 = vmatprep.subr.mxu0 0.0
    %2784 = vmatpush1.msra.mxu0 0.0
    %2785 = vmatprep.subr.mxu0 0.0
    %2786 = vmatpush1.msra.mxu0 0.0
    %2787 = vmatprep.subr.mxu0 0.0
    %2788 = vmatpush1.msra.mxu0 0.0
    %2789 = vmatprep.subr.mxu0 0.0
    %2790 = vmatpush1.msra.mxu0 0.0
    %2791 = vmatprep.subr.mxu0 0.0
    %2792 = vmatpush1.msra.mxu0 0.0
    %2793 = vmatprep.subr.mxu0 0.0
    %2794 = vmatpush1.msra.mxu0 0.0
    %2795 = vmatprep.subr.mxu0 0.0
    %2796 = vmatpush1.msra.mxu0 0.0
    %2797 = vmatprep.subr.mxu0 0.0
    %2798 = vmatpush1.msra.mxu0 0.0
    %2799 = vmatprep.subr.mxu0 0.0
    %2800 = vmatpush1.msra.mxu0 0.0
    %2801 = vmatprep.subr.mxu0 0.0
    %2802 = vmatpush1.msra.mxu0 0.0
    %2803 = vmatprep.subr.mxu0 0.0
    %2804 = vmatpush1.msra.mxu0 0.0
    %2805 = vmatprep.subr.mxu0 0.0
    %2806 = vmatpush1.msra.mxu0 0.0
    %2807 = vmatprep.subr.mxu0 0.0
    %2808 = vmatpush1.msra.mxu0 0.0
    %2809 = vmatprep.subr.mxu0 0.0
    %2810 = vmatpush1.msra.mxu0 0.0
    %2811 = vmatprep.subr.mxu0 0.0
    %2812 = vmatpush1.msra.mxu0 0.0
    %2813 = vmatprep.subr.mxu0 0.0
    %2814 = vmatpush1.msra.mxu0 0.0
    %2815 = vmatprep.subr.mxu0 0.0
    %2816 = vmatpush1.msra.mxu0 0.0
    %2817 = vmatprep.mubr.f32.mxu0 0.0
    %2818 = vmatmul.mubr.f32.gmra.mrb[0].mxu0 %v2751
    %v2819 = vpop.f32.mrb[0].mxu0
    %v2820 = vadd.f32 0.0, %v2819
    %v2821 = vpop.f32.mrb[0].mxu0
    %2822 = vdwg.mxu0
    %v2824 = vsel %vm198, %v2820, 0
    %2826 = vmatprep.subr.mxu0 0.0
    %2827 = vmatpush1.msra.mxu0 %v2489
    %2828 = vmatprep.subr.mxu0 0.0
    %2829 = vmatpush1.msra.mxu0 0.0
    %2830 = vmatprep.subr.mxu0 0.0
    %2831 = vmatpush1.msra.mxu0 0.0
    %2832 = vmatprep.subr.mxu0 0.0
    %2833 = vmatpush1.msra.mxu0 0.0
    %2834 = vmatprep.subr.mxu0 0.0
    %2835 = vmatpush1.msra.mxu0 0.0
    %2836 = vmatprep.subr.mxu0 0.0
    %2837 = vmatpush1.msra.mxu0 0.0
    %2838 = vmatprep.subr.mxu0 0.0
    %2839 = vmatpush1.msra.mxu0 0.0
    %2840 = vmatprep.subr.mxu0 0.0
    %2841 = vmatpush1.msra.mxu0 0.0
    %2842 = vmatprep.subr.mxu0 0.0
    %2843 = vmatpush1.msra.mxu0 0.0
    %2844 = vmatprep.subr.mxu0 0.0
    %2845 = vmatpush1.msra.mxu0 0.0
    %2846 = vmatprep.subr.mxu0 0.0
    %2847 = vmatpush1.msra.mxu0 0.0
    %2848 = vmatprep.subr.mxu0 0.0
    %2849 = vmatpush1.msra.mxu0 0.0
    %2850 = vmatprep.subr.mxu0 0.0
    %2851 = vmatpush1.msra.mxu0 0.0
    %2852 = vmatprep.subr.mxu0 0.0
    %2853 = vmatpush1.msra.mxu0 0.0
    %2854 = vmatprep.subr.mxu0 0.0
    %2855 = vmatpush1.msra.mxu0 0.0
    %2856 = vmatprep.subr.mxu0 0.0
    %2857 = vmatpush1.msra.mxu0 0.0
    %2858 = vmatprep.subr.mxu0 0.0
    %2859 = vmatpush1.msra.mxu0 0.0
    %2860 = vmatprep.subr.mxu0 0.0
    %2861 = vmatpush1.msra.mxu0 0.0
    %2862 = vmatprep.subr.mxu0 0.0
    %2863 = vmatpush1.msra.mxu0 0.0
    %2864 = vmatprep.subr.mxu0 0.0
    %2865 = vmatpush1.msra.mxu0 0.0
    %2866 = vmatprep.subr.mxu0 0.0
    %2867 = vmatpush1.msra.mxu0 0.0
    %2868 = vmatprep.subr.mxu0 0.0
    %2869 = vmatpush1.msra.mxu0 0.0
    %2870 = vmatprep.subr.mxu0 0.0
    %2871 = vmatpush1.msra.mxu0 0.0
    %2872 = vmatprep.subr.mxu0 0.0
    %2873 = vmatpush1.msra.mxu0 0.0
    %2874 = vmatprep.subr.mxu0 0.0
    %2875 = vmatpush1.msra.mxu0 0.0
    %2876 = vmatprep.subr.mxu0 0.0
    %2877 = vmatpush1.msra.mxu0 0.0
    %2878 = vmatprep.subr.mxu0 0.0
    %2879 = vmatpush1.msra.mxu0 0.0
    %2880 = vmatprep.subr.mxu0 0.0
    %2881 = vmatpush1.msra.mxu0 0.0
    %2882 = vmatprep.subr.mxu0 0.0
    %2883 = vmatpush1.msra.mxu0 0.0
    %2884 = vmatprep.subr.mxu0 0.0
    %2885 = vmatpush1.msra.mxu0 0.0
    %2886 = vmatprep.subr.mxu0 0.0
    %2887 = vmatpush1.msra.mxu0 0.0
    %2888 = vmatprep.subr.mxu0 0.0
    %2889 = vmatpush1.msra.mxu0 0.0
    %2890 = vmatprep.mubr.f32.mxu0 0.0
    %2891 = vmatmul.mubr.f32.gmra.mrb[0].mxu0 %v2824
    %v2892 = vpop.f32.mrb[0].mxu0
    %v2893 = vadd.f32 0.0, %v2892
    %v2894 = vpop.f32.mrb[0].mxu0
    %2895 = vdwg.mxu0
    %v2897 = vsel %vm198, %v2654, 0
    %2899 = vmatprep.subr.mxu0 0.0
    %2900 = vmatpush1.msra.mxu0 %v2488
    %2901 = vmatprep.subr.mxu0 0.0
    %2902 = vmatpush1.msra.mxu0 0.0
    %2903 = vmatprep.subr.mxu0 0.0
    %2904 = vmatpush1.msra.mxu0 0.0
    %2905 = vmatprep.subr.mxu0 0.0
    %2906 = vmatpush1.msra.mxu0 0.0
    %2907 = vmatprep.subr.mxu0 0.0
    %2908 = vmatpush1.msra.mxu0 0.0
    %2909 = vmatprep.subr.mxu0 0.0
    %2910 = vmatpush1.msra.mxu0 0.0
    %2911 = vmatprep.subr.mxu0 0.0
    %2912 = vmatpush1.msra.mxu0 0.0
    %2913 = vmatprep.subr.mxu0 0.0
    %2914 = vmatpush1.msra.mxu0 0.0
    %2915 = vmatprep.subr.mxu0 0.0
    %2916 = vmatpush1.msra.mxu0 0.0
    %2917 = vmatprep.subr.mxu0 0.0
    %2918 = vmatpush1.msra.mxu0 0.0
    %2919 = vmatprep.subr.mxu0 0.0
    %2920 = vmatpush1.msra.mxu0 0.0
    %2921 = vmatprep.subr.mxu0 0.0
    %2922 = vmatpush1.msra.mxu0 0.0
    %2923 = vmatprep.subr.mxu0 0.0
    %2924 = vmatpush1.msra.mxu0 0.0
    %2925 = vmatprep.subr.mxu0 0.0
    %2926 = vmatpush1.msra.mxu0 0.0
    %2927 = vmatprep.subr.mxu0 0.0
    %2928 = vmatpush1.msra.mxu0 0.0
    %2929 = vmatprep.subr.mxu0 0.0
    %2930 = vmatpush1.msra.mxu0 0.0
    %2931 = vmatprep.subr.mxu0 0.0
    %2932 = vmatpush1.msra.mxu0 0.0
    %2933 = vmatprep.subr.mxu0 0.0
    %2934 = vmatpush1.msra.mxu0 0.0
    %2935 = vmatprep.subr.mxu0 0.0
    %2936 = vmatpush1.msra.mxu0 0.0
    %2937 = vmatprep.subr.mxu0 0.0
    %2938 = vmatpush1.msra.mxu0 0.0
    %2939 = vmatprep.subr.mxu0 0.0
    %2940 = vmatpush1.msra.mxu0 0.0
    %2941 = vmatprep.subr.mxu0 0.0
    %2942 = vmatpush1.msra.mxu0 0.0
    %2943 = vmatprep.subr.mxu0 0.0
    %2944 = vmatpush1.msra.mxu0 0.0
    %2945 = vmatprep.subr.mxu0 0.0
    %2946 = vmatpush1.msra.mxu0 0.0
    %2947 = vmatprep.subr.mxu0 0.0
    %2948 = vmatpush1.msra.mxu0 0.0
    %2949 = vmatprep.subr.mxu0 0.0
    %2950 = vmatpush1.msra.mxu0 0.0
    %2951 = vmatprep.subr.mxu0 0.0
    %2952 = vmatpush1.msra.mxu0 0.0
    %2953 = vmatprep.subr.mxu0 0.0
    %2954 = vmatpush1.msra.mxu0 0.0
    %2955 = vmatprep.subr.mxu0 0.0
    %2956 = vmatpush1.msra.mxu0 0.0
    %2957 = vmatprep.subr.mxu0 0.0
    %2958 = vmatpush1.msra.mxu0 0.0
    %2959 = vmatprep.subr.mxu0 0.0
    %2960 = vmatpush1.msra.mxu0 0.0
    %2961 = vmatprep.subr.mxu0 0.0
    %2962 = vmatpush1.msra.mxu0 0.0
    %2963 = vmatprep.mubr.f32.mxu0 0.0
    %2964 = vmatmul.mubr.f32.gmra.mrb[0].mxu0 %v2897
    %v2965 = vpop.f32.mrb[0].mxu0
    %v2966 = vadd.f32 %v2893, %v2965
    %v2967 = vpop.f32.mrb[0].mxu0
    %2968 = vdwg.mxu0
    %2969 = vrot.lane.b32.xlu0 %v2479, 112
    %v2970 = vpop.permute.xlu0 %2969
    %2971 = vrot.lane.b32.xlu0 %v2479, 80
    %v2972 = vpop.permute.xlu0 %2971
    %v2973 = vsel %vm198, %v2970, 0
    %v2975 = vsel %vm198, %v2972, 0
    %2977 = vmatprep.subr.mxu0 0.0
    %2978 = vmatpush1.xpose.msra.mxu0 %v2975
    %2979 = vmatprep.subr.mxu0 0.0
    %2980 = vmatpush1.xpose.msra.mxu0 0.0
    %2981 = vmatprep.subr.mxu0 0.0
    %2982 = vmatpush1.xpose.msra.mxu0 0.0
    %2983 = vmatprep.subr.mxu0 0.0
    %2984 = vmatpush1.xpose.msra.mxu0 0.0
    %2985 = vmatprep.subr.mxu0 0.0
    %2986 = vmatpush1.xpose.msra.mxu0 0.0
    %2987 = vmatprep.subr.mxu0 0.0
    %2988 = vmatpush1.xpose.msra.mxu0 0.0
    %2989 = vmatprep.subr.mxu0 0.0
    %2990 = vmatpush1.xpose.msra.mxu0 0.0
    %2991 = vmatprep.subr.mxu0 0.0
    %2992 = vmatpush1.xpose.msra.mxu0 0.0
    %2993 = vmatprep.subr.mxu0 0.0
    %2994 = vmatpush1.xpose.msra.mxu0 0.0
    %2995 = vmatprep.subr.mxu0 0.0
    %2996 = vmatpush1.xpose.msra.mxu0 0.0
    %2997 = vmatprep.subr.mxu0 0.0
    %2998 = vmatpush1.xpose.msra.mxu0 0.0
    %2999 = vmatprep.subr.mxu0 0.0
    %3000 = vmatpush1.xpose.msra.mxu0 0.0
    %3001 = vmatprep.subr.mxu0 0.0
    %3002 = vmatpush1.xpose.msra.mxu0 0.0
    %3003 = vmatprep.subr.mxu0 0.0
    %3004 = vmatpush1.xpose.msra.mxu0 0.0
    %3005 = vmatprep.subr.mxu0 0.0
    %3006 = vmatpush1.xpose.msra.mxu0 0.0
    %3007 = vmatprep.subr.mxu0 0.0
    %3008 = vmatpush1.xpose.msra.mxu0 0.0
    %3009 = vmatprep.subr.mxu0 0.0
    %3010 = vmatpush1.xpose.msra.mxu0 0.0
    %3011 = vmatprep.subr.mxu0 0.0
    %3012 = vmatpush1.xpose.msra.mxu0 0.0
    %3013 = vmatprep.subr.mxu0 0.0
    %3014 = vmatpush1.xpose.msra.mxu0 0.0
    %3015 = vmatprep.subr.mxu0 0.0
    %3016 = vmatpush1.xpose.msra.mxu0 0.0
    %3017 = vmatprep.subr.mxu0 0.0
    %3018 = vmatpush1.xpose.msra.mxu0 0.0
    %3019 = vmatprep.subr.mxu0 0.0
    %3020 = vmatpush1.xpose.msra.mxu0 0.0
    %3021 = vmatprep.subr.mxu0 0.0
    %3022 = vmatpush1.xpose.msra.mxu0 0.0
    %3023 = vmatprep.subr.mxu0 0.0
    %3024 = vmatpush1.xpose.msra.mxu0 0.0
    %3025 = vmatprep.subr.mxu0 0.0
    %3026 = vmatpush1.xpose.msra.mxu0 0.0
    %3027 = vmatprep.subr.mxu0 0.0
    %3028 = vmatpush1.xpose.msra.mxu0 0.0
    %3029 = vmatprep.subr.mxu0 0.0
    %3030 = vmatpush1.xpose.msra.mxu0 0.0
    %3031 = vmatprep.subr.mxu0 0.0
    %3032 = vmatpush1.xpose.msra.mxu0 0.0
    %3033 = vmatprep.subr.mxu0 0.0
    %3034 = vmatpush1.xpose.msra.mxu0 0.0
    %3035 = vmatprep.subr.mxu0 0.0
    %3036 = vmatpush1.xpose.msra.mxu0 0.0
    %3037 = vmatprep.subr.mxu0 0.0
    %3038 = vmatpush1.xpose.msra.mxu0 0.0
    %3039 = vmatprep.subr.mxu0 0.0
    %3040 = vmatpush1.xpose.msra.mxu0 0.0
    %3041 = vmatprep.mubr.f32.mxu0 0.0
    %3042 = vmatmul.mubr.f32.gmra.mrb[0].mxu0 %v2973
    %v3043 = vpop.f32.mrb[0].mxu0
    %v3044 = vadd.f32 0.0, %v3043
    %v3045 = vpop.f32.mrb[0].mxu0
    %3046 = vdwg.mxu0
    %v3047 = vmul.f32 %v3044, 0.35355338
    %v3048 = vsel %vm198, %v3047, -inf
    %3049 = vmax.xlane.f32.xlu0 %v3048
    %v3050 = vpop.xlane.xlu0 %3049
    %v3051 = vsub.f32 %v3047, %v3050
    %v3052 = vmul.f32 %v3051, 1.442695
    %v3053 = vpow.pop %v3052
    %v3054 = vsel %vm198, %v3053, 0.0
    %3055 = vadd.xlane.f32.xlu0 %v3054
    %v3056 = vpop.xlane.xlu0 %3055
    %v3057 = vrcp.pop %v3056
    %v3058 = vmul.f32 %v3053, %v3057
    %3059 = vrot.lane.b32.xlu0 %v2479, 48
    %v3060 = vpop.permute.xlu0 %3059
    %v3063 = vsel %vm198, %v3058, 0
    %3065 = vmatprep.subr.mxu0 0.0
    %3066 = vmatpush1.msra.mxu0 %v3060
    %3067 = vmatprep.subr.mxu0 0.0
    %3068 = vmatpush1.msra.mxu0 0.0
    %3069 = vmatprep.subr.mxu0 0.0
    %3070 = vmatpush1.msra.mxu0 0.0
    %3071 = vmatprep.subr.mxu0 0.0
    %3072 = vmatpush1.msra.mxu0 0.0
    %3073 = vmatprep.subr.mxu0 0.0
    %3074 = vmatpush1.msra.mxu0 0.0
    %3075 = vmatprep.subr.mxu0 0.0
    %3076 = vmatpush1.msra.mxu0 0.0
    %3077 = vmatprep.subr.mxu0 0.0
    %3078 = vmatpush1.msra.mxu0 0.0
    %3079 = vmatprep.subr.mxu0 0.0
    %3080 = vmatpush1.msra.mxu0 0.0
    %3081 = vmatprep.subr.mxu0 0.0
    %3082 = vmatpush1.msra.mxu0 0.0
    %3083 = vmatprep.subr.mxu0 0.0
    %3084 = vmatpush1.msra.mxu0 0.0
    %3085 = vmatprep.subr.mxu0 0.0
    %3086 = vmatpush1.msra.mxu0 0.0
    %3087 = vmatprep.subr.mxu0 0.0
    %3088 = vmatpush1.msra.mxu0 0.0
    %3089 = vmatprep.subr.mxu0 0.0
    %3090 = vmatpush1.msra.mxu0 0.0
    %3091 = vmatprep.subr.mxu0 0.0
    %3092 = vmatpush1.msra.mxu0 0.0
    %3093 = vmatprep.subr.mxu0 0.0
    %3094 = vmatpush1.msra.mxu0 0.0
    %3095 = vmatprep.subr.mxu0 0.0
    %3096 = vmatpush1.msra.mxu0 0.0
    %3097 = vmatprep.subr.mxu0 0.0
    %3098 = vmatpush1.msra.mxu0 0.0
    %3099 = vmatprep.subr.mxu0 0.0
    %3100 = vmatpush1.msra.mxu0 0.0
    %3101 = vmatprep.subr.mxu0 0.0
    %3102 = vmatpush1.msra.mxu0 0.0
    %3103 = vmatprep.subr.mxu0 0.0
    %3104 = vmatpush1.msra.mxu0 0.0
    %3105 = vmatprep.subr.mxu0 0.0
    %3106 = vmatpush1.msra.mxu0 0.0
    %3107 = vmatprep.subr.mxu0 0.0
    %3108 = vmatpush1.msra.mxu0 0.0
    %3109 = vmatprep.subr.mxu0 0.0
    %3110 = vmatpush1.msra.mxu0 0.0
    %3111 = vmatprep.subr.mxu0 0.0
    %3112 = vmatpush1.msra.mxu0 0.0
    %3113 = vmatprep.subr.mxu0 0.0
    %3114 = vmatpush1.msra.mxu0 0.0
    %3115 = vmatprep.subr.mxu0 0.0
    %3116 = vmatpush1.msra.mxu0 0.0
    %3117 = vmatprep.subr.mxu0 0.0
    %3118 = vmatpush1.msra.mxu0 0.0
    %3119 = vmatprep.subr.mxu0 0.0
    %3120 = vmatpush1.msra.mxu0 0.0
    %3121 = vmatprep.subr.mxu0 0.0
    %3122 = vmatpush1.msra.mxu0 0.0
    %3123 = vmatprep.subr.mxu0 0.0
    %3124 = vmatpush1.msra.mxu0 0.0
    %3125 = vmatprep.subr.mxu0 0.0
    %3126 = vmatpush1.msra.mxu0 0.0
    %3127 = vmatprep.subr.mxu0 0.0
    %3128 = vmatpush1.msra.mxu0 0.0
    %3129 = vmatprep.mubr.f32.mxu0 0.0
    %3130 = vmatmul.mubr.f32.gmra.mrb[0].mxu0 %v3063
    %v3131 = vpop.f32.mrb[0].mxu0
    %v3132 = vadd.f32 0.0, %v3131
    %v3133 = vpop.f32.mrb[0].mxu0
    %3134 = vdwg.mxu0
    %v3136 = vsel %vm198, %v3132, 0
    %3138 = vmatprep.subr.mxu0 0.0
    %3139 = vmatpush1.msra.mxu0 %v2490
    %3140 = vmatprep.subr.mxu0 0.0
    %3141 = vmatpush1.msra.mxu0 0.0
    %3142 = vmatprep.subr.mxu0 0.0
    %3143 = vmatpush1.msra.mxu0 0.0
    %3144 = vmatprep.subr.mxu0 0.0
    %3145 = vmatpush1.msra.mxu0 0.0
    %3146 = vmatprep.subr.mxu0 0.0
    %3147 = vmatpush1.msra.mxu0 0.0
    %3148 = vmatprep.subr.mxu0 0.0
    %3149 = vmatpush1.msra.mxu0 0.0
    %3150 = vmatprep.subr.mxu0 0.0
    %3151 = vmatpush1.msra.mxu0 0.0
    %3152 = vmatprep.subr.mxu0 0.0
    %3153 = vmatpush1.msra.mxu0 0.0
    %3154 = vmatprep.subr.mxu0 0.0
    %3155 = vmatpush1.msra.mxu0 0.0
    %3156 = vmatprep.subr.mxu0 0.0
    %3157 = vmatpush1.msra.mxu0 0.0
    %3158 = vmatprep.subr.mxu0 0.0
    %3159 = vmatpush1.msra.mxu0 0.0
    %3160 = vmatprep.subr.mxu0 0.0
    %3161 = vmatpush1.msra.mxu0 0.0
    %3162 = vmatprep.subr.mxu0 0.0
    %3163 = vmatpush1.msra.mxu0 0.0
    %3164 = vmatprep.subr.mxu0 0.0
    %3165 = vmatpush1.msra.mxu0 0.0
    %3166 = vmatprep.subr.mxu0 0.0
    %3167 = vmatpush1.msra.mxu0 0.0
    %3168 = vmatprep.subr.mxu0 0.0
    %3169 = vmatpush1.msra.mxu0 0.0
    %3170 = vmatprep.subr.mxu0 0.0
    %3171 = vmatpush1.msra.mxu0 0.0
    %3172 = vmatprep.subr.mxu0 0.0
    %3173 = vmatpush1.msra.mxu0 0.0
    %3174 = vmatprep.subr.mxu0 0.0
    %3175 = vmatpush1.msra.mxu0 0.0
    %3176 = vmatprep.subr.mxu0 0.0
    %3177 = vmatpush1.msra.mxu0 0.0
    %3178 = vmatprep.subr.mxu0 0.0
    %3179 = vmatpush1.msra.mxu0 0.0
    %3180 = vmatprep.subr.mxu0 0.0
    %3181 = vmatpush1.msra.mxu0 0.0
    %3182 = vmatprep.subr.mxu0 0.0
    %3183 = vmatpush1.msra.mxu0 0.0
    %3184 = vmatprep.subr.mxu0 0.0
    %3185 = vmatpush1.msra.mxu0 0.0
    %3186 = vmatprep.subr.mxu0 0.0
    %3187 = vmatpush1.msra.mxu0 0.0
    %3188 = vmatprep.subr.mxu0 0.0
    %3189 = vmatpush1.msra.mxu0 0.0
    %3190 = vmatprep.subr.mxu0 0.0
    %3191 = vmatpush1.msra.mxu0 0.0
    %3192 = vmatprep.subr.mxu0 0.0
    %3193 = vmatpush1.msra.mxu0 0.0
    %3194 = vmatprep.subr.mxu0 0.0
    %3195 = vmatpush1.msra.mxu0 0.0
    %3196 = vmatprep.subr.mxu0 0.0
    %3197 = vmatpush1.msra.mxu0 0.0
    %3198 = vmatprep.subr.mxu0 0.0
    %3199 = vmatpush1.msra.mxu0 0.0
    %3200 = vmatprep.subr.mxu0 0.0
    %3201 = vmatpush1.msra.mxu0 0.0
    %3202 = vmatprep.mubr.f32.mxu0 0.0
    %3203 = vmatmul.mubr.f32.gmra.mrb[0].mxu0 %v3136
    %v3204 = vpop.f32.mrb[0].mxu0
    %v3205 = vadd.f32 0.0, %v3204
    %v3206 = vpop.f32.mrb[0].mxu0
    %3207 = vdwg.mxu0
    %v3208 = vadd.f32 %v2966, %v3205
    %3209 = vrot.lane.b32.xlu0 %v2479, 104
    %v3210 = vpop.permute.xlu0 %3209
    %3211 = vrot.lane.b32.xlu0 %v2479, 72
    %v3212 = vpop.permute.xlu0 %3211
    %v3213 = vsel %vm198, %v3210, 0
    %v3215 = vsel %vm198, %v3212, 0
    %3217 = vmatprep.subr.mxu0 0.0
    %3218 = vmatpush1.xpose.msra.mxu0 %v3215
    %3219 = vmatprep.subr.mxu0 0.0
    %3220 = vmatpush1.xpose.msra.mxu0 0.0
    %3221 = vmatprep.subr.mxu0 0.0
    %3222 = vmatpush1.xpose.msra.mxu0 0.0
    %3223 = vmatprep.subr.mxu0 0.0
    %3224 = vmatpush1.xpose.msra.mxu0 0.0
    %3225 = vmatprep.subr.mxu0 0.0
    %3226 = vmatpush1.xpose.msra.mxu0 0.0
    %3227 = vmatprep.subr.mxu0 0.0
    %3228 = vmatpush1.xpose.msra.mxu0 0.0
    %3229 = vmatprep.subr.mxu0 0.0
    %3230 = vmatpush1.xpose.msra.mxu0 0.0
    %3231 = vmatprep.subr.mxu0 0.0
    %3232 = vmatpush1.xpose.msra.mxu0 0.0
    %3233 = vmatprep.subr.mxu0 0.0
    %3234 = vmatpush1.xpose.msra.mxu0 0.0
    %3235 = vmatprep.subr.mxu0 0.0
    %3236 = vmatpush1.xpose.msra.mxu0 0.0
    %3237 = vmatprep.subr.mxu0 0.0
    %3238 = vmatpush1.xpose.msra.mxu0 0.0
    %3239 = vmatprep.subr.mxu0 0.0
    %3240 = vmatpush1.xpose.msra.mxu0 0.0
    %3241 = vmatprep.subr.mxu0 0.0
    %3242 = vmatpush1.xpose.msra.mxu0 0.0
    %3243 = vmatprep.subr.mxu0 0.0
    %3244 = vmatpush1.xpose.msra.mxu0 0.0
    %3245 = vmatprep.subr.mxu0 0.0
    %3246 = vmatpush1.xpose.msra.mxu0 0.0
    %3247 = vmatprep.subr.mxu0 0.0
    %3248 = vmatpush1.xpose.msra.mxu0 0.0
    %3249 = vmatprep.subr.mxu0 0.0
    %3250 = vmatpush1.xpose.msra.mxu0 0.0
    %3251 = vmatprep.subr.mxu0 0.0
    %3252 = vmatpush1.xpose.msra.mxu0 0.0
    %3253 = vmatprep.subr.mxu0 0.0
    %3254 = vmatpush1.xpose.msra.mxu0 0.0
    %3255 = vmatprep.subr.mxu0 0.0
    %3256 = vmatpush1.xpose.msra.mxu0 0.0
    %3257 = vmatprep.subr.mxu0 0.0
    %3258 = vmatpush1.xpose.msra.mxu0 0.0
    %3259 = vmatprep.subr.mxu0 0.0
    %3260 = vmatpush1.xpose.msra.mxu0 0.0
    %3261 = vmatprep.subr.mxu0 0.0
    %3262 = vmatpush1.xpose.msra.mxu0 0.0
    %3263 = vmatprep.subr.mxu0 0.0
    %3264 = vmatpush1.xpose.msra.mxu0 0.0
    %3265 = vmatprep.subr.mxu0 0.0
    %3266 = vmatpush1.xpose.msra.mxu0 0.0
    %3267 = vmatprep.subr.mxu0 0.0
    %3268 = vmatpush1.xpose.msra.mxu0 0.0
    %3269 = vmatprep.subr.mxu0 0.0
    %3270 = vmatpush1.xpose.msra.mxu0 0.0
    %3271 = vmatprep.subr.mxu0 0.0
    %3272 = vmatpush1.xpose.msra.mxu0 0.0
    %3273 = vmatprep.subr.mxu0 0.0
    %3274 = vmatpush1.xpose.msra.mxu0 0.0
    %3275 = vmatprep.subr.mxu0 0.0
    %3276 = vmatpush1.xpose.msra.mxu0 0.0
    %3277 = vmatprep.subr.mxu0 0.0
    %3278 = vmatpush1.xpose.msra.mxu0 0.0
    %3279 = vmatprep.subr.mxu0 0.0
    %3280 = vmatpush1.xpose.msra.mxu0 0.0
    %3281 = vmatprep.mubr.f32.mxu0 0.0
    %3282 = vmatmul.mubr.f32.gmra.mrb[0].mxu0 %v3213
    %v3283 = vpop.f32.mrb[0].mxu0
    %v3284 = vadd.f32 0.0, %v3283
    %v3285 = vpop.f32.mrb[0].mxu0
    %3286 = vdwg.mxu0
    %v3287 = vmul.f32 %v3284, 0.35355338
    %v3288 = vsel %vm198, %v3287, -inf
    %3289 = vmax.xlane.f32.xlu0 %v3288
    %v3290 = vpop.xlane.xlu0 %3289
    %v3291 = vsub.f32 %v3287, %v3290
    %v3292 = vmul.f32 %v3291, 1.442695
    %v3293 = vpow.pop %v3292
    %v3294 = vsel %vm198, %v3293, 0.0
    %3295 = vadd.xlane.f32.xlu0 %v3294
    %v3296 = vpop.xlane.xlu0 %3295
    %v3297 = vrcp.pop %v3296
    %v3298 = vmul.f32 %v3293, %v3297
    %3299 = vrot.lane.b32.xlu0 %v2479, 40
    %v3300 = vpop.permute.xlu0 %3299
    %v3303 = vsel %vm198, %v3298, 0
    %3305 = vmatprep.subr.mxu0 0.0
    %3306 = vmatpush1.msra.mxu0 %v3300
    %3307 = vmatprep.subr.mxu0 0.0
    %3308 = vmatpush1.msra.mxu0 0.0
    %3309 = vmatprep.subr.mxu0 0.0
    %3310 = vmatpush1.msra.mxu0 0.0
    %3311 = vmatprep.subr.mxu0 0.0
    %3312 = vmatpush1.msra.mxu0 0.0
    %3313 = vmatprep.subr.mxu0 0.0
    %3314 = vmatpush1.msra.mxu0 0.0
    %3315 = vmatprep.subr.mxu0 0.0
    %3316 = vmatpush1.msra.mxu0 0.0
    %3317 = vmatprep.subr.mxu0 0.0
    %3318 = vmatpush1.msra.mxu0 0.0
    %3319 = vmatprep.subr.mxu0 0.0
    %3320 = vmatpush1.msra.mxu0 0.0
    %3321 = vmatprep.subr.mxu0 0.0
    %3322 = vmatpush1.msra.mxu0 0.0
    %3323 = vmatprep.subr.mxu0 0.0
    %3324 = vmatpush1.msra.mxu0 0.0
    %3325 = vmatprep.subr.mxu0 0.0
    %3326 = vmatpush1.msra.mxu0 0.0
    %3327 = vmatprep.subr.mxu0 0.0
    %3328 = vmatpush1.msra.mxu0 0.0
    %3329 = vmatprep.subr.mxu0 0.0
    %3330 = vmatpush1.msra.mxu0 0.0
    %3331 = vmatprep.subr.mxu0 0.0
    %3332 = vmatpush1.msra.mxu0 0.0
    %3333 = vmatprep.subr.mxu0 0.0
    %3334 = vmatpush1.msra.mxu0 0.0
    %3335 = vmatprep.subr.mxu0 0.0
    %3336 = vmatpush1.msra.mxu0 0.0
    %3337 = vmatprep.subr.mxu0 0.0
    %3338 = vmatpush1.msra.mxu0 0.0
    %3339 = vmatprep.subr.mxu0 0.0
    %3340 = vmatpush1.msra.mxu0 0.0
    %3341 = vmatprep.subr.mxu0 0.0
    %3342 = vmatpush1.msra.mxu0 0.0
    %3343 = vmatprep.subr.mxu0 0.0
    %3344 = vmatpush1.msra.mxu0 0.0
    %3345 = vmatprep.subr.mxu0 0.0
    %3346 = vmatpush1.msra.mxu0 0.0
    %3347 = vmatprep.subr.mxu0 0.0
    %3348 = vmatpush1.msra.mxu0 0.0
    %3349 = vmatprep.subr.mxu0 0.0
    %3350 = vmatpush1.msra.mxu0 0.0
    %3351 = vmatprep.subr.mxu0 0.0
    %3352 = vmatpush1.msra.mxu0 0.0
    %3353 = vmatprep.subr.mxu0 0.0
    %3354 = vmatpush1.msra.mxu0 0.0
    %3355 = vmatprep.subr.mxu0 0.0
    %3356 = vmatpush1.msra.mxu0 0.0
    %3357 = vmatprep.subr.mxu0 0.0
    %3358 = vmatpush1.msra.mxu0 0.0
    %3359 = vmatprep.subr.mxu0 0.0
    %3360 = vmatpush1.msra.mxu0 0.0
    %3361 = vmatprep.subr.mxu0 0.0
    %3362 = vmatpush1.msra.mxu0 0.0
    %3363 = vmatprep.subr.mxu0 0.0
    %3364 = vmatpush1.msra.mxu0 0.0
    %3365 = vmatprep.subr.mxu0 0.0
    %3366 = vmatpush1.msra.mxu0 0.0
    %3367 = vmatprep.subr.mxu0 0.0
    %3368 = vmatpush1.msra.mxu0 0.0
    %3369 = vmatprep.mubr.f32.mxu0 0.0
    %3370 = vmatmul.mubr.f32.gmra.mrb[0].mxu0 %v3303
    %v3371 = vpop.f32.mrb[0].mxu0
    %v3372 = vadd.f32 0.0, %v3371
    %v3373 = vpop.f32.mrb[0].mxu0
    %3374 = vdwg.mxu0
    %v3376 = vsel %vm198, %v3372, 0
    %3378 = vmatprep.subr.mxu0 0.0
    %3379 = vmatpush1.msra.mxu0 %v2491
    %3380 = vmatprep.subr.mxu0 0.0
    %3381 = vmatpush1.msra.mxu0 0.0
    %3382 = vmatprep.subr.mxu0 0.0
    %3383 = vmatpush1.msra.mxu0 0.0
    %3384 = vmatprep.subr.mxu0 0.0
    %3385 = vmatpush1.msra.mxu0 0.0
    %3386 = vmatprep.subr.mxu0 0.0
    %3387 = vmatpush1.msra.mxu0 0.0
    %3388 = vmatprep.subr.mxu0 0.0
    %3389 = vmatpush1.msra.mxu0 0.0
    %3390 = vmatprep.subr.mxu0 0.0
    %3391 = vmatpush1.msra.mxu0 0.0
    %3392 = vmatprep.subr.mxu0 0.0
    %3393 = vmatpush1.msra.mxu0 0.0
    %3394 = vmatprep.subr.mxu0 0.0
    %3395 = vmatpush1.msra.mxu0 0.0
    %3396 = vmatprep.subr.mxu0 0.0
    %3397 = vmatpush1.msra.mxu0 0.0
    %3398 = vmatprep.subr.mxu0 0.0
    %3399 = vmatpush1.msra.mxu0 0.0
    %3400 = vmatprep.subr.mxu0 0.0
    %3401 = vmatpush1.msra.mxu0 0.0
    %3402 = vmatprep.subr.mxu0 0.0
    %3403 = vmatpush1.msra.mxu0 0.0
    %3404 = vmatprep.subr.mxu0 0.0
    %3405 = vmatpush1.msra.mxu0 0.0
    %3406 = vmatprep.subr.mxu0 0.0
    %3407 = vmatpush1.msra.mxu0 0.0
    %3408 = vmatprep.subr.mxu0 0.0
    %3409 = vmatpush1.msra.mxu0 0.0
    %3410 = vmatprep.subr.mxu0 0.0
    %3411 = vmatpush1.msra.mxu0 0.0
    %3412 = vmatprep.subr.mxu0 0.0
    %3413 = vmatpush1.msra.mxu0 0.0
    %3414 = vmatprep.subr.mxu0 0.0
    %3415 = vmatpush1.msra.mxu0 0.0
    %3416 = vmatprep.subr.mxu0 0.0
    %3417 = vmatpush1.msra.mxu0 0.0
    %3418 = vmatprep.subr.mxu0 0.0
    %3419 = vmatpush1.msra.mxu0 0.0
    %3420 = vmatprep.subr.mxu0 0.0
    %3421 = vmatpush1.msra.mxu0 0.0
    %3422 = vmatprep.subr.mxu0 0.0
    %3423 = vmatpush1.msra.mxu0 0.0
    %3424 = vmatprep.subr.mxu0 0.0
    %3425 = vmatpush1.msra.mxu0 0.0
    %3426 = vmatprep.subr.mxu0 0.0
    %3427 = vmatpush1.msra.mxu0 0.0
    %3428 = vmatprep.subr.mxu0 0.0
    %3429 = vmatpush1.msra.mxu0 0.0
    %3430 = vmatprep.subr.mxu0 0.0
    %3431 = vmatpush1.msra.mxu0 0.0
    %3432 = vmatprep.subr.mxu0 0.0
    %3433 = vmatpush1.msra.mxu0 0.0
    %3434 = vmatprep.subr.mxu0 0.0
    %3435 = vmatpush1.msra.mxu0 0.0
    %3436 = vmatprep.subr.mxu0 0.0
    %3437 = vmatpush1.msra.mxu0 0.0
    %3438 = vmatprep.subr.mxu0 0.0
    %3439 = vmatpush1.msra.mxu0 0.0
    %3440 = vmatprep.subr.mxu0 0.0
    %3441 = vmatpush1.msra.mxu0 0.0
    %3442 = vmatprep.mubr.f32.mxu0 0.0
    %3443 = vmatmul.mubr.f32.gmra.mrb[0].mxu0 %v3376
    %v3444 = vpop.f32.mrb[0].mxu0
    %v3445 = vadd.f32 0.0, %v3444
    %v3446 = vpop.f32.mrb[0].mxu0
    %3447 = vdwg.mxu0
    %v3448 = vadd.f32 %v3208, %v3445
    %3450 = vrot.lane.b32.xlu0 %v2484, 96
    %v3451 = vpop.permute.xlu0 %3450
    %v3452 = vsel %vm198, %v2484, 0
    %v3454 = vsel %vm198, %v3451, 0
    %3456 = vmatprep.subr.mxu0 0.0
    %3457 = vmatpush1.xpose.msra.mxu0 %v3454
    %3458 = vmatprep.subr.mxu0 0.0
    %3459 = vmatpush1.xpose.msra.mxu0 0.0
    %3460 = vmatprep.subr.mxu0 0.0
    %3461 = vmatpush1.xpose.msra.mxu0 0.0
    %3462 = vmatprep.subr.mxu0 0.0
    %3463 = vmatpush1.xpose.msra.mxu0 0.0
    %3464 = vmatprep.subr.mxu0 0.0
    %3465 = vmatpush1.xpose.msra.mxu0 0.0
    %3466 = vmatprep.subr.mxu0 0.0
    %3467 = vmatpush1.xpose.msra.mxu0 0.0
    %3468 = vmatprep.subr.mxu0 0.0
    %3469 = vmatpush1.xpose.msra.mxu0 0.0
    %3470 = vmatprep.subr.mxu0 0.0
    %3471 = vmatpush1.xpose.msra.mxu0 0.0
    %3472 = vmatprep.subr.mxu0 0.0
    %3473 = vmatpush1.xpose.msra.mxu0 0.0
    %3474 = vmatprep.subr.mxu0 0.0
    %3475 = vmatpush1.xpose.msra.mxu0 0.0
    %3476 = vmatprep.subr.mxu0 0.0
    %3477 = vmatpush1.xpose.msra.mxu0 0.0
    %3478 = vmatprep.subr.mxu0 0.0
    %3479 = vmatpush1.xpose.msra.mxu0 0.0
    %3480 = vmatprep.subr.mxu0 0.0
    %3481 = vmatpush1.xpose.msra.mxu0 0.0
    %3482 = vmatprep.subr.mxu0 0.0
    %3483 = vmatpush1.xpose.msra.mxu0 0.0
    %3484 = vmatprep.subr.mxu0 0.0
    %3485 = vmatpush1.xpose.msra.mxu0 0.0
    %3486 = vmatprep.subr.mxu0 0.0
    %3487 = vmatpush1.xpose.msra.mxu0 0.0
    %3488 = vmatprep.subr.mxu0 0.0
    %3489 = vmatpush1.xpose.msra.mxu0 0.0
    %3490 = vmatprep.subr.mxu0 0.0
    %3491 = vmatpush1.xpose.msra.mxu0 0.0
    %3492 = vmatprep.subr.mxu0 0.0
    %3493 = vmatpush1.xpose.msra.mxu0 0.0
    %3494 = vmatprep.subr.mxu0 0.0
    %3495 = vmatpush1.xpose.msra.mxu0 0.0
    %3496 = vmatprep.subr.mxu0 0.0
    %3497 = vmatpush1.xpose.msra.mxu0 0.0
    %3498 = vmatprep.subr.mxu0 0.0
    %3499 = vmatpush1.xpose.msra.mxu0 0.0
    %3500 = vmatprep.subr.mxu0 0.0
    %3501 = vmatpush1.xpose.msra.mxu0 0.0
    %3502 = vmatprep.subr.mxu0 0.0
    %3503 = vmatpush1.xpose.msra.mxu0 0.0
    %3504 = vmatprep.subr.mxu0 0.0
    %3505 = vmatpush1.xpose.msra.mxu0 0.0
    %3506 = vmatprep.subr.mxu0 0.0
    %3507 = vmatpush1.xpose.msra.mxu0 0.0
    %3508 = vmatprep.subr.mxu0 0.0
    %3509 = vmatpush1.xpose.msra.mxu0 0.0
    %3510 = vmatprep.subr.mxu0 0.0
    %3511 = vmatpush1.xpose.msra.mxu0 0.0
    %3512 = vmatprep.subr.mxu0 0.0
    %3513 = vmatpush1.xpose.msra.mxu0 0.0
    %3514 = vmatprep.subr.mxu0 0.0
    %3515 = vmatpush1.xpose.msra.mxu0 0.0
    %3516 = vmatprep.subr.mxu0 0.0
    %3517 = vmatpush1.xpose.msra.mxu0 0.0
    %3518 = vmatprep.subr.mxu0 0.0
    %3519 = vmatpush1.xpose.msra.mxu0 0.0
    %3520 = vmatprep.mubr.f32.mxu0 0.0
    %3521 = vmatmul.mubr.f32.gmra.mrb[0].mxu0 %v3452
    %v3522 = vpop.f32.mrb[0].mxu0
    %v3523 = vadd.f32 0.0, %v3522
    %v3524 = vpop.f32.mrb[0].mxu0
    %3525 = vdwg.mxu0
    %v3526 = vmul.f32 %v3523, 0.35355338
    %v3527 = vsel %vm198, %v3526, -inf
    %3528 = vmax.xlane.f32.xlu0 %v3527
    %v3529 = vpop.xlane.xlu0 %3528
    %v3530 = vsub.f32 %v3526, %v3529
    %v3531 = vmul.f32 %v3530, 1.442695
    %v3532 = vpow.pop %v3531
    %v3533 = vsel %vm198, %v3532, 0.0
    %3534 = vadd.xlane.f32.xlu0 %v3533
    %v3535 = vpop.xlane.xlu0 %3534
    %v3536 = vrcp.pop %v3535
    %v3537 = vmul.f32 %v3532, %v3536
    %3538 = vrot.lane.b32.xlu0 %v2484, 64
    %v3539 = vpop.permute.xlu0 %3538
    %v3542 = vsel %vm198, %v3537, 0
    %3544 = vmatprep.subr.mxu0 0.0
    %3545 = vmatpush1.msra.mxu0 %v3539
    %3546 = vmatprep.subr.mxu0 0.0
    %3547 = vmatpush1.msra.mxu0 0.0
    %3548 = vmatprep.subr.mxu0 0.0
    %3549 = vmatpush1.msra.mxu0 0.0
    %3550 = vmatprep.subr.mxu0 0.0
    %3551 = vmatpush1.msra.mxu0 0.0
    %3552 = vmatprep.subr.mxu0 0.0
    %3553 = vmatpush1.msra.mxu0 0.0
    %3554 = vmatprep.subr.mxu0 0.0
    %3555 = vmatpush1.msra.mxu0 0.0
    %3556 = vmatprep.subr.mxu0 0.0
    %3557 = vmatpush1.msra.mxu0 0.0
    %3558 = vmatprep.subr.mxu0 0.0
    %3559 = vmatpush1.msra.mxu0 0.0
    %3560 = vmatprep.subr.mxu0 0.0
    %3561 = vmatpush1.msra.mxu0 0.0
    %3562 = vmatprep.subr.mxu0 0.0
    %3563 = vmatpush1.msra.mxu0 0.0
    %3564 = vmatprep.subr.mxu0 0.0
    %3565 = vmatpush1.msra.mxu0 0.0
    %3566 = vmatprep.subr.mxu0 0.0
    %3567 = vmatpush1.msra.mxu0 0.0
    %3568 = vmatprep.subr.mxu0 0.0
    %3569 = vmatpush1.msra.mxu0 0.0
    %3570 = vmatprep.subr.mxu0 0.0
    %3571 = vmatpush1.msra.mxu0 0.0
    %3572 = vmatprep.subr.mxu0 0.0
    %3573 = vmatpush1.msra.mxu0 0.0
    %3574 = vmatprep.subr.mxu0 0.0
    %3575 = vmatpush1.msra.mxu0 0.0
    %3576 = vmatprep.subr.mxu0 0.0
    %3577 = vmatpush1.msra.mxu0 0.0
    %3578 = vmatprep.subr.mxu0 0.0
    %3579 = vmatpush1.msra.mxu0 0.0
    %3580 = vmatprep.subr.mxu0 0.0
    %3581 = vmatpush1.msra.mxu0 0.0
    %3582 = vmatprep.subr.mxu0 0.0
    %3583 = vmatpush1.msra.mxu0 0.0
    %3584 = vmatprep.subr.mxu0 0.0
    %3585 = vmatpush1.msra.mxu0 0.0
    %3586 = vmatprep.subr.mxu0 0.0
    %3587 = vmatpush1.msra.mxu0 0.0
    %3588 = vmatprep.subr.mxu0 0.0
    %3589 = vmatpush1.msra.mxu0 0.0
    %3590 = vmatprep.subr.mxu0 0.0
    %3591 = vmatpush1.msra.mxu0 0.0
    %3592 = vmatprep.subr.mxu0 0.0
    %3593 = vmatpush1.msra.mxu0 0.0
    %3594 = vmatprep.subr.mxu0 0.0
    %3595 = vmatpush1.msra.mxu0 0.0
    %3596 = vmatprep.subr.mxu0 0.0
    %3597 = vmatpush1.msra.mxu0 0.0
    %3598 = vmatprep.subr.mxu0 0.0
    %3599 = vmatpush1.msra.mxu0 0.0
    %3600 = vmatprep.subr.mxu0 0.0
    %3601 = vmatpush1.msra.mxu0 0.0
    %3602 = vmatprep.subr.mxu0 0.0
    %3603 = vmatpush1.msra.mxu0 0.0
    %3604 = vmatprep.subr.mxu0 0.0
    %3605 = vmatpush1.msra.mxu0 0.0
    %3606 = vmatprep.subr.mxu0 0.0
    %3607 = vmatpush1.msra.mxu0 0.0
    %3608 = vmatprep.mubr.f32.mxu0 0.0
    %3609 = vmatmul.mubr.f32.gmra.mrb[0].mxu0 %v3542
    %v3610 = vpop.f32.mrb[0].mxu0
    %v3611 = vadd.f32 0.0, %v3610
    %v3612 = vpop.f32.mrb[0].mxu0
    %3613 = vdwg.mxu0
    %3614 = vrot.lane.b32.xlu0 %v2484, 120
    %v3615 = vpop.permute.xlu0 %3614
    %3616 = vrot.lane.b32.xlu0 %v2484, 88
    %v3617 = vpop.permute.xlu0 %3616
    %v3618 = vsel %vm198, %v3615, 0
    %v3620 = vsel %vm198, %v3617, 0
    %3622 = vmatprep.subr.mxu0 0.0
    %3623 = vmatpush1.xpose.msra.mxu0 %v3620
    %3624 = vmatprep.subr.mxu0 0.0
    %3625 = vmatpush1.xpose.msra.mxu0 0.0
    %3626 = vmatprep.subr.mxu0 0.0
    %3627 = vmatpush1.xpose.msra.mxu0 0.0
    %3628 = vmatprep.subr.mxu0 0.0
    %3629 = vmatpush1.xpose.msra.mxu0 0.0
    %3630 = vmatprep.subr.mxu0 0.0
    %3631 = vmatpush1.xpose.msra.mxu0 0.0
    %3632 = vmatprep.subr.mxu0 0.0
    %3633 = vmatpush1.xpose.msra.mxu0 0.0
    %3634 = vmatprep.subr.mxu0 0.0
    %3635 = vmatpush1.xpose.msra.mxu0 0.0
    %3636 = vmatprep.subr.mxu0 0.0
    %3637 = vmatpush1.xpose.msra.mxu0 0.0
    %3638 = vmatprep.subr.mxu0 0.0
    %3639 = vmatpush1.xpose.msra.mxu0 0.0
    %3640 = vmatprep.subr.mxu0 0.0
    %3641 = vmatpush1.xpose.msra.mxu0 0.0
    %3642 = vmatprep.subr.mxu0 0.0
    %3643 = vmatpush1.xpose.msra.mxu0 0.0
    %3644 = vmatprep.subr.mxu0 0.0
    %3645 = vmatpush1.xpose.msra.mxu0 0.0
    %3646 = vmatprep.subr.mxu0 0.0
    %3647 = vmatpush1.xpose.msra.mxu0 0.0
    %3648 = vmatprep.subr.mxu0 0.0
    %3649 = vmatpush1.xpose.msra.mxu0 0.0
    %3650 = vmatprep.subr.mxu0 0.0
    %3651 = vmatpush1.xpose.msra.mxu0 0.0
    %3652 = vmatprep.subr.mxu0 0.0
    %3653 = vmatpush1.xpose.msra.mxu0 0.0
    %3654 = vmatprep.subr.mxu0 0.0
    %3655 = vmatpush1.xpose.msra.mxu0 0.0
    %3656 = vmatprep.subr.mxu0 0.0
    %3657 = vmatpush1.xpose.msra.mxu0 0.0
    %3658 = vmatprep.subr.mxu0 0.0
    %3659 = vmatpush1.xpose.msra.mxu0 0.0
    %3660 = vmatprep.subr.mxu0 0.0
    %3661 = vmatpush1.xpose.msra.mxu0 0.0
    %3662 = vmatprep.subr.mxu0 0.0
    %3663 = vmatpush1.xpose.msra.mxu0 0.0
    %3664 = vmatprep.subr.mxu0 0.0
    %3665 = vmatpush1.xpose.msra.mxu0 0.0
    %3666 = vmatprep.subr.mxu0 0.0
    %3667 = vmatpush1.xpose.msra.mxu0 0.0
    %3668 = vmatprep.subr.mxu0 0.0
    %3669 = vmatpush1.xpose.msra.mxu0 0.0
    %3670 = vmatprep.subr.mxu0 0.0
    %3671 = vmatpush1.xpose.msra.mxu0 0.0
    %3672 = vmatprep.subr.mxu0 0.0
    %3673 = vmatpush1.xpose.msra.mxu0 0.0
    %3674 = vmatprep.subr.mxu0 0.0
    %3675 = vmatpush1.xpose.msra.mxu0 0.0
    %3676 = vmatprep.subr.mxu0 0.0
    %3677 = vmatpush1.xpose.msra.mxu0 0.0
    %3678 = vmatprep.subr.mxu0 0.0
    %3679 = vmatpush1.xpose.msra.mxu0 0.0
    %3680 = vmatprep.subr.mxu0 0.0
    %3681 = vmatpush1.xpose.msra.mxu0 0.0
    %3682 = vmatprep.subr.mxu0 0.0
    %3683 = vmatpush1.xpose.msra.mxu0 0.0
    %3684 = vmatprep.subr.mxu0 0.0
    %3685 = vmatpush1.xpose.msra.mxu0 0.0
    %3686 = vmatprep.mubr.f32.mxu0 0.0
    %3687 = vmatmul.mubr.f32.gmra.mrb[0].mxu0 %v3618
    %v3688 = vpop.f32.mrb[0].mxu0
    %v3689 = vadd.f32 0.0, %v3688
    %v3690 = vpop.f32.mrb[0].mxu0
    %3691 = vdwg.mxu0
    %v3692 = vmul.f32 %v3689, 0.35355338
    %v3693 = vsel %vm198, %v3692, -inf
    %3694 = vmax.xlane.f32.xlu0 %v3693
    %v3695 = vpop.xlane.xlu0 %3694
    %v3696 = vsub.f32 %v3692, %v3695
    %v3697 = vmul.f32 %v3696, 1.442695
    %v3698 = vpow.pop %v3697
    %v3699 = vsel %vm198, %v3698, 0.0
    %3700 = vadd.xlane.f32.xlu0 %v3699
    %v3701 = vpop.xlane.xlu0 %3700
    %v3702 = vrcp.pop %v3701
    %v3703 = vmul.f32 %v3698, %v3702
    %3704 = vrot.lane.b32.xlu0 %v2484, 56
    %v3705 = vpop.permute.xlu0 %3704
    %v3708 = vsel %vm198, %v3703, 0
    %3710 = vmatprep.subr.mxu0 0.0
    %3711 = vmatpush1.msra.mxu0 %v3705
    %3712 = vmatprep.subr.mxu0 0.0
    %3713 = vmatpush1.msra.mxu0 0.0
    %3714 = vmatprep.subr.mxu0 0.0
    %3715 = vmatpush1.msra.mxu0 0.0
    %3716 = vmatprep.subr.mxu0 0.0
    %3717 = vmatpush1.msra.mxu0 0.0
    %3718 = vmatprep.subr.mxu0 0.0
    %3719 = vmatpush1.msra.mxu0 0.0
    %3720 = vmatprep.subr.mxu0 0.0
    %3721 = vmatpush1.msra.mxu0 0.0
    %3722 = vmatprep.subr.mxu0 0.0
    %3723 = vmatpush1.msra.mxu0 0.0
    %3724 = vmatprep.subr.mxu0 0.0
    %3725 = vmatpush1.msra.mxu0 0.0
    %3726 = vmatprep.subr.mxu0 0.0
    %3727 = vmatpush1.msra.mxu0 0.0
    %3728 = vmatprep.subr.mxu0 0.0
    %3729 = vmatpush1.msra.mxu0 0.0
    %3730 = vmatprep.subr.mxu0 0.0
    %3731 = vmatpush1.msra.mxu0 0.0
    %3732 = vmatprep.subr.mxu0 0.0
    %3733 = vmatpush1.msra.mxu0 0.0
    %3734 = vmatprep.subr.mxu0 0.0
    %3735 = vmatpush1.msra.mxu0 0.0
    %3736 = vmatprep.subr.mxu0 0.0
    %3737 = vmatpush1.msra.mxu0 0.0
    %3738 = vmatprep.subr.mxu0 0.0
    %3739 = vmatpush1.msra.mxu0 0.0
    %3740 = vmatprep.subr.mxu0 0.0
    %3741 = vmatpush1.msra.mxu0 0.0
    %3742 = vmatprep.subr.mxu0 0.0
    %3743 = vmatpush1.msra.mxu0 0.0
    %3744 = vmatprep.subr.mxu0 0.0
    %3745 = vmatpush1.msra.mxu0 0.0
    %3746 = vmatprep.subr.mxu0 0.0
    %3747 = vmatpush1.msra.mxu0 0.0
    %3748 = vmatprep.subr.mxu0 0.0
    %3749 = vmatpush1.msra.mxu0 0.0
    %3750 = vmatprep.subr.mxu0 0.0
    %3751 = vmatpush1.msra.mxu0 0.0
    %3752 = vmatprep.subr.mxu0 0.0
    %3753 = vmatpush1.msra.mxu0 0.0
    %3754 = vmatprep.subr.mxu0 0.0
    %3755 = vmatpush1.msra.mxu0 0.0
    %3756 = vmatprep.subr.mxu0 0.0
    %3757 = vmatpush1.msra.mxu0 0.0
    %3758 = vmatprep.subr.mxu0 0.0
    %3759 = vmatpush1.msra.mxu0 0.0
    %3760 = vmatprep.subr.mxu0 0.0
    %3761 = vmatpush1.msra.mxu0 0.0
    %3762 = vmatprep.subr.mxu0 0.0
    %3763 = vmatpush1.msra.mxu0 0.0
    %3764 = vmatprep.subr.mxu0 0.0
    %3765 = vmatpush1.msra.mxu0 0.0
    %3766 = vmatprep.subr.mxu0 0.0
    %3767 = vmatpush1.msra.mxu0 0.0
    %3768 = vmatprep.subr.mxu0 0.0
    %3769 = vmatpush1.msra.mxu0 0.0
    %3770 = vmatprep.subr.mxu0 0.0
    %3771 = vmatpush1.msra.mxu0 0.0
    %3772 = vmatprep.subr.mxu0 0.0
    %3773 = vmatpush1.msra.mxu0 0.0
    %3774 = vmatprep.mubr.f32.mxu0 0.0
    %3775 = vmatmul.mubr.f32.gmra.mrb[0].mxu0 %v3708
    %v3776 = vpop.f32.mrb[0].mxu0
    %v3777 = vadd.f32 0.0, %v3776
    %v3778 = vpop.f32.mrb[0].mxu0
    %3779 = vdwg.mxu0
    %v3781 = vsel %vm198, %v3777, 0
    %3783 = vmatprep.subr.mxu0 0.0
    %3784 = vmatpush1.msra.mxu0 %v2489
    %3785 = vmatprep.subr.mxu0 0.0
    %3786 = vmatpush1.msra.mxu0 0.0
    %3787 = vmatprep.subr.mxu0 0.0
    %3788 = vmatpush1.msra.mxu0 0.0
    %3789 = vmatprep.subr.mxu0 0.0
    %3790 = vmatpush1.msra.mxu0 0.0
    %3791 = vmatprep.subr.mxu0 0.0
    %3792 = vmatpush1.msra.mxu0 0.0
    %3793 = vmatprep.subr.mxu0 0.0
    %3794 = vmatpush1.msra.mxu0 0.0
    %3795 = vmatprep.subr.mxu0 0.0
    %3796 = vmatpush1.msra.mxu0 0.0
    %3797 = vmatprep.subr.mxu0 0.0
    %3798 = vmatpush1.msra.mxu0 0.0
    %3799 = vmatprep.subr.mxu0 0.0
    %3800 = vmatpush1.msra.mxu0 0.0
    %3801 = vmatprep.subr.mxu0 0.0
    %3802 = vmatpush1.msra.mxu0 0.0
    %3803 = vmatprep.subr.mxu0 0.0
    %3804 = vmatpush1.msra.mxu0 0.0
    %3805 = vmatprep.subr.mxu0 0.0
    %3806 = vmatpush1.msra.mxu0 0.0
    %3807 = vmatprep.subr.mxu0 0.0
    %3808 = vmatpush1.msra.mxu0 0.0
    %3809 = vmatprep.subr.mxu0 0.0
    %3810 = vmatpush1.msra.mxu0 0.0
    %3811 = vmatprep.subr.mxu0 0.0
    %3812 = vmatpush1.msra.mxu0 0.0
    %3813 = vmatprep.subr.mxu0 0.0
    %3814 = vmatpush1.msra.mxu0 0.0
    %3815 = vmatprep.subr.mxu0 0.0
    %3816 = vmatpush1.msra.mxu0 0.0
    %3817 = vmatprep.subr.mxu0 0.0
    %3818 = vmatpush1.msra.mxu0 0.0
    %3819 = vmatprep.subr.mxu0 0.0
    %3820 = vmatpush1.msra.mxu0 0.0
    %3821 = vmatprep.subr.mxu0 0.0
    %3822 = vmatpush1.msra.mxu0 0.0
    %3823 = vmatprep.subr.mxu0 0.0
    %3824 = vmatpush1.msra.mxu0 0.0
    %3825 = vmatprep.subr.mxu0 0.0
    %3826 = vmatpush1.msra.mxu0 0.0
    %3827 = vmatprep.subr.mxu0 0.0
    %3828 = vmatpush1.msra.mxu0 0.0
    %3829 = vmatprep.subr.mxu0 0.0
    %3830 = vmatpush1.msra.mxu0 0.0
    %3831 = vmatprep.subr.mxu0 0.0
    %3832 = vmatpush1.msra.mxu0 0.0
    %3833 = vmatprep.subr.mxu0 0.0
    %3834 = vmatpush1.msra.mxu0 0.0
    %3835 = vmatprep.subr.mxu0 0.0
    %3836 = vmatpush1.msra.mxu0 0.0
    %3837 = vmatprep.subr.mxu0 0.0
    %3838 = vmatpush1.msra.mxu0 0.0
    %3839 = vmatprep.subr.mxu0 0.0
    %3840 = vmatpush1.msra.mxu0 0.0
    %3841 = vmatprep.subr.mxu0 0.0
    %3842 = vmatpush1.msra.mxu0 0.0
    %3843 = vmatprep.subr.mxu0 0.0
    %3844 = vmatpush1.msra.mxu0 0.0
    %3845 = vmatprep.subr.mxu0 0.0
    %3846 = vmatpush1.msra.mxu0 0.0
    %3847 = vmatprep.mubr.f32.mxu0 0.0
    %3848 = vmatmul.mubr.f32.gmra.mrb[0].mxu0 %v3781
    %v3849 = vpop.f32.mrb[0].mxu0
    %v3850 = vadd.f32 0.0, %v3849
    %v3851 = vpop.f32.mrb[0].mxu0
    %3852 = vdwg.mxu0
    %v3854 = vsel %vm198, %v3611, 0
    %3856 = vmatprep.subr.mxu0 0.0
    %3857 = vmatpush1.msra.mxu0 %v2488
    %3858 = vmatprep.subr.mxu0 0.0
    %3859 = vmatpush1.msra.mxu0 0.0
    %3860 = vmatprep.subr.mxu0 0.0
    %3861 = vmatpush1.msra.mxu0 0.0
    %3862 = vmatprep.subr.mxu0 0.0
    %3863 = vmatpush1.msra.mxu0 0.0
    %3864 = vmatprep.subr.mxu0 0.0
    %3865 = vmatpush1.msra.mxu0 0.0
    %3866 = vmatprep.subr.mxu0 0.0
    %3867 = vmatpush1.msra.mxu0 0.0
    %3868 = vmatprep.subr.mxu0 0.0
    %3869 = vmatpush1.msra.mxu0 0.0
    %3870 = vmatprep.subr.mxu0 0.0
    %3871 = vmatpush1.msra.mxu0 0.0
    %3872 = vmatprep.subr.mxu0 0.0
    %3873 = vmatpush1.msra.mxu0 0.0
    %3874 = vmatprep.subr.mxu0 0.0
    %3875 = vmatpush1.msra.mxu0 0.0
    %3876 = vmatprep.subr.mxu0 0.0
    %3877 = vmatpush1.msra.mxu0 0.0
    %3878 = vmatprep.subr.mxu0 0.0
    %3879 = vmatpush1.msra.mxu0 0.0
    %3880 = vmatprep.subr.mxu0 0.0
    %3881 = vmatpush1.msra.mxu0 0.0
    %3882 = vmatprep.subr.mxu0 0.0
    %3883 = vmatpush1.msra.mxu0 0.0
    %3884 = vmatprep.subr.mxu0 0.0
    %3885 = vmatpush1.msra.mxu0 0.0
    %3886 = vmatprep.subr.mxu0 0.0
    %3887 = vmatpush1.msra.mxu0 0.0
    %3888 = vmatprep.subr.mxu0 0.0
    %3889 = vmatpush1.msra.mxu0 0.0
    %3890 = vmatprep.subr.mxu0 0.0
    %3891 = vmatpush1.msra.mxu0 0.0
    %3892 = vmatprep.subr.mxu0 0.0
    %3893 = vmatpush1.msra.mxu0 0.0
    %3894 = vmatprep.subr.mxu0 0.0
    %3895 = vmatpush1.msra.mxu0 0.0
    %3896 = vmatprep.subr.mxu0 0.0
    %3897 = vmatpush1.msra.mxu0 0.0
    %3898 = vmatprep.subr.mxu0 0.0
    %3899 = vmatpush1.msra.mxu0 0.0
    %3900 = vmatprep.subr.mxu0 0.0
    %3901 = vmatpush1.msra.mxu0 0.0
    %3902 = vmatprep.subr.mxu0 0.0
    %3903 = vmatpush1.msra.mxu0 0.0
    %3904 = vmatprep.subr.mxu0 0.0
    %3905 = vmatpush1.msra.mxu0 0.0
    %3906 = vmatprep.subr.mxu0 0.0
    %3907 = vmatpush1.msra.mxu0 0.0
    %3908 = vmatprep.subr.mxu0 0.0
    %3909 = vmatpush1.msra.mxu0 0.0
    %3910 = vmatprep.subr.mxu0 0.0
    %3911 = vmatpush1.msra.mxu0 0.0
    %3912 = vmatprep.subr.mxu0 0.0
    %3913 = vmatpush1.msra.mxu0 0.0
    %3914 = vmatprep.subr.mxu0 0.0
    %3915 = vmatpush1.msra.mxu0 0.0
    %3916 = vmatprep.subr.mxu0 0.0
    %3917 = vmatpush1.msra.mxu0 0.0
    %3918 = vmatprep.subr.mxu0 0.0
    %3919 = vmatpush1.msra.mxu0 0.0
    %3920 = vmatprep.mubr.f32.mxu0 0.0
    %3921 = vmatmul.mubr.f32.gmra.mrb[0].mxu0 %v3854
    %v3922 = vpop.f32.mrb[0].mxu0
    %v3923 = vadd.f32 %v3850, %v3922
    %v3924 = vpop.f32.mrb[0].mxu0
    %3925 = vdwg.mxu0
    %3926 = vrot.lane.b32.xlu0 %v2484, 112
    %v3927 = vpop.permute.xlu0 %3926
    %3928 = vrot.lane.b32.xlu0 %v2484, 80
    %v3929 = vpop.permute.xlu0 %3928
    %v3930 = vsel %vm198, %v3927, 0
    %v3932 = vsel %vm198, %v3929, 0
    %3934 = vmatprep.subr.mxu0 0.0
    %3935 = vmatpush1.xpose.msra.mxu0 %v3932
    %3936 = vmatprep.subr.mxu0 0.0
    %3937 = vmatpush1.xpose.msra.mxu0 0.0
    %3938 = vmatprep.subr.mxu0 0.0
    %3939 = vmatpush1.xpose.msra.mxu0 0.0
    %3940 = vmatprep.subr.mxu0 0.0
    %3941 = vmatpush1.xpose.msra.mxu0 0.0
    %3942 = vmatprep.subr.mxu0 0.0
    %3943 = vmatpush1.xpose.msra.mxu0 0.0
    %3944 = vmatprep.subr.mxu0 0.0
    %3945 = vmatpush1.xpose.msra.mxu0 0.0
    %3946 = vmatprep.subr.mxu0 0.0
    %3947 = vmatpush1.xpose.msra.mxu0 0.0
    %3948 = vmatprep.subr.mxu0 0.0
    %3949 = vmatpush1.xpose.msra.mxu0 0.0
    %3950 = vmatprep.subr.mxu0 0.0
    %3951 = vmatpush1.xpose.msra.mxu0 0.0
    %3952 = vmatprep.subr.mxu0 0.0
    %3953 = vmatpush1.xpose.msra.mxu0 0.0
    %3954 = vmatprep.subr.mxu0 0.0
    %3955 = vmatpush1.xpose.msra.mxu0 0.0
    %3956 = vmatprep.subr.mxu0 0.0
    %3957 = vmatpush1.xpose.msra.mxu0 0.0
    %3958 = vmatprep.subr.mxu0 0.0
    %3959 = vmatpush1.xpose.msra.mxu0 0.0
    %3960 = vmatprep.subr.mxu0 0.0
    %3961 = vmatpush1.xpose.msra.mxu0 0.0
    %3962 = vmatprep.subr.mxu0 0.0
    %3963 = vmatpush1.xpose.msra.mxu0 0.0
    %3964 = vmatprep.subr.mxu0 0.0
    %3965 = vmatpush1.xpose.msra.mxu0 0.0
    %3966 = vmatprep.subr.mxu0 0.0
    %3967 = vmatpush1.xpose.msra.mxu0 0.0
    %3968 = vmatprep.subr.mxu0 0.0
    %3969 = vmatpush1.xpose.msra.mxu0 0.0
    %3970 = vmatprep.subr.mxu0 0.0
    %3971 = vmatpush1.xpose.msra.mxu0 0.0
    %3972 = vmatprep.subr.mxu0 0.0
    %3973 = vmatpush1.xpose.msra.mxu0 0.0
    %3974 = vmatprep.subr.mxu0 0.0
    %3975 = vmatpush1.xpose.msra.mxu0 0.0
    %3976 = vmatprep.subr.mxu0 0.0
    %3977 = vmatpush1.xpose.msra.mxu0 0.0
    %3978 = vmatprep.subr.mxu0 0.0
    %3979 = vmatpush1.xpose.msra.mxu0 0.0
    %3980 = vmatprep.subr.mxu0 0.0
    %3981 = vmatpush1.xpose.msra.mxu0 0.0
    %3982 = vmatprep.subr.mxu0 0.0
    %3983 = vmatpush1.xpose.msra.mxu0 0.0
    %3984 = vmatprep.subr.mxu0 0.0
    %3985 = vmatpush1.xpose.msra.mxu0 0.0
    %3986 = vmatprep.subr.mxu0 0.0
    %3987 = vmatpush1.xpose.msra.mxu0 0.0
    %3988 = vmatprep.subr.mxu0 0.0
    %3989 = vmatpush1.xpose.msra.mxu0 0.0
    %3990 = vmatprep.subr.mxu0 0.0
    %3991 = vmatpush1.xpose.msra.mxu0 0.0
    %3992 = vmatprep.subr.mxu0 0.0
    %3993 = vmatpush1.xpose.msra.mxu0 0.0
    %3994 = vmatprep.subr.mxu0 0.0
    %3995 = vmatpush1.xpose.msra.mxu0 0.0
    %3996 = vmatprep.subr.mxu0 0.0
    %3997 = vmatpush1.xpose.msra.mxu0 0.0
    %3998 = vmatprep.mubr.f32.mxu0 0.0
    %3999 = vmatmul.mubr.f32.gmra.mrb[0].mxu0 %v3930
    %v4000 = vpop.f32.mrb[0].mxu0
    %v4001 = vadd.f32 0.0, %v4000
    %v4002 = vpop.f32.mrb[0].mxu0
    %4003 = vdwg.mxu0
    %v4004 = vmul.f32 %v4001, 0.35355338
    %v4005 = vsel %vm198, %v4004, -inf
    %4006 = vmax.xlane.f32.xlu0 %v4005
    %v4007 = vpop.xlane.xlu0 %4006
    %v4008 = vsub.f32 %v4004, %v4007
    %v4009 = vmul.f32 %v4008, 1.442695
    %v4010 = vpow.pop %v4009
    %v4011 = vsel %vm198, %v4010, 0.0
    %4012 = vadd.xlane.f32.xlu0 %v4011
    %v4013 = vpop.xlane.xlu0 %4012
    %v4014 = vrcp.pop %v4013
    %v4015 = vmul.f32 %v4010, %v4014
    %4016 = vrot.lane.b32.xlu0 %v2484, 48
    %v4017 = vpop.permute.xlu0 %4016
    %v4020 = vsel %vm198, %v4015, 0
    %4022 = vmatprep.subr.mxu0 0.0
    %4023 = vmatpush1.msra.mxu0 %v4017
    %4024 = vmatprep.subr.mxu0 0.0
    %4025 = vmatpush1.msra.mxu0 0.0
    %4026 = vmatprep.subr.mxu0 0.0
    %4027 = vmatpush1.msra.mxu0 0.0
    %4028 = vmatprep.subr.mxu0 0.0
    %4029 = vmatpush1.msra.mxu0 0.0
    %4030 = vmatprep.subr.mxu0 0.0
    %4031 = vmatpush1.msra.mxu0 0.0
    %4032 = vmatprep.subr.mxu0 0.0
    %4033 = vmatpush1.msra.mxu0 0.0
    %4034 = vmatprep.subr.mxu0 0.0
    %4035 = vmatpush1.msra.mxu0 0.0
    %4036 = vmatprep.subr.mxu0 0.0
    %4037 = vmatpush1.msra.mxu0 0.0
    %4038 = vmatprep.subr.mxu0 0.0
    %4039 = vmatpush1.msra.mxu0 0.0
    %4040 = vmatprep.subr.mxu0 0.0
    %4041 = vmatpush1.msra.mxu0 0.0
    %4042 = vmatprep.subr.mxu0 0.0
    %4043 = vmatpush1.msra.mxu0 0.0
    %4044 = vmatprep.subr.mxu0 0.0
    %4045 = vmatpush1.msra.mxu0 0.0
    %4046 = vmatprep.subr.mxu0 0.0
    %4047 = vmatpush1.msra.mxu0 0.0
    %4048 = vmatprep.subr.mxu0 0.0
    %4049 = vmatpush1.msra.mxu0 0.0
    %4050 = vmatprep.subr.mxu0 0.0
    %4051 = vmatpush1.msra.mxu0 0.0
    %4052 = vmatprep.subr.mxu0 0.0
    %4053 = vmatpush1.msra.mxu0 0.0
    %4054 = vmatprep.subr.mxu0 0.0
    %4055 = vmatpush1.msra.mxu0 0.0
    %4056 = vmatprep.subr.mxu0 0.0
    %4057 = vmatpush1.msra.mxu0 0.0
    %4058 = vmatprep.subr.mxu0 0.0
    %4059 = vmatpush1.msra.mxu0 0.0
    %4060 = vmatprep.subr.mxu0 0.0
    %4061 = vmatpush1.msra.mxu0 0.0
    %4062 = vmatprep.subr.mxu0 0.0
    %4063 = vmatpush1.msra.mxu0 0.0
    %4064 = vmatprep.subr.mxu0 0.0
    %4065 = vmatpush1.msra.mxu0 0.0
    %4066 = vmatprep.subr.mxu0 0.0
    %4067 = vmatpush1.msra.mxu0 0.0
    %4068 = vmatprep.subr.mxu0 0.0
    %4069 = vmatpush1.msra.mxu0 0.0
    %4070 = vmatprep.subr.mxu0 0.0
    %4071 = vmatpush1.msra.mxu0 0.0
    %4072 = vmatprep.subr.mxu0 0.0
    %4073 = vmatpush1.msra.mxu0 0.0
    %4074 = vmatprep.subr.mxu0 0.0
    %4075 = vmatpush1.msra.mxu0 0.0
    %4076 = vmatprep.subr.mxu0 0.0
    %4077 = vmatpush1.msra.mxu0 0.0
    %4078 = vmatprep.subr.mxu0 0.0
    %4079 = vmatpush1.msra.mxu0 0.0
    %4080 = vmatprep.subr.mxu0 0.0
    %4081 = vmatpush1.msra.mxu0 0.0
    %4082 = vmatprep.subr.mxu0 0.0
    %4083 = vmatpush1.msra.mxu0 0.0
    %4084 = vmatprep.subr.mxu0 0.0
    %4085 = vmatpush1.msra.mxu0 0.0
    %4086 = vmatprep.mubr.f32.mxu0 0.0
    %4087 = vmatmul.mubr.f32.gmra.mrb[0].mxu0 %v4020
    %v4088 = vpop.f32.mrb[0].mxu0
    %v4089 = vadd.f32 0.0, %v4088
    %v4090 = vpop.f32.mrb[0].mxu0
    %4091 = vdwg.mxu0
    %v4093 = vsel %vm198, %v4089, 0
    %4095 = vmatprep.subr.mxu0 0.0
    %4096 = vmatpush1.msra.mxu0 %v2490
    %4097 = vmatprep.subr.mxu0 0.0
    %4098 = vmatpush1.msra.mxu0 0.0
    %4099 = vmatprep.subr.mxu0 0.0
    %4100 = vmatpush1.msra.mxu0 0.0
    %4101 = vmatprep.subr.mxu0 0.0
    %4102 = vmatpush1.msra.mxu0 0.0
    %4103 = vmatprep.subr.mxu0 0.0
    %4104 = vmatpush1.msra.mxu0 0.0
    %4105 = vmatprep.subr.mxu0 0.0
    %4106 = vmatpush1.msra.mxu0 0.0
    %4107 = vmatprep.subr.mxu0 0.0
    %4108 = vmatpush1.msra.mxu0 0.0
    %4109 = vmatprep.subr.mxu0 0.0
    %4110 = vmatpush1.msra.mxu0 0.0
    %4111 = vmatprep.subr.mxu0 0.0
    %4112 = vmatpush1.msra.mxu0 0.0
    %4113 = vmatprep.subr.mxu0 0.0
    %4114 = vmatpush1.msra.mxu0 0.0
    %4115 = vmatprep.subr.mxu0 0.0
    %4116 = vmatpush1.msra.mxu0 0.0
    %4117 = vmatprep.subr.mxu0 0.0
    %4118 = vmatpush1.msra.mxu0 0.0
    %4119 = vmatprep.subr.mxu0 0.0
    %4120 = vmatpush1.msra.mxu0 0.0
    %4121 = vmatprep.subr.mxu0 0.0
    %4122 = vmatpush1.msra.mxu0 0.0
    %4123 = vmatprep.subr.mxu0 0.0
    %4124 = vmatpush1.msra.mxu0 0.0
    %4125 = vmatprep.subr.mxu0 0.0
    %4126 = vmatpush1.msra.mxu0 0.0
    %4127 = vmatprep.subr.mxu0 0.0
    %4128 = vmatpush1.msra.mxu0 0.0
    %4129 = vmatprep.subr.mxu0 0.0
    %4130 = vmatpush1.msra.mxu0 0.0
    %4131 = vmatprep.subr.mxu0 0.0
    %4132 = vmatpush1.msra.mxu0 0.0
    %4133 = vmatprep.subr.mxu0 0.0
    %4134 = vmatpush1.msra.mxu0 0.0
    %4135 = vmatprep.subr.mxu0 0.0
    %4136 = vmatpush1.msra.mxu0 0.0
    %4137 = vmatprep.subr.mxu0 0.0
    %4138 = vmatpush1.msra.mxu0 0.0
    %4139 = vmatprep.subr.mxu0 0.0
    %4140 = vmatpush1.msra.mxu0 0.0
    %4141 = vmatprep.subr.mxu0 0.0
    %4142 = vmatpush1.msra.mxu0 0.0
    %4143 = vmatprep.subr.mxu0 0.0
    %4144 = vmatpush1.msra.mxu0 0.0
    %4145 = vmatprep.subr.mxu0 0.0
    %4146 = vmatpush1.msra.mxu0 0.0
    %4147 = vmatprep.subr.mxu0 0.0
    %4148 = vmatpush1.msra.mxu0 0.0
    %4149 = vmatprep.subr.mxu0 0.0
    %4150 = vmatpush1.msra.mxu0 0.0
    %4151 = vmatprep.subr.mxu0 0.0
    %4152 = vmatpush1.msra.mxu0 0.0
    %4153 = vmatprep.subr.mxu0 0.0
    %4154 = vmatpush1.msra.mxu0 0.0
    %4155 = vmatprep.subr.mxu0 0.0
    %4156 = vmatpush1.msra.mxu0 0.0
    %4157 = vmatprep.subr.mxu0 0.0
    %4158 = vmatpush1.msra.mxu0 0.0
    %4159 = vmatprep.mubr.f32.mxu0 0.0
    %4160 = vmatmul.mubr.f32.gmra.mrb[0].mxu0 %v4093
    %v4161 = vpop.f32.mrb[0].mxu0
    %v4162 = vadd.f32 0.0, %v4161
    %v4163 = vpop.f32.mrb[0].mxu0
    %4164 = vdwg.mxu0
    %v4165 = vadd.f32 %v3923, %v4162
    %4166 = vrot.lane.b32.xlu0 %v2484, 104
    %v4167 = vpop.permute.xlu0 %4166
    %4168 = vrot.lane.b32.xlu0 %v2484, 72
    %v4169 = vpop.permute.xlu0 %4168
    %v4170 = vsel %vm198, %v4167, 0
    %v4172 = vsel %vm198, %v4169, 0
    %4174 = vmatprep.subr.mxu0 0.0
    %4175 = vmatpush1.xpose.msra.mxu0 %v4172
    %4176 = vmatprep.subr.mxu0 0.0
    %4177 = vmatpush1.xpose.msra.mxu0 0.0
    %4178 = vmatprep.subr.mxu0 0.0
    %4179 = vmatpush1.xpose.msra.mxu0 0.0
    %4180 = vmatprep.subr.mxu0 0.0
    %4181 = vmatpush1.xpose.msra.mxu0 0.0
    %4182 = vmatprep.subr.mxu0 0.0
    %4183 = vmatpush1.xpose.msra.mxu0 0.0
    %4184 = vmatprep.subr.mxu0 0.0
    %4185 = vmatpush1.xpose.msra.mxu0 0.0
    %4186 = vmatprep.subr.mxu0 0.0
    %4187 = vmatpush1.xpose.msra.mxu0 0.0
    %4188 = vmatprep.subr.mxu0 0.0
    %4189 = vmatpush1.xpose.msra.mxu0 0.0
    %4190 = vmatprep.subr.mxu0 0.0
    %4191 = vmatpush1.xpose.msra.mxu0 0.0
    %4192 = vmatprep.subr.mxu0 0.0
    %4193 = vmatpush1.xpose.msra.mxu0 0.0
    %4194 = vmatprep.subr.mxu0 0.0
    %4195 = vmatpush1.xpose.msra.mxu0 0.0
    %4196 = vmatprep.subr.mxu0 0.0
    %4197 = vmatpush1.xpose.msra.mxu0 0.0
    %4198 = vmatprep.subr.mxu0 0.0
    %4199 = vmatpush1.xpose.msra.mxu0 0.0
    %4200 = vmatprep.subr.mxu0 0.0
    %4201 = vmatpush1.xpose.msra.mxu0 0.0
    %4202 = vmatprep.subr.mxu0 0.0
    %4203 = vmatpush1.xpose.msra.mxu0 0.0
    %4204 = vmatprep.subr.mxu0 0.0
    %4205 = vmatpush1.xpose.msra.mxu0 0.0
    %4206 = vmatprep.subr.mxu0 0.0
    %4207 = vmatpush1.xpose.msra.mxu0 0.0
    %4208 = vmatprep.subr.mxu0 0.0
    %4209 = vmatpush1.xpose.msra.mxu0 0.0
    %4210 = vmatprep.subr.mxu0 0.0
    %4211 = vmatpush1.xpose.msra.mxu0 0.0
    %4212 = vmatprep.subr.mxu0 0.0
    %4213 = vmatpush1.xpose.msra.mxu0 0.0
    %4214 = vmatprep.subr.mxu0 0.0
    %4215 = vmatpush1.xpose.msra.mxu0 0.0
    %4216 = vmatprep.subr.mxu0 0.0
    %4217 = vmatpush1.xpose.msra.mxu0 0.0
    %4218 = vmatprep.subr.mxu0 0.0
    %4219 = vmatpush1.xpose.msra.mxu0 0.0
    %4220 = vmatprep.subr.mxu0 0.0
    %4221 = vmatpush1.xpose.msra.mxu0 0.0
    %4222 = vmatprep.subr.mxu0 0.0
    %4223 = vmatpush1.xpose.msra.mxu0 0.0
    %4224 = vmatprep.subr.mxu0 0.0
    %4225 = vmatpush1.xpose.msra.mxu0 0.0
    %4226 = vmatprep.subr.mxu0 0.0
    %4227 = vmatpush1.xpose.msra.mxu0 0.0
    %4228 = vmatprep.subr.mxu0 0.0
    %4229 = vmatpush1.xpose.msra.mxu0 0.0
    %4230 = vmatprep.subr.mxu0 0.0
    %4231 = vmatpush1.xpose.msra.mxu0 0.0
    %4232 = vmatprep.subr.mxu0 0.0
    %4233 = vmatpush1.xpose.msra.mxu0 0.0
    %4234 = vmatprep.subr.mxu0 0.0
    %4235 = vmatpush1.xpose.msra.mxu0 0.0
    %4236 = vmatprep.subr.mxu0 0.0
    %4237 = vmatpush1.xpose.msra.mxu0 0.0
    %4238 = vmatprep.mubr.f32.mxu0 0.0
    %4239 = vmatmul.mubr.f32.gmra.mrb[0].mxu0 %v4170
    %v4240 = vpop.f32.mrb[0].mxu0
    %v4241 = vadd.f32 0.0, %v4240
    %v4242 = vpop.f32.mrb[0].mxu0
    %4243 = vdwg.mxu0
    %v4244 = vmul.f32 %v4241, 0.35355338
    %v4245 = vsel %vm198, %v4244, -inf
    %4246 = vmax.xlane.f32.xlu0 %v4245
    %v4247 = vpop.xlane.xlu0 %4246
    %v4248 = vsub.f32 %v4244, %v4247
    %v4249 = vmul.f32 %v4248, 1.442695
    %v4250 = vpow.pop %v4249
    %v4251 = vsel %vm198, %v4250, 0.0
    %4252 = vadd.xlane.f32.xlu0 %v4251
    %v4253 = vpop.xlane.xlu0 %4252
    %v4254 = vrcp.pop %v4253
    %v4255 = vmul.f32 %v4250, %v4254
    %4256 = vrot.lane.b32.xlu0 %v2484, 40
    %v4257 = vpop.permute.xlu0 %4256
    %v4260 = vsel %vm198, %v4255, 0
    %4262 = vmatprep.subr.mxu0 0.0
    %4263 = vmatpush1.msra.mxu0 %v4257
    %4264 = vmatprep.subr.mxu0 0.0
    %4265 = vmatpush1.msra.mxu0 0.0
    %4266 = vmatprep.subr.mxu0 0.0
    %4267 = vmatpush1.msra.mxu0 0.0
    %4268 = vmatprep.subr.mxu0 0.0
    %4269 = vmatpush1.msra.mxu0 0.0
    %4270 = vmatprep.subr.mxu0 0.0
    %4271 = vmatpush1.msra.mxu0 0.0
    %4272 = vmatprep.subr.mxu0 0.0
    %4273 = vmatpush1.msra.mxu0 0.0
    %4274 = vmatprep.subr.mxu0 0.0
    %4275 = vmatpush1.msra.mxu0 0.0
    %4276 = vmatprep.subr.mxu0 0.0
    %4277 = vmatpush1.msra.mxu0 0.0
    %4278 = vmatprep.subr.mxu0 0.0
    %4279 = vmatpush1.msra.mxu0 0.0
    %4280 = vmatprep.subr.mxu0 0.0
    %4281 = vmatpush1.msra.mxu0 0.0
    %4282 = vmatprep.subr.mxu0 0.0
    %4283 = vmatpush1.msra.mxu0 0.0
    %4284 = vmatprep.subr.mxu0 0.0
    %4285 = vmatpush1.msra.mxu0 0.0
    %4286 = vmatprep.subr.mxu0 0.0
    %4287 = vmatpush1.msra.mxu0 0.0
    %4288 = vmatprep.subr.mxu0 0.0
    %4289 = vmatpush1.msra.mxu0 0.0
    %4290 = vmatprep.subr.mxu0 0.0
    %4291 = vmatpush1.msra.mxu0 0.0
    %4292 = vmatprep.subr.mxu0 0.0
    %4293 = vmatpush1.msra.mxu0 0.0
    %4294 = vmatprep.subr.mxu0 0.0
    %4295 = vmatpush1.msra.mxu0 0.0
    %4296 = vmatprep.subr.mxu0 0.0
    %4297 = vmatpush1.msra.mxu0 0.0
    %4298 = vmatprep.subr.mxu0 0.0
    %4299 = vmatpush1.msra.mxu0 0.0
    %4300 = vmatprep.subr.mxu0 0.0
    %4301 = vmatpush1.msra.mxu0 0.0
    %4302 = vmatprep.subr.mxu0 0.0
    %4303 = vmatpush1.msra.mxu0 0.0
    %4304 = vmatprep.subr.mxu0 0.0
    %4305 = vmatpush1.msra.mxu0 0.0
    %4306 = vmatprep.subr.mxu0 0.0
    %4307 = vmatpush1.msra.mxu0 0.0
    %4308 = vmatprep.subr.mxu0 0.0
    %4309 = vmatpush1.msra.mxu0 0.0
    %4310 = vmatprep.subr.mxu0 0.0
    %4311 = vmatpush1.msra.mxu0 0.0
    %4312 = vmatprep.subr.mxu0 0.0
    %4313 = vmatpush1.msra.mxu0 0.0
    %4314 = vmatprep.subr.mxu0 0.0
    %4315 = vmatpush1.msra.mxu0 0.0
    %4316 = vmatprep.subr.mxu0 0.0
    %4317 = vmatpush1.msra.mxu0 0.0
    %4318 = vmatprep.subr.mxu0 0.0
    %4319 = vmatpush1.msra.mxu0 0.0
    %4320 = vmatprep.subr.mxu0 0.0
    %4321 = vmatpush1.msra.mxu0 0.0
    %4322 = vmatprep.subr.mxu0 0.0
    %4323 = vmatpush1.msra.mxu0 0.0
    %4324 = vmatprep.subr.mxu0 0.0
    %4325 = vmatpush1.msra.mxu0 0.0
    %4326 = vmatprep.mubr.f32.mxu0 0.0
    %4327 = vmatmul.mubr.f32.gmra.mrb[0].mxu0 %v4260
    %v4328 = vpop.f32.mrb[0].mxu0
    %v4329 = vadd.f32 0.0, %v4328
    %v4330 = vpop.f32.mrb[0].mxu0
    %4331 = vdwg.mxu0
    %v4333 = vsel %vm198, %v4329, 0
    %4335 = vmatprep.subr.mxu0 0.0
    %4336 = vmatpush1.msra.mxu0 %v2491
    %4337 = vmatprep.subr.mxu0 0.0
    %4338 = vmatpush1.msra.mxu0 0.0
    %4339 = vmatprep.subr.mxu0 0.0
    %4340 = vmatpush1.msra.mxu0 0.0
    %4341 = vmatprep.subr.mxu0 0.0
    %4342 = vmatpush1.msra.mxu0 0.0
    %4343 = vmatprep.subr.mxu0 0.0
    %4344 = vmatpush1.msra.mxu0 0.0
    %4345 = vmatprep.subr.mxu0 0.0
    %4346 = vmatpush1.msra.mxu0 0.0
    %4347 = vmatprep.subr.mxu0 0.0
    %4348 = vmatpush1.msra.mxu0 0.0
    %4349 = vmatprep.subr.mxu0 0.0
    %4350 = vmatpush1.msra.mxu0 0.0
    %4351 = vmatprep.subr.mxu0 0.0
    %4352 = vmatpush1.msra.mxu0 0.0
    %4353 = vmatprep.subr.mxu0 0.0
    %4354 = vmatpush1.msra.mxu0 0.0
    %4355 = vmatprep.subr.mxu0 0.0
    %4356 = vmatpush1.msra.mxu0 0.0
    %4357 = vmatprep.subr.mxu0 0.0
    %4358 = vmatpush1.msra.mxu0 0.0
    %4359 = vmatprep.subr.mxu0 0.0
    %4360 = vmatpush1.msra.mxu0 0.0
    %4361 = vmatprep.subr.mxu0 0.0
    %4362 = vmatpush1.msra.mxu0 0.0
    %4363 = vmatprep.subr.mxu0 0.0
    %4364 = vmatpush1.msra.mxu0 0.0
    %4365 = vmatprep.subr.mxu0 0.0
    %4366 = vmatpush1.msra.mxu0 0.0
    %4367 = vmatprep.subr.mxu0 0.0
    %4368 = vmatpush1.msra.mxu0 0.0
    %4369 = vmatprep.subr.mxu0 0.0
    %4370 = vmatpush1.msra.mxu0 0.0
    %4371 = vmatprep.subr.mxu0 0.0
    %4372 = vmatpush1.msra.mxu0 0.0
    %4373 = vmatprep.subr.mxu0 0.0
    %4374 = vmatpush1.msra.mxu0 0.0
    %4375 = vmatprep.subr.mxu0 0.0
    %4376 = vmatpush1.msra.mxu0 0.0
    %4377 = vmatprep.subr.mxu0 0.0
    %4378 = vmatpush1.msra.mxu0 0.0
    %4379 = vmatprep.subr.mxu0 0.0
    %4380 = vmatpush1.msra.mxu0 0.0
    %4381 = vmatprep.subr.mxu0 0.0
    %4382 = vmatpush1.msra.mxu0 0.0
    %4383 = vmatprep.subr.mxu0 0.0
    %4384 = vmatpush1.msra.mxu0 0.0
    %4385 = vmatprep.subr.mxu0 0.0
    %4386 = vmatpush1.msra.mxu0 0.0
    %4387 = vmatprep.subr.mxu0 0.0
    %4388 = vmatpush1.msra.mxu0 0.0
    %4389 = vmatprep.subr.mxu0 0.0
    %4390 = vmatpush1.msra.mxu0 0.0
    %4391 = vmatprep.subr.mxu0 0.0
    %4392 = vmatpush1.msra.mxu0 0.0
    %4393 = vmatprep.subr.mxu0 0.0
    %4394 = vmatpush1.msra.mxu0 0.0
    %4395 = vmatprep.subr.mxu0 0.0
    %4396 = vmatpush1.msra.mxu0 0.0
    %4397 = vmatprep.subr.mxu0 0.0
    %4398 = vmatpush1.msra.mxu0 0.0
    %4399 = vmatprep.mubr.f32.mxu0 0.0
    %4400 = vmatmul.mubr.f32.gmra.mrb[0].mxu0 %v4333
    %v4401 = vpop.f32.mrb[0].mxu0
    %v4402 = vadd.f32 0.0, %v4401
    %v4403 = vpop.f32.mrb[0].mxu0
    %4404 = vdwg.mxu0
    %v4405 = vadd.f32 %v4165, %v4402
    %v4406 = vlaneseq
    %v4407 = vshrl.u32 %v4406, 7
    %v4408 = vsub.s32 0, %v4407
    %v4409 = vrot.slane %v2352, %v4408
    %v4410 = vadd.f32 %v3448, %v4409
    %v4411 = vadd.f32 %v4405, %v4409
    %v4412 = vadd.f32 %v2349, %v4410
    %v4413 = vadd.f32 %v2350, %v4411
    %v4414 = vsel %vm62, %v4412, 0.0
    %4415 = vadd.xlane.f32.xlu0 %v4414
    %v4416 = vpop.xlane.xlu0 %4415
    %v4417 = vsel %vm62, %v4413, 0.0
    %4418 = vadd.xlane.f32.xlu0 %v4417
    %v4419 = vpop.xlane.xlu0 %4418
    %v4420 = vmul.f32 %v4416, %v69
    %v4421 = vmul.f32 %v4419, %v69
    %v4422 = vsub.f32 %v4412, %v4420
    %v4423 = vsub.f32 %v4413, %v4421
    %v4424 = vmul.f32 %v4422, %v4422
    %v4425 = vmul.f32 %v4423, %v4423
    %v4426 = vsel %vm62, %v4424, 0.0
    %4427 = vadd.xlane.f32.xlu0 %v4426
    %v4428 = vpop.xlane.xlu0 %4427
    %v4429 = vsel %vm62, %v4425, 0.0
    %4430 = vadd.xlane.f32.xlu0 %v4429
    %v4431 = vpop.xlane.xlu0 %4430
    %v4432 = vmul.f32 %v4428, %v69
    %v4433 = vmul.f32 %v4431, %v69
    %v4434 = vadd.f32 %v4432, 1e-06
    %v4435 = vadd.f32 %v4433, 1e-06
    %v4436 = vrsqrt.pop %v4434
    %v4437 = vrsqrt.pop %v4435
    %v4438 = vmul.f32 %v4422, %v4436
    %v4439 = vmul.f32 %v4423, %v4437
    %v4440 = vlaneseq
    %v4441 = vshrl.u32 %v4440, 7
    %v4442 = vsub.s32 0, %v4441
    %v4443 = vrot.slane %v2355, %v4442
    %v4444 = vmul.f32 %v4438, %v4443
    %v4445 = vmul.f32 %v4439, %v4443
    %v4446 = vlaneseq
    %v4447 = vshrl.u32 %v4446, 7
    %v4448 = vsub.s32 0, %v4447
    %v4449 = vrot.slane %v2356, %v4448
    %v4450 = vadd.f32 %v4444, %v4449
    %v4451 = vadd.f32 %v4445, %v4449
    %s4452 = scalar_lea.vmem %s3, 32
    %v4453 = vld [vmem:[%s4452] sm:$0xff]
    %v4454 = vld [vmem:[%s4452 + $0x8] sm:$0xff]
    %v4455 = vld [vmem:[%s4452 + $0x10] sm:$0xff]
    %v4456 = vld [vmem:[%s4452 + $0x18] sm:$0xff]
    %v4457 = vlaneseq
    %v4458 = vshrl.u32 %v4457, 7
    %v4459 = vsub.s32 0, %v4458
    %v4460 = vrot.slane %v2357, %v4459
    %v4462 = vsel %vm62, %v4450, 0
    %v4465 = vsel %vm62, %v4451, 0
    %4467 = vmatprep.subr.mxu0 0.0
    %4468 = vmatpush1.msra.mxu0 %v4453
    %4469 = vmatprep.subr.mxu0 0.0
    %4470 = vmatpush1.msra.mxu0 %v4454
    %4471 = vmatprep.subr.mxu0 0.0
    %4472 = vmatpush1.msra.mxu0 %v4455
    %4473 = vmatprep.subr.mxu0 0.0
    %4474 = vmatpush1.msra.mxu0 %v4456
    %4475 = vmatprep.subr.mxu0 0.0
    %4476 = vmatpush1.msra.mxu0 0.0
    %4477 = vmatprep.subr.mxu0 0.0
    %4478 = vmatpush1.msra.mxu0 0.0
    %4479 = vmatprep.subr.mxu0 0.0
    %4480 = vmatpush1.msra.mxu0 0.0
    %4481 = vmatprep.subr.mxu0 0.0
    %4482 = vmatpush1.msra.mxu0 0.0
    %4483 = vmatprep.subr.mxu0 0.0
    %4484 = vmatpush1.msra.mxu0 0.0
    %4485 = vmatprep.subr.mxu0 0.0
    %4486 = vmatpush1.msra.mxu0 0.0
    %4487 = vmatprep.subr.mxu0 0.0
    %4488 = vmatpush1.msra.mxu0 0.0
    %4489 = vmatprep.subr.mxu0 0.0
    %4490 = vmatpush1.msra.mxu0 0.0
    %4491 = vmatprep.subr.mxu0 0.0
    %4492 = vmatpush1.msra.mxu0 0.0
    %4493 = vmatprep.subr.mxu0 0.0
    %4494 = vmatpush1.msra.mxu0 0.0
    %4495 = vmatprep.subr.mxu0 0.0
    %4496 = vmatpush1.msra.mxu0 0.0
    %4497 = vmatprep.subr.mxu0 0.0
    %4498 = vmatpush1.msra.mxu0 0.0
    %4499 = vmatprep.subr.mxu0 0.0
    %4500 = vmatpush1.msra.mxu0 0.0
    %4501 = vmatprep.subr.mxu0 0.0
    %4502 = vmatpush1.msra.mxu0 0.0
    %4503 = vmatprep.subr.mxu0 0.0
    %4504 = vmatpush1.msra.mxu0 0.0
    %4505 = vmatprep.subr.mxu0 0.0
    %4506 = vmatpush1.msra.mxu0 0.0
    %4507 = vmatprep.subr.mxu0 0.0
    %4508 = vmatpush1.msra.mxu0 0.0
    %4509 = vmatprep.subr.mxu0 0.0
    %4510 = vmatpush1.msra.mxu0 0.0
    %4511 = vmatprep.subr.mxu0 0.0
    %4512 = vmatpush1.msra.mxu0 0.0
    %4513 = vmatprep.subr.mxu0 0.0
    %4514 = vmatpush1.msra.mxu0 0.0
    %4515 = vmatprep.subr.mxu0 0.0
    %4516 = vmatpush1.msra.mxu0 0.0
    %4517 = vmatprep.subr.mxu0 0.0
    %4518 = vmatpush1.msra.mxu0 0.0
    %4519 = vmatprep.subr.mxu0 0.0
    %4520 = vmatpush1.msra.mxu0 0.0
    %4521 = vmatprep.subr.mxu0 0.0
    %4522 = vmatpush1.msra.mxu0 0.0
    %4523 = vmatprep.subr.mxu0 0.0
    %4524 = vmatpush1.msra.mxu0 0.0
    %4525 = vmatprep.subr.mxu0 0.0
    %4526 = vmatpush1.msra.mxu0 0.0
    %4527 = vmatprep.subr.mxu0 0.0
    %4528 = vmatpush1.msra.mxu0 0.0
    %4529 = vmatprep.subr.mxu0 0.0
    %4530 = vmatpush1.msra.mxu0 0.0
    %4531 = vmatprep.mubr.f32.mxu0 0.0
    %4532 = vmatmul.mubr.f32.gmra.mrb[0].mxu0 %v4462
    %v4533 = vpop.f32.mrb[0].mxu0
    %v4534 = vadd.f32 %v4460, %v4533
    %v4535 = vpop.f32.mrb[0].mxu0
    %4536 = vmatprep.mubr.f32.mxu0 0.0
    %4537 = vmatmul.mubr.f32.gmra.mrb[0].mxu0 %v4465
    %v4538 = vpop.f32.mrb[0].mxu0
    %v4539 = vadd.f32 %v4460, %v4538
    %v4540 = vpop.f32.mrb[0].mxu0
    %4541 = vdwg.mxu0
    %v4542 = vmul.f32 %v4534, 0.5
    %v4543 = vmul.f32 %v4539, 0.5
    %v4544 = vmul.f32 %v4534, 0.70710677
    %v4545 = vmul.f32 %v4539, 0.70710677
    %v4546 = verf.f32.pop %v4544
    %v4547 = verf.f32.pop %v4545
    %v4548 = vadd.f32 %v4546, 1.0
    %v4549 = vadd.f32 %v4547, 1.0
    %v4550 = vmul.f32 %v4542, %v4548
    %v4551 = vmul.f32 %v4543, %v4549
    %s4552 = scalar_lea.vmem %s4, 64
    %v4553 = vld [vmem:[%s4552] sm:$0xff]
    %v4554 = vld [vmem:[%s4552 + $0x8] sm:$0xff]
    %v4555 = vld [vmem:[%s4552 + $0x10] sm:$0xff]
    %v4556 = vld [vmem:[%s4552 + $0x18] sm:$0xff]
    %v4557 = vld [vmem:[%s4552 + $0x20] sm:$0xff]
    %v4558 = vld [vmem:[%s4552 + $0x28] sm:$0xff]
    %v4559 = vld [vmem:[%s4552 + $0x30] sm:$0xff]
    %v4560 = vld [vmem:[%s4552 + $0x38] sm:$0xff]
    %v4561 = vlaneseq
    %v4562 = vshrl.u32 %v4561, 7
    %v4563 = vsub.s32 0, %v4562
    %v4564 = vrot.slane %v2358, %v4563
    %v4566 = vsel %vm2267, %v4550, 0
    %v4569 = vsel %vm2267, %v4551, 0
    %4571 = vmatprep.subr.mxu0 0.0
    %4572 = vmatpush1.msra.mxu0 %v4553
    %4573 = vmatprep.subr.mxu0 0.0
    %4574 = vmatpush1.msra.mxu0 %v4554
    %4575 = vmatprep.subr.mxu0 0.0
    %4576 = vmatpush1.msra.mxu0 %v4555
    %4577 = vmatprep.subr.mxu0 0.0
    %4578 = vmatpush1.msra.mxu0 %v4556
    %4579 = vmatprep.subr.mxu0 0.0
    %4580 = vmatpush1.msra.mxu0 %v4557
    %4581 = vmatprep.subr.mxu0 0.0
    %4582 = vmatpush1.msra.mxu0 %v4558
    %4583 = vmatprep.subr.mxu0 0.0
    %4584 = vmatpush1.msra.mxu0 %v4559
    %4585 = vmatprep.subr.mxu0 0.0
    %4586 = vmatpush1.msra.mxu0 %v4560
    %4587 = vmatprep.subr.mxu0 0.0
    %4588 = vmatpush1.msra.mxu0 0.0
    %4589 = vmatprep.subr.mxu0 0.0
    %4590 = vmatpush1.msra.mxu0 0.0
    %4591 = vmatprep.subr.mxu0 0.0
    %4592 = vmatpush1.msra.mxu0 0.0
    %4593 = vmatprep.subr.mxu0 0.0
    %4594 = vmatpush1.msra.mxu0 0.0
    %4595 = vmatprep.subr.mxu0 0.0
    %4596 = vmatpush1.msra.mxu0 0.0
    %4597 = vmatprep.subr.mxu0 0.0
    %4598 = vmatpush1.msra.mxu0 0.0
    %4599 = vmatprep.subr.mxu0 0.0
    %4600 = vmatpush1.msra.mxu0 0.0
    %4601 = vmatprep.subr.mxu0 0.0
    %4602 = vmatpush1.msra.mxu0 0.0
    %4603 = vmatprep.subr.mxu0 0.0
    %4604 = vmatpush1.msra.mxu0 0.0
    %4605 = vmatprep.subr.mxu0 0.0
    %4606 = vmatpush1.msra.mxu0 0.0
    %4607 = vmatprep.subr.mxu0 0.0
    %4608 = vmatpush1.msra.mxu0 0.0
    %4609 = vmatprep.subr.mxu0 0.0
    %4610 = vmatpush1.msra.mxu0 0.0
    %4611 = vmatprep.subr.mxu0 0.0
    %4612 = vmatpush1.msra.mxu0 0.0
    %4613 = vmatprep.subr.mxu0 0.0
    %4614 = vmatpush1.msra.mxu0 0.0
    %4615 = vmatprep.subr.mxu0 0.0
    %4616 = vmatpush1.msra.mxu0 0.0
    %4617 = vmatprep.subr.mxu0 0.0
    %4618 = vmatpush1.msra.mxu0 0.0
    %4619 = vmatprep.subr.mxu0 0.0
    %4620 = vmatpush1.msra.mxu0 0.0
    %4621 = vmatprep.subr.mxu0 0.0
    %4622 = vmatpush1.msra.mxu0 0.0
    %4623 = vmatprep.subr.mxu0 0.0
    %4624 = vmatpush1.msra.mxu0 0.0
    %4625 = vmatprep.subr.mxu0 0.0
    %4626 = vmatpush1.msra.mxu0 0.0
    %4627 = vmatprep.subr.mxu0 0.0
    %4628 = vmatpush1.msra.mxu0 0.0
    %4629 = vmatprep.subr.mxu0 0.0
    %4630 = vmatpush1.msra.mxu0 0.0
    %4631 = vmatprep.subr.mxu0 0.0
    %4632 = vmatpush1.msra.mxu0 0.0
    %4633 = vmatprep.subr.mxu0 0.0
    %4634 = vmatpush1.msra.mxu0 0.0
    %4635 = vmatprep.mubr.f32.mxu0 0.0
    %4636 = vmatmul.mubr.f32.gmra.mrb[0].mxu0 %v4566
    %v4637 = vpop.f32.mrb[0].mxu0
    %v4638 = vadd.f32 %v4564, %v4637
    %v4639 = vpop.f32.mrb[0].mxu0
    %4640 = vmatprep.mubr.f32.mxu0 0.0
    %4641 = vmatmul.mubr.f32.gmra.mrb[0].mxu0 %v4569
    %v4642 = vpop.f32.mrb[0].mxu0
    %v4643 = vadd.f32 %v4564, %v4642
    %v4644 = vpop.f32.mrb[0].mxu0
    %4645 = vdwg.mxu0
    %v4646 = vadd.f32 %v4412, %v4638
    %v4647 = vadd.f32 %v4413, %v4643
    %v4648 = vld [vmem:[#allocation5 + $0x10] sm:$0x1]
    %v4649 = vld [vmem:[#allocation5 + $0x11] sm:$0x1]
    %v4650 = vsel %vm62, %v4646, 0.0
    %4651 = vadd.xlane.f32.xlu0 %v4650
    %v4652 = vpop.xlane.xlu0 %4651
    %v4653 = vsel %vm62, %v4647, 0.0
    %4654 = vadd.xlane.f32.xlu0 %v4653
    %v4655 = vpop.xlane.xlu0 %4654
    %v4656 = vmul.f32 %v4652, %v69
    %v4657 = vmul.f32 %v4655, %v69
    %v4658 = vsub.f32 %v4646, %v4656
    %v4659 = vsub.f32 %v4647, %v4657
    %v4660 = vmul.f32 %v4658, %v4658
    %v4661 = vmul.f32 %v4659, %v4659
    %v4662 = vsel %vm62, %v4660, 0.0
    %4663 = vadd.xlane.f32.xlu0 %v4662
    %v4664 = vpop.xlane.xlu0 %4663
    %v4665 = vsel %vm62, %v4661, 0.0
    %4666 = vadd.xlane.f32.xlu0 %v4665
    %v4667 = vpop.xlane.xlu0 %4666
    %v4668 = vmul.f32 %v4664, %v69
    %v4669 = vmul.f32 %v4667, %v69
    %v4670 = vadd.f32 %v4668, 1e-06
    %v4671 = vadd.f32 %v4669, 1e-06
    %v4672 = vrsqrt.pop %v4670
    %v4673 = vrsqrt.pop %v4671
    %v4674 = vmul.f32 %v4658, %v4672
    %v4675 = vmul.f32 %v4659, %v4673
    %v4676 = vlaneseq
    %v4677 = vshrl.u32 %v4676, 7
    %v4678 = vsub.s32 0, %v4677
    %v4679 = vrot.slane %v4648, %v4678
    %v4680 = vmul.f32 %v4674, %v4679
    %v4681 = vmul.f32 %v4675, %v4679
    %v4682 = vlaneseq
    %v4683 = vshrl.u32 %v4682, 7
    %v4684 = vsub.s32 0, %v4683
    %v4685 = vrot.slane %v4649, %v4684
    %v4686 = vadd.f32 %v4680, %v4685
    %v4687 = vadd.f32 %v4681, %v4685
    %4688 = vst.msk [vmem:[#allocation7] sm:$0xff] %vm62, %v4686
    %4689 = vst.msk [vmem:[#allocation7 + $0x8] sm:$0xff] %vm62, %v4687
    // Predicated region
    $region34: #{tpu_custom_call.1} parent=1 // pred_check
      _
    $region35: #{tpu_custom_call.1} parent=1 // pred_check_branch
      %4691 = sbr.rel (0) target = $region37
    $region36: #{tpu_custom_call.1} parent=1 // pred_region
      %s4693 = ssub.s32 256, 256
      %4694 = vsyncadd [#allocation4], %s4693
      %s4695 = sshll.u32 [#allocation7], 4
      %s4696 = int_to_ptr.vmem [resolvable:$true] %s4695
      %4701 = dma.vmem_to_hbm [thread:$0]  %s4696, 256, %s6, [#allocation4], 128, 128, 8
    $region37: #{tpu_custom_call.1} parent=1 // pred_fallthru
      _
    // Predicated region
    $region38: #{tpu_custom_call.1} parent=1 // pred_check
      _
    $region39: #{tpu_custom_call.1} parent=1 // pred_check_branch
      %4703 = sbr.rel (0) target = $region41
    $region40: #{tpu_custom_call.1} parent=1 // pred_region
      %4704 = dma.done [#allocation4], 256
    $region41: #{tpu_custom_call.1} parent=1 // pred_fallthru
      _
    %4705 = vsyncpa [#allocation3], 1
    %4706 = vsyncpa [#allocation6], 1
    %4707 = vsyncpa [#allocation4], 1

</llo_original>
